<compile_context>
chip_gen: v7x
topology: tpu7x:2x2x1
jax: 0.10.0
libtpu: 0.0.40
codegen_flags: <defaults>
</compile_context>

<pallas_src>
import functools
import math

import jax
import jax.numpy as jnp
from jax.experimental import pallas as pl
from jax.experimental.pallas import tpu as pltpu


# -----------------------------------------------------------------------------
# tiling helper
# -----------------------------------------------------------------------------
def _choose_tile(dim, target, align):
    """Largest `align`-aligned divisor of `dim` that is <= target; falls back to full dim."""
    if dim <= target:
        return dim
    t = (min(target, dim) // align) * align
    while t >= align:
        if dim % t == 0:
            return t
        t -= align
    return dim


# -----------------------------------------------------------------------------
# Tiled linear:  y = act(x @ w + b) [+ residual]
# -----------------------------------------------------------------------------
def _matmul_kernel(*refs, act, has_residual):
    if has_residual:
        x_ref, w_ref, b_ref, res_ref, o_ref, acc_ref = refs
    else:
        x_ref, w_ref, b_ref, o_ref, acc_ref = refs
        res_ref = None

    k = pl.program_id(2)

    @pl.when(k == 0)
    def _():
        acc_ref[...] = jnp.zeros_like(acc_ref)

    # native-dtype MXU operands, f32 accumulation
    acc_ref[...] += jnp.dot(x_ref[...], w_ref[...], preferred_element_type=jnp.float32)

    @pl.when(k == pl.num_programs(2) - 1)
    def _():
        y = acc_ref[...] + b_ref[...].astype(jnp.float32)
        if act == "silu":
            y = y * jax.nn.sigmoid(y)
        elif act == "gelu":
            # TODO(synk): PyTorch nn.GELU default is exact erf; tanh approx used here
            # (EUP-friendly, guaranteed Mosaic lowering).
            y = jax.nn.gelu(y)
        if res_ref is not None:
            y = y + res_ref[...].astype(jnp.float32)
        o_ref[...] = y.astype(o_ref.dtype)


def pallas_linear(x, w, b, act=None, residual=None, tm=256, tn=512, tk=512):
    """y = act(x @ w + b) (+ residual).  x: [M, K], w: [K, N], b: [N]."""
    M, K = x.shape
    Kw, N = w.shape
    assert K == Kw
    tm = _choose_tile(M, tm, 8)
    tn = _choose_tile(N, tn, 128)
    tk = _choose_tile(K, tk, 128)
    grid = (M // tm, N // tn, K // tk)

    in_specs = [
        pl.BlockSpec((tm, tk), lambda i, j, k: (i, k)),
        pl.BlockSpec((tk, tn), lambda i, j, k: (k, j)),
        pl.BlockSpec((1, tn), lambda i, j, k: (0, j)),
    ]
    args = [x, w, b.reshape(1, N)]
    if residual is not None:
        in_specs.append(pl.BlockSpec((tm, tn), lambda i, j, k: (i, j)))
        args.append(residual)

    kernel = functools.partial(_matmul_kernel, act=act, has_residual=residual is not None)
    return pl.pallas_call(
        kernel,
        out_shape=jax.ShapeDtypeStruct((M, N), x.dtype),
        grid=grid,
        in_specs=in_specs,
        out_specs=pl.BlockSpec((tm, tn), lambda i, j, k: (i, j)),
        scratch_shapes=[pltpu.VMEM((tm, tn), jnp.float32)],
        compiler_params=pltpu.CompilerParams(
            dimension_semantics=("parallel", "parallel", "arbitrary")),
    )(*args)


# -----------------------------------------------------------------------------
# Fused LayerNorm + linear:  y = act(LN(x) @ w + b)   (K kept whole for the row stats)
# -----------------------------------------------------------------------------
def _ln_matmul_kernel(x_ref, g_ref, bln_ref, w_ref, b_ref, o_ref, *, act, eps):
    x = x_ref[...].astype(jnp.float32)               # LN math in f32 (safe on v5e too)
    mu = jnp.mean(x, axis=-1, keepdims=True)
    xc = x - mu
    var = jnp.mean(xc * xc, axis=-1, keepdims=True)
    xn = xc * jax.lax.rsqrt(var + eps)
    xn = xn * g_ref[...].astype(jnp.float32) + bln_ref[...].astype(jnp.float32)
    xn = xn.astype(w_ref.dtype)                      # native dtype into the MXU
    y = jnp.dot(xn, w_ref[...], preferred_element_type=jnp.float32)
    y = y + b_ref[...].astype(jnp.float32)
    if act == "silu":
        y = y * jax.nn.sigmoid(y)
    elif act == "gelu":
        y = jax.nn.gelu(y)
    o_ref[...] = y.astype(o_ref.dtype)


def pallas_layernorm_linear(x, gamma, beta, w, b, act=None, eps=1e-5, tm=256, tn=512):
    """y = act(LayerNorm(x) @ w + b).  x: [M, K], w: [K, N]."""
    M, K = x.shape
    Kw, N = w.shape
    assert K == Kw
    tm = _choose_tile(M, tm, 8)
    tn = _choose_tile(N, tn, 128)
    grid = (M // tm, N // tn)

    kernel = functools.partial(_ln_matmul_kernel, act=act, eps=eps)
    return pl.pallas_call(
        kernel,
        out_shape=jax.ShapeDtypeStruct((M, N), x.dtype),
        grid=grid,
        in_specs=[
            pl.BlockSpec((tm, K), lambda i, j: (i, 0)),
            pl.BlockSpec((1, K), lambda i, j: (0, 0)),
            pl.BlockSpec((1, K), lambda i, j: (0, 0)),
            pl.BlockSpec((K, tn), lambda i, j: (0, j)),
            pl.BlockSpec((1, tn), lambda i, j: (0, j)),
        ],
        out_specs=pl.BlockSpec((tm, tn), lambda i, j: (i, j)),
        compiler_params=pltpu.CompilerParams(
            dimension_semantics=("parallel", "parallel")),
    )(x, gamma.reshape(1, K), beta.reshape(1, K), w, b.reshape(1, N))


# -----------------------------------------------------------------------------
# Attention: fused-QKV input, per-batch grid, heads handled in-kernel (no HBM transposes)
# -----------------------------------------------------------------------------
def _attention_kernel(qkv_ref, o_ref, *, num_heads, head_dim, model_dim, scale):
    qkv = qkv_ref[...]                               # [N, 3D] native dtype
    outs = []
    for h in range(num_heads):
        lo = h * head_dim
        qh = qkv[:, lo:lo + head_dim] * scale        # fold 1/sqrt(dh) into q (N*dh mul, not N*N)
        kh = qkv[:, model_dim + lo:model_dim + lo + head_dim]
        vh = qkv[:, 2 * model_dim + lo:2 * model_dim + lo + head_dim]
        s = jnp.dot(qh, kh.T, preferred_element_type=jnp.float32)     # [N, N] f32
        m = jnp.max(s, axis=-1, keepdims=True)
        p = jnp.exp(s - m)
        denom = jnp.sum(p, axis=-1, keepdims=True)
        p = p * pl.reciprocal(denom, approx=True)
        outs.append(jnp.dot(p.astype(vh.dtype), vh,
                            preferred_element_type=jnp.float32))      # [N, dh]
    o_ref[...] = jnp.concatenate(outs, axis=-1).astype(o_ref.dtype)


def pallas_attention(qkv, *, batch, seq, num_heads):
    """qkv: [B*N, 3D] (rows grouped by batch) -> o: [B*N, D]."""
    BN, threeD = qkv.shape
    D = threeD // 3
    dh = D // num_heads
    scale = 1.0 / math.sqrt(dh)
    # TODO(synk): switch to a flash-style KV-tiled online softmax once N exceeds a few K tokens.
    kernel = functools.partial(_attention_kernel, num_heads=num_heads,
                               head_dim=dh, model_dim=D, scale=scale)
    return pl.pallas_call(
        kernel,
        out_shape=jax.ShapeDtypeStruct((BN, D), qkv.dtype),
        grid=(batch,),
        in_specs=[pl.BlockSpec((seq, threeD), lambda b: (b, 0))],
        out_specs=pl.BlockSpec((seq, D), lambda b: (b, 0)),
        compiler_params=pltpu.CompilerParams(dimension_semantics=("parallel",)),
    )(qkv)


# -----------------------------------------------------------------------------
# Tiny fused 2-layer MLP (phenotype embedder / timestep MLP): one pallas_call each
# -----------------------------------------------------------------------------
def _mlp2_kernel(x_ref, w1_ref, b1_ref, w2_ref, b2_ref, o_ref, *, act):
    h = jnp.dot(x_ref[...], w1_ref[...], preferred_element_type=jnp.float32)
    h = h + b1_ref[...].astype(jnp.float32)
    if act == "silu":
        h = h * jax.nn.sigmoid(h)
    elif act == "gelu":
        h = jax.nn.gelu(h)
    h = h.astype(w2_ref.dtype)
    y = jnp.dot(h, w2_ref[...], preferred_element_type=jnp.float32)
    y = y + b2_ref[...].astype(jnp.float32)
    o_ref[...] = y.astype(o_ref.dtype)


def pallas_mlp2(x, w1, b1, w2, b2, act=None):
    M, K = x.shape
    _, Dh = w1.shape
    _, Do = w2.shape
    kernel = functools.partial(_mlp2_kernel, act=act)
    return pl.pallas_call(
        kernel,
        out_shape=jax.ShapeDtypeStruct((M, Do), x.dtype),
        grid=(1,),
        in_specs=[
            pl.BlockSpec((M, K), lambda i: (0, 0)),
            pl.BlockSpec((K, Dh), lambda i: (0, 0)),
            pl.BlockSpec((1, Dh), lambda i: (0, 0)),
            pl.BlockSpec((Dh, Do), lambda i: (0, 0)),
            pl.BlockSpec((1, Do), lambda i: (0, 0)),
        ],
        out_specs=pl.BlockSpec((M, Do), lambda i: (0, 0)),
        compiler_params=pltpu.CompilerParams(dimension_semantics=("arbitrary",)),
    )(x, w1, b1.reshape(1, Dh), w2, b2.reshape(1, Do))


# -----------------------------------------------------------------------------
# Parameters (deterministic, in-script)
# -----------------------------------------------------------------------------
def init_params(key, *, P, C_in, C_out, D, H):
    del H  # head count is a static Python argument, not a parameter (fixes jit tracing bug)
    ks = list(jax.random.split(key, 16))
    n = lambda k, shape: jax.random.normal(k, shape, jnp.float32) * 0.02
    z = lambda shape: jnp.zeros(shape, jnp.float32)
    wq, wk, wv = n(ks[5], (D, D)), n(ks[6], (D, D)), n(ks[7], (D, D))
    return {
        # phenotype embedder: Linear(P, D) -> SiLU -> Linear(D, D)
        "phen_w1": n(ks[0], (P, D)), "phen_b1": z((D,)),
        "phen_w2": n(ks[1], (D, D)), "phen_b2": z((D,)),
        # transformer input projection (patch embed for latent tokens)
        "proj_in_w": n(ks[2], (C_in, D)), "proj_in_b": z((D,)),
        # timestep MLP (on sinusoidal embedding of size D)
        "t_w1": n(ks[3], (D, D)), "t_b1": z((D,)),
        "t_w2": n(ks[4], (D, D)), "t_b2": z((D,)),
        # transformer block (fused QKV)
        "ln1_g": jnp.ones((D,), jnp.float32), "ln1_b": z((D,)),
        "w_qkv": jnp.concatenate([wq, wk, wv], axis=1), "b_qkv": z((3 * D,)),
        "wo": n(ks[8], (D, D)), "bo": z((D,)),
        "ln2_g": jnp.ones((D,), jnp.float32), "ln2_b": z((D,)),
        "ff_w1": n(ks[9], (D, 4 * D)), "ff_b1": z((4 * D,)),
        "ff_w2": n(ks[10], (4 * D, D)), "ff_b2": z((D,)),
        # output
        "ln_f_g": jnp.ones((D,), jnp.float32), "ln_f_b": z((D,)),
        "proj_out_w": n(ks[11], (D, C_out)), "proj_out_b": z((C_out,)),
    }


# -----------------------------------------------------------------------------
# Sub-modules (Pallas hot path, JAX glue)
# -----------------------------------------------------------------------------
def phenotype_embedder(params, phenotypes):
    """phenotypes: [B, P] -> phenotype_embedding [B, 1, D] (single token)."""
    h = pallas_mlp2(phenotypes, params["phen_w1"], params["phen_b1"],
                    params["phen_w2"], params["phen_b2"], act="silu")
    return h[:, None, :]


def sinusoidal_timestep_embedding(timestep, dim):
    """[B] -> [B, dim]  (plain-JAX glue, tiny table)."""
    half = dim // 2
    freqs = jnp.exp(-math.log(10000.0) * jnp.arange(half, dtype=jnp.float32) / half)
    args = timestep.astype(jnp.float32)[:, None] * freqs[None, :]
    return jnp.concatenate([jnp.cos(args), jnp.sin(args)], axis=-1)


def transformer_forward(params, hidden_states, encoder_hidden_states, timestep, num_heads):
    """Minimal CogVideoX-style joint transformer.  Returns [B, S, C_out]."""
    B, S, C_in = hidden_states.shape
    _, T, D = encoder_hidden_states.shape
    N = T + S

    # latent token projection to model dim
    x = pallas_linear(hidden_states.reshape(B * S, C_in),
                      params["proj_in_w"], params["proj_in_b"]).reshape(B, S, D)

    # timestep conditioning (one fused tiny MLP kernel)
    t_sin = sinusoidal_timestep_embedding(timestep, D).astype(x.dtype)
    temb = pallas_mlp2(t_sin, params["t_w1"], params["t_b1"],
                       params["t_w2"], params["t_b2"], act="silu")        # [B, D]

    # joint sequence: [text | image] + timestep conditioning
    tokens = jnp.concatenate([encoder_hidden_states.astype(x.dtype), x], axis=1)
    tokens = tokens + temb[:, None, :]
    flat = tokens.reshape(B * N, D)

    # --- transformer block (LN fused into consumer matmuls, residuals fused) ---
    qkv = pallas_layernorm_linear(flat, params["ln1_g"], params["ln1_b"],
                                  params["w_qkv"], params["b_qkv"])       # [B*N, 3D]
    o = pallas_attention(qkv, batch=B, seq=N, num_heads=num_heads)        # [B*N, D]
    flat = pallas_linear(o, params["wo"], params["bo"], residual=flat)    # out-proj + residual

    h = pallas_layernorm_linear(flat, params["ln2_g"], params["ln2_b"],
                                params["ff_w1"], params["ff_b1"], act="gelu")
    flat = pallas_linear(h, params["ff_w2"], params["ff_b2"], residual=flat)

    # final LN + output projection fused, applied to image tokens only.
    # Output width padded to a multiple of 128 (lane-dense stores), sliced back in JAX.
    img = flat.reshape(B, N, D)[:, T:, :].reshape(B * S, D)
    C_out = params["proj_out_w"].shape[1]
    pad = (-C_out) % 128
    w_out, b_out = params["proj_out_w"], params["proj_out_b"]
    if pad:
        w_out = jnp.pad(w_out, ((0, 0), (0, pad)))
        b_out = jnp.pad(b_out, ((0, pad),))
    out = pallas_layernorm_linear(img, params["ln_f_g"], params["ln_f_b"], w_out, b_out)
    out = out[:, :C_out]
    return out.reshape(B, S, C_out)


# -----------------------------------------------------------------------------
# CombinedTransformerWithEmbedder.forward  (the wrapper being implemented)
# -----------------------------------------------------------------------------
def combined_forward(params, hidden_states, encoder_hidden_states, timestep,
                     phenotypes=None, *, num_heads, phenotype_module="single"):
    if phenotypes is not None:
        phenotype_embedding = phenotype_embedder(params, phenotypes)      # [B, n_phen, D]
        if phenotype_module == "single":
            encoder_hidden_states = jnp.concatenate(
                [phenotype_embedding, encoder_hidden_states[:, :-1, :]], axis=1)
        else:
            tokens_to_discard = phenotype_embedding.shape[1]
            encoder_hidden_states = jnp.concatenate(
                [phenotype_embedding, encoder_hidden_states[:, :-tokens_to_discard, :]],
                axis=1)
    if hidden_states.dtype != encoder_hidden_states.dtype:
        hidden_states = hidden_states.astype(encoder_hidden_states.dtype)
    # TODO(synk): timestep_cond / ofs / image_rotary_emb / attention_kwargs / return_dict
    # passthroughs omitted (unused by this synthetic transformer).
    return transformer_forward(params, hidden_states, encoder_hidden_states,
                               timestep, num_heads)


# -----------------------------------------------------------------------------
# Main
# -----------------------------------------------------------------------------
if __name__ == "__main__":
    B = 2          # batch
    S = 16         # image/latent tokens
    T = 8          # text tokens
    C_in = 16      # latent channels per token
    C_out = 16     # output channels per token
    D = 32         # model dim
    H = 2          # attention heads (static Python constant)
    P = 8          # phenotype feature dim

    root = jax.random.PRNGKey(0)
    k_param, k_h, k_e, k_p, k_t = jax.random.split(root, 5)

    params = init_params(k_param, P=P, C_in=C_in, C_out=C_out, D=D, H=H)

    # hidden_states arrives in a different dtype than encoder_hidden_states to exercise
    # the wrapper's dtype-alignment branch.
    hidden_states = jax.random.normal(k_h, (B, S, C_in), jnp.float32).astype(jnp.bfloat16)
    encoder_hidden_states = jax.random.normal(k_e, (B, T, D), jnp.float32)
    phenotypes = jax.random.normal(k_p, (B, P), jnp.float32)
    timestep = jax.random.randint(k_t, (B,), 0, 1000).astype(jnp.int32)

    fwd = jax.jit(functools.partial(combined_forward,
                                    num_heads=H, phenotype_module="single"))
    out = fwd(params, hidden_states, encoder_hidden_states, timestep, phenotypes)
    out = jax.block_until_ready(out)

    assert out.shape == (B, S, C_out), out.shape
    assert jnp.all(jnp.isfinite(out))
    print("KERNEL_OK")
</pallas_src>

<mosaic_0001>
module attributes {stable_mosaic.version = 11 : i64} {
  func.func @_matmul_kernel(%arg0: i32, %arg1: i32, %arg2: i32, %arg3: memref<32x16xf32, #tpu.memory_space<vmem>>, %arg4: memref<16x32xf32, #tpu.memory_space<vmem>>, %arg5: memref<1x32xf32, #tpu.memory_space<vmem>>, %arg6: memref<32x32xf32, #tpu.memory_space<vmem>>, %arg7: memref<32x32xf32, #tpu.memory_space<vmem>>) attributes {dimension_semantics = [#tpu.dimension_semantics<parallel>, #tpu.dimension_semantics<parallel>, #tpu.dimension_semantics<arbitrary>], iteration_bounds = array<i64: 1, 1, 1>, scalar_prefetch = 0 : i64, scratch_operands = 1 : i64, tpu.core_type = #tpu.core_type<tc>, window_params = [{transform_indices = @transform_0, window_bounds = array<i64: 32, 16>}, {transform_indices = @transform_1, window_bounds = array<i64: 16, 32>}, {transform_indices = @transform_2, window_bounds = array<i64: 1, 32>}, {transform_indices = @transform_3, window_bounds = array<i64: 32, 32>}]} {
    %c0_i32 = arith.constant 0 : i32
    %0 = arith.cmpi eq, %arg2, %c0_i32 : i32
    %1 = arith.extui %0 : i1 to i32
    %c0_i32_0 = arith.constant 0 : i32
    %2 = arith.cmpi ne, %1, %c0_i32_0 : i32
    scf.if %2 {
      %cst_10 = arith.constant 0.000000e+00 : f32
      %12 = vector.broadcast %cst_10 : f32 to vector<32x32xf32>
      %c0_11 = arith.constant 0 : index
      %c0_12 = arith.constant 0 : index
      %13 = vector.load %arg7[%c0_11, %c0_12] : memref<32x32xf32, #tpu.memory_space<vmem>>, vector<32x32xf32>
      tpu.vector_store %arg7[%c0_11, %c0_12], %12 {strides = array<i32>} : memref<32x32xf32, #tpu.memory_space<vmem>>, vector<32x32xf32>,
    } else {
    }
    %c0 = arith.constant 0 : index
    %c0_1 = arith.constant 0 : index
    %3 = vector.load %arg7[%c0, %c0_1] : memref<32x32xf32, #tpu.memory_space<vmem>>, vector<32x32xf32>
    %c0_2 = arith.constant 0 : index
    %c0_3 = arith.constant 0 : index
    %4 = vector.load %arg3[%c0_2, %c0_3] : memref<32x16xf32, #tpu.memory_space<vmem>>, vector<32x16xf32>
    %c0_4 = arith.constant 0 : index
    %c0_5 = arith.constant 0 : index
    %5 = vector.load %arg4[%c0_4, %c0_5] : memref<16x32xf32, #tpu.memory_space<vmem>>, vector<16x32xf32>
    %cst = arith.constant dense<0.000000e+00> : vector<32x32xf32>
    %6 = tpu.matmul %4, %5, %cst {dimension_numbers = #tpu.dot_dimension_numbers<[1], [0], [0], [1], [0, 0, 1, 1], [], []>} : vector<32x16xf32>, vector<16x32xf32>, vector<32x32xf32> -> vector<32x32xf32>
    %7 = arith.addf %3, %6 : vector<32x32xf32>
    %c0_6 = arith.constant 0 : index
    %c0_7 = arith.constant 0 : index
    %8 = vector.load %arg7[%c0_6, %c0_7] : memref<32x32xf32, #tpu.memory_space<vmem>>, vector<32x32xf32>
    tpu.vector_store %arg7[%c0_6, %c0_7], %7 {strides = array<i32>} : memref<32x32xf32, #tpu.memory_space<vmem>>, vector<32x32xf32>,
    %c0_i32_8 = arith.constant 0 : i32
    %9 = arith.cmpi eq, %arg2, %c0_i32_8 : i32
    %10 = arith.extui %9 : i1 to i32
    %c0_i32_9 = arith.constant 0 : i32
    %11 = arith.cmpi ne, %10, %c0_i32_9 : i32
    scf.if %11 {
      %c0_10 = arith.constant 0 : index
      %c0_11 = arith.constant 0 : index
      %12 = vector.load %arg7[%c0_10, %c0_11] : memref<32x32xf32, #tpu.memory_space<vmem>>, vector<32x32xf32>
      %c0_12 = arith.constant 0 : index
      %c0_13 = arith.constant 0 : index
      %13 = vector.load %arg5[%c0_12, %c0_13] : memref<1x32xf32, #tpu.memory_space<vmem>>, vector<1x32xf32>
      %14 = vector.broadcast %13 : vector<1x32xf32> to vector<32x32xf32>
      %15 = arith.addf %12, %14 : vector<32x32xf32>
      %c0_14 = arith.constant 0 : index
      %c0_15 = arith.constant 0 : index
      %16 = vector.load %arg6[%c0_14, %c0_15] : memref<32x32xf32, #tpu.memory_space<vmem>>, vector<32x32xf32>
      tpu.vector_store %arg6[%c0_14, %c0_15], %15 {strides = array<i32>} : memref<32x32xf32, #tpu.memory_space<vmem>>, vector<32x32xf32>,
    } else {
    }
    return
  }
  func.func @transform_0(%arg0: i32, %arg1: i32, %arg2: i32) -> (i32, i32) {
    %c0_i32 = arith.constant 0 : i32
    return %arg0, %arg2 : i32, i32
  }
  func.func @transform_1(%arg0: i32, %arg1: i32, %arg2: i32) -> (i32, i32) {
    %c0_i32 = arith.constant 0 : i32
    return %arg2, %arg1 : i32, i32
  }
  func.func @transform_2(%arg0: i32, %arg1: i32, %arg2: i32) -> (i32, i32) {
    %c0_i32 = arith.constant 0 : i32
    %c0_i32_0 = arith.constant 0 : i32
    return %c0_i32, %arg1 : i32, i32
  }
  func.func @transform_3(%arg0: i32, %arg1: i32, %arg2: i32) -> (i32, i32) {
    %c0_i32 = arith.constant 0 : i32
    return %arg0, %arg1 : i32, i32
  }
}

module attributes {stable_mosaic.version = 11 : i64} {
  func.func @_mlp2_kernel(%arg0: i32, %arg1: memref<2x32xf32, #tpu.memory_space<vmem>>, %arg2: memref<32x32xf32, #tpu.memory_space<vmem>>, %arg3: memref<1x32xf32, #tpu.memory_space<vmem>>, %arg4: memref<32x32xf32, #tpu.memory_space<vmem>>, %arg5: memref<1x32xf32, #tpu.memory_space<vmem>>, %arg6: memref<2x32xf32, #tpu.memory_space<vmem>>) attributes {dimension_semantics = [#tpu.dimension_semantics<arbitrary>], iteration_bounds = array<i64: 1>, scalar_prefetch = 0 : i64, scratch_operands = 0 : i64, tpu.core_type = #tpu.core_type<tc>, window_params = [{pipeline_mode = #tpu.pipeline_mode<synchronous>, transform_indices = @transform_0, window_bounds = array<i64: 2, 32>}, {pipeline_mode = #tpu.pipeline_mode<synchronous>, transform_indices = @transform_1, window_bounds = array<i64: 32, 32>}, {pipeline_mode = #tpu.pipeline_mode<synchronous>, transform_indices = @transform_2, window_bounds = array<i64: 1, 32>}, {pipeline_mode = #tpu.pipeline_mode<synchronous>, transform_indices = @transform_3, window_bounds = array<i64: 32, 32>}, {pipeline_mode = #tpu.pipeline_mode<synchronous>, transform_indices = @transform_4, window_bounds = array<i64: 1, 32>}, {pipeline_mode = #tpu.pipeline_mode<synchronous>, transform_indices = @transform_5, window_bounds = array<i64: 2, 32>}]} {
    %c0 = arith.constant 0 : index
    %c0_0 = arith.constant 0 : index
    %0 = vector.load %arg1[%c0, %c0_0] : memref<2x32xf32, #tpu.memory_space<vmem>>, vector<2x32xf32>
    %c0_1 = arith.constant 0 : index
    %c0_2 = arith.constant 0 : index
    %1 = vector.load %arg2[%c0_1, %c0_2] : memref<32x32xf32, #tpu.memory_space<vmem>>, vector<32x32xf32>
    %cst = arith.constant dense<0.000000e+00> : vector<2x32xf32>
    %2 = tpu.matmul %0, %1, %cst {dimension_numbers = #tpu.dot_dimension_numbers<[1], [0], [0], [1], [0, 0, 1, 1], [], []>} : vector<2x32xf32>, vector<32x32xf32>, vector<2x32xf32> -> vector<2x32xf32>
    %c0_3 = arith.constant 0 : index
    %c0_4 = arith.constant 0 : index
    %3 = vector.load %arg3[%c0_3, %c0_4] : memref<1x32xf32, #tpu.memory_space<vmem>>, vector<1x32xf32>
    %4 = vector.broadcast %3 : vector<1x32xf32> to vector<2x32xf32>
    %5 = arith.addf %2, %4 : vector<2x32xf32>
    %6 = arith.negf %5 : vector<2x32xf32>
    %7 = math.exp %6 : vector<2x32xf32>
    %cst_5 = arith.constant 1.000000e+00 : f32
    %8 = vector.broadcast %cst_5 : f32 to vector<2x32xf32>
    %9 = arith.addf %8, %7 : vector<2x32xf32>
    %10 = arith.divf %8, %9 : vector<2x32xf32>
    %11 = arith.mulf %5, %10 : vector<2x32xf32>
    %c0_6 = arith.constant 0 : index
    %c0_7 = arith.constant 0 : index
    %12 = vector.load %arg4[%c0_6, %c0_7] : memref<32x32xf32, #tpu.memory_space<vmem>>, vector<32x32xf32>
    %cst_8 = arith.constant dense<0.000000e+00> : vector<2x32xf32>
    %13 = tpu.matmul %11, %12, %cst_8 {dimension_numbers = #tpu.dot_dimension_numbers<[1], [0], [0], [1], [0, 0, 1, 1], [], []>} : vector<2x32xf32>, vector<32x32xf32>, vector<2x32xf32> -> vector<2x32xf32>
    %c0_9 = arith.constant 0 : index
    %c0_10 = arith.constant 0 : index
    %14 = vector.load %arg5[%c0_9, %c0_10] : memref<1x32xf32, #tpu.memory_space<vmem>>, vector<1x32xf32>
    %15 = vector.broadcast %14 : vector<1x32xf32> to vector<2x32xf32>
    %16 = arith.addf %13, %15 : vector<2x32xf32>
    %c0_11 = arith.constant 0 : index
    %c0_12 = arith.constant 0 : index
    %17 = vector.load %arg6[%c0_11, %c0_12] : memref<2x32xf32, #tpu.memory_space<vmem>>, vector<2x32xf32>
    tpu.vector_store %arg6[%c0_11, %c0_12], %16 {strides = array<i32>} : memref<2x32xf32, #tpu.memory_space<vmem>>, vector<2x32xf32>,
    return
  }
  func.func @transform_0(%arg0: i32) -> (i32, i32) {
    %c0_i32 = arith.constant 0 : i32
    %c0_i32_0 = arith.constant 0 : i32
    %c0_i32_1 = arith.constant 0 : i32
    return %c0_i32, %c0_i32_0 : i32, i32
  }
  func.func @transform_1(%arg0: i32) -> (i32, i32) {
    %c0_i32 = arith.constant 0 : i32
    %c0_i32_0 = arith.constant 0 : i32
    %c0_i32_1 = arith.constant 0 : i32
    return %c0_i32, %c0_i32_0 : i32, i32
  }
  func.func @transform_2(%arg0: i32) -> (i32, i32) {
    %c0_i32 = arith.constant 0 : i32
    %c0_i32_0 = arith.constant 0 : i32
    %c0_i32_1 = arith.constant 0 : i32
    return %c0_i32, %c0_i32_0 : i32, i32
  }
  func.func @transform_3(%arg0: i32) -> (i32, i32) {
    %c0_i32 = arith.constant 0 : i32
    %c0_i32_0 = arith.constant 0 : i32
    %c0_i32_1 = arith.constant 0 : i32
    return %c0_i32, %c0_i32_0 : i32, i32
  }
  func.func @transform_4(%arg0: i32) -> (i32, i32) {
    %c0_i32 = arith.constant 0 : i32
    %c0_i32_0 = arith.constant 0 : i32
    %c0_i32_1 = arith.constant 0 : i32
    return %c0_i32, %c0_i32_0 : i32, i32
  }
  func.func @transform_5(%arg0: i32) -> (i32, i32) {
    %c0_i32 = arith.constant 0 : i32
    %c0_i32_0 = arith.constant 0 : i32
    %c0_i32_1 = arith.constant 0 : i32
    return %c0_i32, %c0_i32_0 : i32, i32
  }
}

module attributes {stable_mosaic.version = 11 : i64} {
  func.func @_mlp2_kernel(%arg0: i32, %arg1: memref<2x8xf32, #tpu.memory_space<vmem>>, %arg2: memref<8x32xf32, #tpu.memory_space<vmem>>, %arg3: memref<1x32xf32, #tpu.memory_space<vmem>>, %arg4: memref<32x32xf32, #tpu.memory_space<vmem>>, %arg5: memref<1x32xf32, #tpu.memory_space<vmem>>, %arg6: memref<2x32xf32, #tpu.memory_space<vmem>>) attributes {dimension_semantics = [#tpu.dimension_semantics<arbitrary>], iteration_bounds = array<i64: 1>, scalar_prefetch = 0 : i64, scratch_operands = 0 : i64, tpu.core_type = #tpu.core_type<tc>, window_params = [{pipeline_mode = #tpu.pipeline_mode<synchronous>, transform_indices = @transform_0, window_bounds = array<i64: 2, 8>}, {pipeline_mode = #tpu.pipeline_mode<synchronous>, transform_indices = @transform_1, window_bounds = array<i64: 8, 32>}, {pipeline_mode = #tpu.pipeline_mode<synchronous>, transform_indices = @transform_2, window_bounds = array<i64: 1, 32>}, {pipeline_mode = #tpu.pipeline_mode<synchronous>, transform_indices = @transform_3, window_bounds = array<i64: 32, 32>}, {pipeline_mode = #tpu.pipeline_mode<synchronous>, transform_indices = @transform_4, window_bounds = array<i64: 1, 32>}, {pipeline_mode = #tpu.pipeline_mode<synchronous>, transform_indices = @transform_5, window_bounds = array<i64: 2, 32>}]} {
    %c0 = arith.constant 0 : index
    %c0_0 = arith.constant 0 : index
    %0 = vector.load %arg1[%c0, %c0_0] : memref<2x8xf32, #tpu.memory_space<vmem>>, vector<2x8xf32>
    %c0_1 = arith.constant 0 : index
    %c0_2 = arith.constant 0 : index
    %1 = vector.load %arg2[%c0_1, %c0_2] : memref<8x32xf32, #tpu.memory_space<vmem>>, vector<8x32xf32>
    %cst = arith.constant dense<0.000000e+00> : vector<2x32xf32>
    %2 = tpu.matmul %0, %1, %cst {dimension_numbers = #tpu.dot_dimension_numbers<[1], [0], [0], [1], [0, 0, 1, 1], [], []>} : vector<2x8xf32>, vector<8x32xf32>, vector<2x32xf32> -> vector<2x32xf32>
    %c0_3 = arith.constant 0 : index
    %c0_4 = arith.constant 0 : index
    %3 = vector.load %arg3[%c0_3, %c0_4] : memref<1x32xf32, #tpu.memory_space<vmem>>, vector<1x32xf32>
    %4 = vector.broadcast %3 : vector<1x32xf32> to vector<2x32xf32>
    %5 = arith.addf %2, %4 : vector<2x32xf32>
    %6 = arith.negf %5 : vector<2x32xf32>
    %7 = math.exp %6 : vector<2x32xf32>
    %cst_5 = arith.constant 1.000000e+00 : f32
    %8 = vector.broadcast %cst_5 : f32 to vector<2x32xf32>
    %9 = arith.addf %8, %7 : vector<2x32xf32>
    %10 = arith.divf %8, %9 : vector<2x32xf32>
    %11 = arith.mulf %5, %10 : vector<2x32xf32>
    %c0_6 = arith.constant 0 : index
    %c0_7 = arith.constant 0 : index
    %12 = vector.load %arg4[%c0_6, %c0_7] : memref<32x32xf32, #tpu.memory_space<vmem>>, vector<32x32xf32>
    %cst_8 = arith.constant dense<0.000000e+00> : vector<2x32xf32>
    %13 = tpu.matmul %11, %12, %cst_8 {dimension_numbers = #tpu.dot_dimension_numbers<[1], [0], [0], [1], [0, 0, 1, 1], [], []>} : vector<2x32xf32>, vector<32x32xf32>, vector<2x32xf32> -> vector<2x32xf32>
    %c0_9 = arith.constant 0 : index
    %c0_10 = arith.constant 0 : index
    %14 = vector.load %arg5[%c0_9, %c0_10] : memref<1x32xf32, #tpu.memory_space<vmem>>, vector<1x32xf32>
    %15 = vector.broadcast %14 : vector<1x32xf32> to vector<2x32xf32>
    %16 = arith.addf %13, %15 : vector<2x32xf32>
    %c0_11 = arith.constant 0 : index
    %c0_12 = arith.constant 0 : index
    %17 = vector.load %arg6[%c0_11, %c0_12] : memref<2x32xf32, #tpu.memory_space<vmem>>, vector<2x32xf32>
    tpu.vector_store %arg6[%c0_11, %c0_12], %16 {strides = array<i32>} : memref<2x32xf32, #tpu.memory_space<vmem>>, vector<2x32xf32>,
    return
  }
  func.func @transform_0(%arg0: i32) -> (i32, i32) {
    %c0_i32 = arith.constant 0 : i32
    %c0_i32_0 = arith.constant 0 : i32
    %c0_i32_1 = arith.constant 0 : i32
    return %c0_i32, %c0_i32_0 : i32, i32
  }
  func.func @transform_1(%arg0: i32) -> (i32, i32) {
    %c0_i32 = arith.constant 0 : i32
    %c0_i32_0 = arith.constant 0 : i32
    %c0_i32_1 = arith.constant 0 : i32
    return %c0_i32, %c0_i32_0 : i32, i32
  }
  func.func @transform_2(%arg0: i32) -> (i32, i32) {
    %c0_i32 = arith.constant 0 : i32
    %c0_i32_0 = arith.constant 0 : i32
    %c0_i32_1 = arith.constant 0 : i32
    return %c0_i32, %c0_i32_0 : i32, i32
  }
  func.func @transform_3(%arg0: i32) -> (i32, i32) {
    %c0_i32 = arith.constant 0 : i32
    %c0_i32_0 = arith.constant 0 : i32
    %c0_i32_1 = arith.constant 0 : i32
    return %c0_i32, %c0_i32_0 : i32, i32
  }
  func.func @transform_4(%arg0: i32) -> (i32, i32) {
    %c0_i32 = arith.constant 0 : i32
    %c0_i32_0 = arith.constant 0 : i32
    %c0_i32_1 = arith.constant 0 : i32
    return %c0_i32, %c0_i32_0 : i32, i32
  }
  func.func @transform_5(%arg0: i32) -> (i32, i32) {
    %c0_i32 = arith.constant 0 : i32
    %c0_i32_0 = arith.constant 0 : i32
    %c0_i32_1 = arith.constant 0 : i32
    return %c0_i32, %c0_i32_0 : i32, i32
  }
}

module attributes {stable_mosaic.version = 11 : i64} {
  func.func @_ln_matmul_kernel(%arg0: i32, %arg1: i32, %arg2: memref<48x32xf32, #tpu.memory_space<vmem>>, %arg3: memref<1x32xf32, #tpu.memory_space<vmem>>, %arg4: memref<1x32xf32, #tpu.memory_space<vmem>>, %arg5: memref<32x96xf32, #tpu.memory_space<vmem>>, %arg6: memref<1x96xf32, #tpu.memory_space<vmem>>, %arg7: memref<48x96xf32, #tpu.memory_space<vmem>>) attributes {dimension_semantics = [#tpu.dimension_semantics<parallel>, #tpu.dimension_semantics<parallel>], iteration_bounds = array<i64: 1, 1>, scalar_prefetch = 0 : i64, scratch_operands = 0 : i64, tpu.core_type = #tpu.core_type<tc>, window_params = [{transform_indices = @transform_0, window_bounds = array<i64: 48, 32>}, {pipeline_mode = #tpu.pipeline_mode<synchronous>, transform_indices = @transform_1, window_bounds = array<i64: 1, 32>}, {pipeline_mode = #tpu.pipeline_mode<synchronous>, transform_indices = @transform_2, window_bounds = array<i64: 1, 32>}, {transform_indices = @transform_3, window_bounds = array<i64: 32, 96>}, {transform_indices = @transform_4, window_bounds = array<i64: 1, 96>}, {transform_indices = @transform_5, window_bounds = array<i64: 48, 96>}]} {
    %c0 = arith.constant 0 : index
    %c0_0 = arith.constant 0 : index
    %0 = vector.load %arg2[%c0, %c0_0] : memref<48x32xf32, #tpu.memory_space<vmem>>, vector<48x32xf32>
    %cst = arith.constant dense<0.000000e+00> : vector<48xf32>
    %1 = vector.multi_reduction <add>, %0, %cst [1] : vector<48x32xf32> to vector<48xf32>
    %2 = vector.shape_cast %1 : vector<48xf32> to vector<48x1xf32>
    %cst_1 = arith.constant 3.200000e+01 : f32
    %3 = vector.broadcast %cst_1 : f32 to vector<48x1xf32>
    %4 = arith.divf %2, %3 : vector<48x1xf32>
    %5 = vector.broadcast %4 : vector<48x1xf32> to vector<48x32xf32>
    %6 = arith.subf %0, %5 : vector<48x32xf32>
    %7 = arith.mulf %6, %6 : vector<48x32xf32>
    %cst_2 = arith.constant dense<0.000000e+00> : vector<48xf32>
    %8 = vector.multi_reduction <add>, %7, %cst_2 [1] : vector<48x32xf32> to vector<48xf32>
    %9 = vector.shape_cast %8 : vector<48xf32> to vector<48x1xf32>
    %cst_3 = arith.constant 3.200000e+01 : f32
    %10 = vector.broadcast %cst_3 : f32 to vector<48x1xf32>
    %11 = arith.divf %9, %10 : vector<48x1xf32>
    %cst_4 = arith.constant 9.99999974E-6 : f32
    %12 = vector.broadcast %cst_4 : f32 to vector<48x1xf32>
    %13 = arith.addf %11, %12 : vector<48x1xf32>
    %14 = math.rsqrt %13 : vector<48x1xf32>
    %15 = vector.broadcast %14 : vector<48x1xf32> to vector<48x32xf32>
    %16 = arith.mulf %6, %15 : vector<48x32xf32>
    %c0_5 = arith.constant 0 : index
    %c0_6 = arith.constant 0 : index
    %17 = vector.load %arg3[%c0_5, %c0_6] : memref<1x32xf32, #tpu.memory_space<vmem>>, vector<1x32xf32>
    %18 = vector.broadcast %17 : vector<1x32xf32> to vector<48x32xf32>
    %19 = arith.mulf %16, %18 : vector<48x32xf32>
    %c0_7 = arith.constant 0 : index
    %c0_8 = arith.constant 0 : index
    %20 = vector.load %arg4[%c0_7, %c0_8] : memref<1x32xf32, #tpu.memory_space<vmem>>, vector<1x32xf32>
    %21 = vector.broadcast %20 : vector<1x32xf32> to vector<48x32xf32>
    %22 = arith.addf %19, %21 : vector<48x32xf32>
    %c0_9 = arith.constant 0 : index
    %c0_10 = arith.constant 0 : index
    %23 = vector.load %arg5[%c0_9, %c0_10] : memref<32x96xf32, #tpu.memory_space<vmem>>, vector<32x96xf32>
    %cst_11 = arith.constant dense<0.000000e+00> : vector<48x96xf32>
    %24 = tpu.matmul %22, %23, %cst_11 {dimension_numbers = #tpu.dot_dimension_numbers<[1], [0], [0], [1], [0, 0, 1, 1], [], []>} : vector<48x32xf32>, vector<32x96xf32>, vector<48x96xf32> -> vector<48x96xf32>
    %c0_12 = arith.constant 0 : index
    %c0_13 = arith.constant 0 : index
    %25 = vector.load %arg6[%c0_12, %c0_13] : memref<1x96xf32, #tpu.memory_space<vmem>>, vector<1x96xf32>
    %26 = vector.broadcast %25 : vector<1x96xf32> to vector<48x96xf32>
    %27 = arith.addf %24, %26 : vector<48x96xf32>
    %c0_14 = arith.constant 0 : index
    %c0_15 = arith.constant 0 : index
    %28 = vector.load %arg7[%c0_14, %c0_15] : memref<48x96xf32, #tpu.memory_space<vmem>>, vector<48x96xf32>
    tpu.vector_store %arg7[%c0_14, %c0_15], %27 {strides = array<i32>} : memref<48x96xf32, #tpu.memory_space<vmem>>, vector<48x96xf32>,
    return
  }
  func.func @transform_0(%arg0: i32, %arg1: i32) -> (i32, i32) {
    %c0_i32 = arith.constant 0 : i32
    %c0_i32_0 = arith.constant 0 : i32
    return %arg0, %c0_i32 : i32, i32
  }
  func.func @transform_1(%arg0: i32, %arg1: i32) -> (i32, i32) {
    %c0_i32 = arith.constant 0 : i32
    %c0_i32_0 = arith.constant 0 : i32
    %c0_i32_1 = arith.constant 0 : i32
    return %c0_i32, %c0_i32_0 : i32, i32
  }
  func.func @transform_2(%arg0: i32, %arg1: i32) -> (i32, i32) {
    %c0_i32 = arith.constant 0 : i32
    %c0_i32_0 = arith.constant 0 : i32
    %c0_i32_1 = arith.constant 0 : i32
    return %c0_i32, %c0_i32_0 : i32, i32
  }
  func.func @transform_3(%arg0: i32, %arg1: i32) -> (i32, i32) {
    %c0_i32 = arith.constant 0 : i32
    %c0_i32_0 = arith.constant 0 : i32
    return %c0_i32, %arg1 : i32, i32
  }
  func.func @transform_4(%arg0: i32, %arg1: i32) -> (i32, i32) {
    %c0_i32 = arith.constant 0 : i32
    %c0_i32_0 = arith.constant 0 : i32
    return %c0_i32, %arg1 : i32, i32
  }
  func.func @transform_5(%arg0: i32, %arg1: i32) -> (i32, i32) {
    %c0_i32 = arith.constant 0 : i32
    return %arg0, %arg1 : i32, i32
  }
}

module attributes {stable_mosaic.version = 11 : i64} {
  func.func @_matmul_kernel(%arg0: i32, %arg1: i32, %arg2: i32, %arg3: memref<48x32xf32, #tpu.memory_space<vmem>>, %arg4: memref<32x32xf32, #tpu.memory_space<vmem>>, %arg5: memref<1x32xf32, #tpu.memory_space<vmem>>, %arg6: memref<48x32xf32, #tpu.memory_space<vmem>>, %arg7: memref<48x32xf32, #tpu.memory_space<vmem>>, %arg8: memref<48x32xf32, #tpu.memory_space<vmem>>) attributes {dimension_semantics = [#tpu.dimension_semantics<parallel>, #tpu.dimension_semantics<parallel>, #tpu.dimension_semantics<arbitrary>], iteration_bounds = array<i64: 1, 1, 1>, scalar_prefetch = 0 : i64, scratch_operands = 1 : i64, tpu.core_type = #tpu.core_type<tc>, window_params = [{transform_indices = @transform_0, window_bounds = array<i64: 48, 32>}, {transform_indices = @transform_1, window_bounds = array<i64: 32, 32>}, {transform_indices = @transform_2, window_bounds = array<i64: 1, 32>}, {transform_indices = @transform_3, window_bounds = array<i64: 48, 32>}, {transform_indices = @transform_4, window_bounds = array<i64: 48, 32>}]} {
    %c0_i32 = arith.constant 0 : i32
    %0 = arith.cmpi eq, %arg2, %c0_i32 : i32
    %1 = arith.extui %0 : i1 to i32
    %c0_i32_0 = arith.constant 0 : i32
    %2 = arith.cmpi ne, %1, %c0_i32_0 : i32
    scf.if %2 {
      %cst_10 = arith.constant 0.000000e+00 : f32
      %12 = vector.broadcast %cst_10 : f32 to vector<48x32xf32>
      %c0_11 = arith.constant 0 : index
      %c0_12 = arith.constant 0 : index
      %13 = vector.load %arg8[%c0_11, %c0_12] : memref<48x32xf32, #tpu.memory_space<vmem>>, vector<48x32xf32>
      tpu.vector_store %arg8[%c0_11, %c0_12], %12 {strides = array<i32>} : memref<48x32xf32, #tpu.memory_space<vmem>>, vector<48x32xf32>,
    } else {
    }
    %c0 = arith.constant 0 : index
    %c0_1 = arith.constant 0 : index
    %3 = vector.load %arg8[%c0, %c0_1] : memref<48x32xf32, #tpu.memory_space<vmem>>, vector<48x32xf32>
    %c0_2 = arith.constant 0 : index
    %c0_3 = arith.constant 0 : index
    %4 = vector.load %arg3[%c0_2, %c0_3] : memref<48x32xf32, #tpu.memory_space<vmem>>, vector<48x32xf32>
    %c0_4 = arith.constant 0 : index
    %c0_5 = arith.constant 0 : index
    %5 = vector.load %arg4[%c0_4, %c0_5] : memref<32x32xf32, #tpu.memory_space<vmem>>, vector<32x32xf32>
    %cst = arith.constant dense<0.000000e+00> : vector<48x32xf32>
    %6 = tpu.matmul %4, %5, %cst {dimension_numbers = #tpu.dot_dimension_numbers<[1], [0], [0], [1], [0, 0, 1, 1], [], []>} : vector<48x32xf32>, vector<32x32xf32>, vector<48x32xf32> -> vector<48x32xf32>
    %7 = arith.addf %3, %6 : vector<48x32xf32>
    %c0_6 = arith.constant 0 : index
    %c0_7 = arith.constant 0 : index
    %8 = vector.load %arg8[%c0_6, %c0_7] : memref<48x32xf32, #tpu.memory_space<vmem>>, vector<48x32xf32>
    tpu.vector_store %arg8[%c0_6, %c0_7], %7 {strides = array<i32>} : memref<48x32xf32, #tpu.memory_space<vmem>>, vector<48x32xf32>,
    %c0_i32_8 = arith.constant 0 : i32
    %9 = arith.cmpi eq, %arg2, %c0_i32_8 : i32
    %10 = arith.extui %9 : i1 to i32
    %c0_i32_9 = arith.constant 0 : i32
    %11 = arith.cmpi ne, %10, %c0_i32_9 : i32
    scf.if %11 {
      %c0_10 = arith.constant 0 : index
      %c0_11 = arith.constant 0 : index
      %12 = vector.load %arg8[%c0_10, %c0_11] : memref<48x32xf32, #tpu.memory_space<vmem>>, vector<48x32xf32>
      %c0_12 = arith.constant 0 : index
      %c0_13 = arith.constant 0 : index
      %13 = vector.load %arg5[%c0_12, %c0_13] : memref<1x32xf32, #tpu.memory_space<vmem>>, vector<1x32xf32>
      %14 = vector.broadcast %13 : vector<1x32xf32> to vector<48x32xf32>
      %15 = arith.addf %12, %14 : vector<48x32xf32>
      %c0_14 = arith.constant 0 : index
      %c0_15 = arith.constant 0 : index
      %16 = vector.load %arg6[%c0_14, %c0_15] : memref<48x32xf32, #tpu.memory_space<vmem>>, vector<48x32xf32>
      %17 = arith.addf %15, %16 : vector<48x32xf32>
      %c0_16 = arith.constant 0 : index
      %c0_17 = arith.constant 0 : index
      %18 = vector.load %arg7[%c0_16, %c0_17] : memref<48x32xf32, #tpu.memory_space<vmem>>, vector<48x32xf32>
      tpu.vector_store %arg7[%c0_16, %c0_17], %17 {strides = array<i32>} : memref<48x32xf32, #tpu.memory_space<vmem>>, vector<48x32xf32>,
    } else {
    }
    return
  }
  func.func @transform_0(%arg0: i32, %arg1: i32, %arg2: i32) -> (i32, i32) {
    %c0_i32 = arith.constant 0 : i32
    return %arg0, %arg2 : i32, i32
  }
  func.func @transform_1(%arg0: i32, %arg1: i32, %arg2: i32) -> (i32, i32) {
    %c0_i32 = arith.constant 0 : i32
    return %arg2, %arg1 : i32, i32
  }
  func.func @transform_2(%arg0: i32, %arg1: i32, %arg2: i32) -> (i32, i32) {
    %c0_i32 = arith.constant 0 : i32
    %c0_i32_0 = arith.constant 0 : i32
    return %c0_i32, %arg1 : i32, i32
  }
  func.func @transform_3(%arg0: i32, %arg1: i32, %arg2: i32) -> (i32, i32) {
    %c0_i32 = arith.constant 0 : i32
    return %arg0, %arg1 : i32, i32
  }
  func.func @transform_4(%arg0: i32, %arg1: i32, %arg2: i32) -> (i32, i32) {
    %c0_i32 = arith.constant 0 : i32
    return %arg0, %arg1 : i32, i32
  }
}

module attributes {stable_mosaic.version = 11 : i64} {
  func.func @_attention_kernel(%arg0: i32, %arg1: memref<24x96xf32, #tpu.memory_space<vmem>>, %arg2: memref<24x32xf32, #tpu.memory_space<vmem>>) attributes {dimension_semantics = [#tpu.dimension_semantics<parallel>], iteration_bounds = array<i64: 2>, scalar_prefetch = 0 : i64, scratch_operands = 0 : i64, tpu.core_type = #tpu.core_type<tc>, window_params = [{transform_indices = @transform_0, window_bounds = array<i64: 24, 96>}, {transform_indices = @transform_1, window_bounds = array<i64: 24, 32>}]} {
    %c0 = arith.constant 0 : index
    %c0_0 = arith.constant 0 : index
    %0 = vector.load %arg1[%c0, %c0_0] : memref<24x96xf32, #tpu.memory_space<vmem>>, vector<24x96xf32>
    %1 = vector.extract_strided_slice %0 {offsets = [0, 0], sizes = [24, 16], strides = [1, 1]} : vector<24x96xf32> to vector<24x16xf32>
    %cst = arith.constant 2.500000e-01 : f32
    %2 = vector.broadcast %cst : f32 to vector<24x16xf32>
    %3 = arith.mulf %1, %2 : vector<24x16xf32>
    %4 = vector.extract_strided_slice %0 {offsets = [0, 32], sizes = [24, 16], strides = [1, 1]} : vector<24x96xf32> to vector<24x16xf32>
    %5 = vector.extract_strided_slice %0 {offsets = [0, 64], sizes = [24, 16], strides = [1, 1]} : vector<24x96xf32> to vector<24x16xf32>
    %6 = tpu.transpose %4, [1, 0] : vector<24x16xf32> -> vector<16x24xf32>
    %cst_1 = arith.constant dense<0.000000e+00> : vector<24x24xf32>
    %7 = tpu.matmul %3, %6, %cst_1 {dimension_numbers = #tpu.dot_dimension_numbers<[1], [0], [0], [1], [0, 0, 1, 1], [], []>} : vector<24x16xf32>, vector<16x24xf32>, vector<24x24xf32> -> vector<24x24xf32>
    %cst_2 = arith.constant dense<0xFF800000> : vector<24xf32>
    %8 = vector.multi_reduction <maximumf>, %7, %cst_2 [1] : vector<24x24xf32> to vector<24xf32>
    %9 = vector.shape_cast %8 : vector<24xf32> to vector<24x1xf32>
    %10 = vector.broadcast %9 : vector<24x1xf32> to vector<24x24xf32>
    %11 = arith.subf %7, %10 : vector<24x24xf32>
    %12 = math.exp %11 : vector<24x24xf32>
    %cst_3 = arith.constant dense<0.000000e+00> : vector<24xf32>
    %13 = vector.multi_reduction <add>, %12, %cst_3 [1] : vector<24x24xf32> to vector<24xf32>
    %14 = vector.shape_cast %13 : vector<24xf32> to vector<24x1xf32>
    %15 = tpu.reciprocal %14 {approx = true} : vector<24x1xf32> -> vector<24x1xf32>
    %16 = vector.broadcast %15 : vector<24x1xf32> to vector<24x24xf32>
    %17 = arith.mulf %12, %16 : vector<24x24xf32>
    %cst_4 = arith.constant dense<0.000000e+00> : vector<24x16xf32>
    %18 = tpu.matmul %17, %5, %cst_4 {dimension_numbers = #tpu.dot_dimension_numbers<[1], [0], [0], [1], [0, 0, 1, 1], [], []>} : vector<24x24xf32>, vector<24x16xf32>, vector<24x16xf32> -> vector<24x16xf32>
    %19 = vector.extract_strided_slice %0 {offsets = [0, 16], sizes = [24, 16], strides = [1, 1]} : vector<24x96xf32> to vector<24x16xf32>
    %cst_5 = arith.constant 2.500000e-01 : f32
    %20 = vector.broadcast %cst_5 : f32 to vector<24x16xf32>
    %21 = arith.mulf %19, %20 : vector<24x16xf32>
    %22 = vector.extract_strided_slice %0 {offsets = [0, 48], sizes = [24, 16], strides = [1, 1]} : vector<24x96xf32> to vector<24x16xf32>
    %23 = vector.extract_strided_slice %0 {offsets = [0, 80], sizes = [24, 16], strides = [1, 1]} : vector<24x96xf32> to vector<24x16xf32>
    %24 = tpu.transpose %22, [1, 0] : vector<24x16xf32> -> vector<16x24xf32>
    %cst_6 = arith.constant dense<0.000000e+00> : vector<24x24xf32>
    %25 = tpu.matmul %21, %24, %cst_6 {dimension_numbers = #tpu.dot_dimension_numbers<[1], [0], [0], [1], [0, 0, 1, 1], [], []>} : vector<24x16xf32>, vector<16x24xf32>, vector<24x24xf32> -> vector<24x24xf32>
    %cst_7 = arith.constant dense<0xFF800000> : vector<24xf32>
    %26 = vector.multi_reduction <maximumf>, %25, %cst_7 [1] : vector<24x24xf32> to vector<24xf32>
    %27 = vector.shape_cast %26 : vector<24xf32> to vector<24x1xf32>
    %28 = vector.broadcast %27 : vector<24x1xf32> to vector<24x24xf32>
    %29 = arith.subf %25, %28 : vector<24x24xf32>
    %30 = math.exp %29 : vector<24x24xf32>
    %cst_8 = arith.constant dense<0.000000e+00> : vector<24xf32>
    %31 = vector.multi_reduction <add>, %30, %cst_8 [1] : vector<24x24xf32> to vector<24xf32>
    %32 = vector.shape_cast %31 : vector<24xf32> to vector<24x1xf32>
    %33 = tpu.reciprocal %32 {approx = true} : vector<24x1xf32> -> vector<24x1xf32>
    %34 = vector.broadcast %33 : vector<24x1xf32> to vector<24x24xf32>
    %35 = arith.mulf %30, %34 : vector<24x24xf32>
    %cst_9 = arith.constant dense<0.000000e+00> : vector<24x16xf32>
    %36 = tpu.matmul %35, %23, %cst_9 {dimension_numbers = #tpu.dot_dimension_numbers<[1], [0], [0], [1], [0, 0, 1, 1], [], []>} : vector<24x24xf32>, vector<24x16xf32>, vector<24x16xf32> -> vector<24x16xf32>
    %37 = tpu.concatenate %18, %36 in 1 : vector<24x16xf32>, vector<24x16xf32> -> vector<24x32xf32>
    %c0_10 = arith.constant 0 : index
    %c0_11 = arith.constant 0 : index
    %38 = vector.load %arg2[%c0_10, %c0_11] : memref<24x32xf32, #tpu.memory_space<vmem>>, vector<24x32xf32>
    tpu.vector_store %arg2[%c0_10, %c0_11], %37 {strides = array<i32>} : memref<24x32xf32, #tpu.memory_space<vmem>>, vector<24x32xf32>,
    return
  }
  func.func @transform_0(%arg0: i32) -> (i32, i32) {
    %c0_i32 = arith.constant 0 : i32
    %c0_i32_0 = arith.constant 0 : i32
    return %arg0, %c0_i32 : i32, i32
  }
  func.func @transform_1(%arg0: i32) -> (i32, i32) {
    %c0_i32 = arith.constant 0 : i32
    %c0_i32_0 = arith.constant 0 : i32
    return %arg0, %c0_i32 : i32, i32
  }
}

module attributes {stable_mosaic.version = 11 : i64} {
  func.func @_ln_matmul_kernel(%arg0: i32, %arg1: i32, %arg2: memref<48x32xf32, #tpu.memory_space<vmem>>, %arg3: memref<1x32xf32, #tpu.memory_space<vmem>>, %arg4: memref<1x32xf32, #tpu.memory_space<vmem>>, %arg5: memref<32x128xf32, #tpu.memory_space<vmem>>, %arg6: memref<1x128xf32, #tpu.memory_space<vmem>>, %arg7: memref<48x128xf32, #tpu.memory_space<vmem>>) attributes {dimension_semantics = [#tpu.dimension_semantics<parallel>, #tpu.dimension_semantics<parallel>], iteration_bounds = array<i64: 1, 1>, scalar_prefetch = 0 : i64, scratch_operands = 0 : i64, tpu.core_type = #tpu.core_type<tc>, window_params = [{transform_indices = @transform_0, window_bounds = array<i64: 48, 32>}, {pipeline_mode = #tpu.pipeline_mode<synchronous>, transform_indices = @transform_1, window_bounds = array<i64: 1, 32>}, {pipeline_mode = #tpu.pipeline_mode<synchronous>, transform_indices = @transform_2, window_bounds = array<i64: 1, 32>}, {transform_indices = @transform_3, window_bounds = array<i64: 32, 128>}, {transform_indices = @transform_4, window_bounds = array<i64: 1, 128>}, {transform_indices = @transform_5, window_bounds = array<i64: 48, 128>}]} {
    %c0 = arith.constant 0 : index
    %c0_0 = arith.constant 0 : index
    %0 = vector.load %arg2[%c0, %c0_0] : memref<48x32xf32, #tpu.memory_space<vmem>>, vector<48x32xf32>
    %cst = arith.constant dense<0.000000e+00> : vector<48xf32>
    %1 = vector.multi_reduction <add>, %0, %cst [1] : vector<48x32xf32> to vector<48xf32>
    %2 = vector.shape_cast %1 : vector<48xf32> to vector<48x1xf32>
    %cst_1 = arith.constant 3.200000e+01 : f32
    %3 = vector.broadcast %cst_1 : f32 to vector<48x1xf32>
    %4 = arith.divf %2, %3 : vector<48x1xf32>
    %5 = vector.broadcast %4 : vector<48x1xf32> to vector<48x32xf32>
    %6 = arith.subf %0, %5 : vector<48x32xf32>
    %7 = arith.mulf %6, %6 : vector<48x32xf32>
    %cst_2 = arith.constant dense<0.000000e+00> : vector<48xf32>
    %8 = vector.multi_reduction <add>, %7, %cst_2 [1] : vector<48x32xf32> to vector<48xf32>
    %9 = vector.shape_cast %8 : vector<48xf32> to vector<48x1xf32>
    %cst_3 = arith.constant 3.200000e+01 : f32
    %10 = vector.broadcast %cst_3 : f32 to vector<48x1xf32>
    %11 = arith.divf %9, %10 : vector<48x1xf32>
    %cst_4 = arith.constant 9.99999974E-6 : f32
    %12 = vector.broadcast %cst_4 : f32 to vector<48x1xf32>
    %13 = arith.addf %11, %12 : vector<48x1xf32>
    %14 = math.rsqrt %13 : vector<48x1xf32>
    %15 = vector.broadcast %14 : vector<48x1xf32> to vector<48x32xf32>
    %16 = arith.mulf %6, %15 : vector<48x32xf32>
    %c0_5 = arith.constant 0 : index
    %c0_6 = arith.constant 0 : index
    %17 = vector.load %arg3[%c0_5, %c0_6] : memref<1x32xf32, #tpu.memory_space<vmem>>, vector<1x32xf32>
    %18 = vector.broadcast %17 : vector<1x32xf32> to vector<48x32xf32>
    %19 = arith.mulf %16, %18 : vector<48x32xf32>
    %c0_7 = arith.constant 0 : index
    %c0_8 = arith.constant 0 : index
    %20 = vector.load %arg4[%c0_7, %c0_8] : memref<1x32xf32, #tpu.memory_space<vmem>>, vector<1x32xf32>
    %21 = vector.broadcast %20 : vector<1x32xf32> to vector<48x32xf32>
    %22 = arith.addf %19, %21 : vector<48x32xf32>
    %c0_9 = arith.constant 0 : index
    %c0_10 = arith.constant 0 : index
    %23 = vector.load %arg5[%c0_9, %c0_10] : memref<32x128xf32, #tpu.memory_space<vmem>>, vector<32x128xf32>
    %cst_11 = arith.constant dense<0.000000e+00> : vector<48x128xf32>
    %24 = tpu.matmul %22, %23, %cst_11 {dimension_numbers = #tpu.dot_dimension_numbers<[1], [0], [0], [1], [0, 0, 1, 1], [], []>} : vector<48x32xf32>, vector<32x128xf32>, vector<48x128xf32> -> vector<48x128xf32>
    %c0_12 = arith.constant 0 : index
    %c0_13 = arith.constant 0 : index
    %25 = vector.load %arg6[%c0_12, %c0_13] : memref<1x128xf32, #tpu.memory_space<vmem>>, vector<1x128xf32>
    %26 = vector.broadcast %25 : vector<1x128xf32> to vector<48x128xf32>
    %27 = arith.addf %24, %26 : vector<48x128xf32>
    %28 = arith.mulf %27, %27 : vector<48x128xf32>
    %29 = arith.mulf %27, %28 : vector<48x128xf32>
    %cst_14 = arith.constant 4.471500e-02 : f32
    %30 = vector.broadcast %cst_14 : f32 to vector<48x128xf32>
    %31 = arith.mulf %30, %29 : vector<48x128xf32>
    %32 = arith.addf %27, %31 : vector<48x128xf32>
    %cst_15 = arith.constant 0.797884583 : f32
    %33 = vector.broadcast %cst_15 : f32 to vector<48x128xf32>
    %34 = arith.mulf %33, %32 : vector<48x128xf32>
    %35 = math.tanh %34 : vector<48x128xf32>
    %cst_16 = arith.constant 1.000000e+00 : f32
    %36 = vector.broadcast %cst_16 : f32 to vector<48x128xf32>
    %37 = arith.addf %36, %35 : vector<48x128xf32>
    %cst_17 = arith.constant 5.000000e-01 : f32
    %38 = vector.broadcast %cst_17 : f32 to vector<48x128xf32>
    %39 = arith.mulf %38, %37 : vector<48x128xf32>
    %40 = arith.mulf %27, %39 : vector<48x128xf32>
    %c0_18 = arith.constant 0 : index
    %c0_19 = arith.constant 0 : index
    %41 = vector.load %arg7[%c0_18, %c0_19] : memref<48x128xf32, #tpu.memory_space<vmem>>, vector<48x128xf32>
    tpu.vector_store %arg7[%c0_18, %c0_19], %40 {strides = array<i32>} : memref<48x128xf32, #tpu.memory_space<vmem>>, vector<48x128xf32>,
    return
  }
  func.func @transform_0(%arg0: i32, %arg1: i32) -> (i32, i32) {
    %c0_i32 = arith.constant 0 : i32
    %c0_i32_0 = arith.constant 0 : i32
    return %arg0, %c0_i32 : i32, i32
  }
  func.func @transform_1(%arg0: i32, %arg1: i32) -> (i32, i32) {
    %c0_i32 = arith.constant 0 : i32
    %c0_i32_0 = arith.constant 0 : i32
    %c0_i32_1 = arith.constant 0 : i32
    return %c0_i32, %c0_i32_0 : i32, i32
  }
  func.func @transform_2(%arg0: i32, %arg1: i32) -> (i32, i32) {
    %c0_i32 = arith.constant 0 : i32
    %c0_i32_0 = arith.constant 0 : i32
    %c0_i32_1 = arith.constant 0 : i32
    return %c0_i32, %c0_i32_0 : i32, i32
  }
  func.func @transform_3(%arg0: i32, %arg1: i32) -> (i32, i32) {
    %c0_i32 = arith.constant 0 : i32
    %c0_i32_0 = arith.constant 0 : i32
    return %c0_i32, %arg1 : i32, i32
  }
  func.func @transform_4(%arg0: i32, %arg1: i32) -> (i32, i32) {
    %c0_i32 = arith.constant 0 : i32
    %c0_i32_0 = arith.constant 0 : i32
    return %c0_i32, %arg1 : i32, i32
  }
  func.func @transform_5(%arg0: i32, %arg1: i32) -> (i32, i32) {
    %c0_i32 = arith.constant 0 : i32
    return %arg0, %arg1 : i32, i32
  }
}

module attributes {stable_mosaic.version = 11 : i64} {
  func.func @_matmul_kernel(%arg0: i32, %arg1: i32, %arg2: i32, %arg3: memref<48x128xf32, #tpu.memory_space<vmem>>, %arg4: memref<128x32xf32, #tpu.memory_space<vmem>>, %arg5: memref<1x32xf32, #tpu.memory_space<vmem>>, %arg6: memref<48x32xf32, #tpu.memory_space<vmem>>, %arg7: memref<48x32xf32, #tpu.memory_space<vmem>>, %arg8: memref<48x32xf32, #tpu.memory_space<vmem>>) attributes {dimension_semantics = [#tpu.dimension_semantics<parallel>, #tpu.dimension_semantics<parallel>, #tpu.dimension_semantics<arbitrary>], iteration_bounds = array<i64: 1, 1, 1>, scalar_prefetch = 0 : i64, scratch_operands = 1 : i64, tpu.core_type = #tpu.core_type<tc>, window_params = [{transform_indices = @transform_0, window_bounds = array<i64: 48, 128>}, {transform_indices = @transform_1, window_bounds = array<i64: 128, 32>}, {transform_indices = @transform_2, window_bounds = array<i64: 1, 32>}, {transform_indices = @transform_3, window_bounds = array<i64: 48, 32>}, {transform_indices = @transform_4, window_bounds = array<i64: 48, 32>}]} {
    %c0_i32 = arith.constant 0 : i32
    %0 = arith.cmpi eq, %arg2, %c0_i32 : i32
    %1 = arith.extui %0 : i1 to i32
    %c0_i32_0 = arith.constant 0 : i32
    %2 = arith.cmpi ne, %1, %c0_i32_0 : i32
    scf.if %2 {
      %cst_10 = arith.constant 0.000000e+00 : f32
      %12 = vector.broadcast %cst_10 : f32 to vector<48x32xf32>
      %c0_11 = arith.constant 0 : index
      %c0_12 = arith.constant 0 : index
      %13 = vector.load %arg8[%c0_11, %c0_12] : memref<48x32xf32, #tpu.memory_space<vmem>>, vector<48x32xf32>
      tpu.vector_store %arg8[%c0_11, %c0_12], %12 {strides = array<i32>} : memref<48x32xf32, #tpu.memory_space<vmem>>, vector<48x32xf32>,
    } else {
    }
    %c0 = arith.constant 0 : index
    %c0_1 = arith.constant 0 : index
    %3 = vector.load %arg8[%c0, %c0_1] : memref<48x32xf32, #tpu.memory_space<vmem>>, vector<48x32xf32>
    %c0_2 = arith.constant 0 : index
    %c0_3 = arith.constant 0 : index
    %4 = vector.load %arg3[%c0_2, %c0_3] : memref<48x128xf32, #tpu.memory_space<vmem>>, vector<48x128xf32>
    %c0_4 = arith.constant 0 : index
    %c0_5 = arith.constant 0 : index
    %5 = vector.load %arg4[%c0_4, %c0_5] : memref<128x32xf32, #tpu.memory_space<vmem>>, vector<128x32xf32>
    %cst = arith.constant dense<0.000000e+00> : vector<48x32xf32>
    %6 = tpu.matmul %4, %5, %cst {dimension_numbers = #tpu.dot_dimension_numbers<[1], [0], [0], [1], [0, 0, 1, 1], [], []>} : vector<48x128xf32>, vector<128x32xf32>, vector<48x32xf32> -> vector<48x32xf32>
    %7 = arith.addf %3, %6 : vector<48x32xf32>
    %c0_6 = arith.constant 0 : index
    %c0_7 = arith.constant 0 : index
    %8 = vector.load %arg8[%c0_6, %c0_7] : memref<48x32xf32, #tpu.memory_space<vmem>>, vector<48x32xf32>
    tpu.vector_store %arg8[%c0_6, %c0_7], %7 {strides = array<i32>} : memref<48x32xf32, #tpu.memory_space<vmem>>, vector<48x32xf32>,
    %c0_i32_8 = arith.constant 0 : i32
    %9 = arith.cmpi eq, %arg2, %c0_i32_8 : i32
    %10 = arith.extui %9 : i1 to i32
    %c0_i32_9 = arith.constant 0 : i32
    %11 = arith.cmpi ne, %10, %c0_i32_9 : i32
    scf.if %11 {
      %c0_10 = arith.constant 0 : index
      %c0_11 = arith.constant 0 : index
      %12 = vector.load %arg8[%c0_10, %c0_11] : memref<48x32xf32, #tpu.memory_space<vmem>>, vector<48x32xf32>
      %c0_12 = arith.constant 0 : index
      %c0_13 = arith.constant 0 : index
      %13 = vector.load %arg5[%c0_12, %c0_13] : memref<1x32xf32, #tpu.memory_space<vmem>>, vector<1x32xf32>
      %14 = vector.broadcast %13 : vector<1x32xf32> to vector<48x32xf32>
      %15 = arith.addf %12, %14 : vector<48x32xf32>
      %c0_14 = arith.constant 0 : index
      %c0_15 = arith.constant 0 : index
      %16 = vector.load %arg6[%c0_14, %c0_15] : memref<48x32xf32, #tpu.memory_space<vmem>>, vector<48x32xf32>
      %17 = arith.addf %15, %16 : vector<48x32xf32>
      %c0_16 = arith.constant 0 : index
      %c0_17 = arith.constant 0 : index
      %18 = vector.load %arg7[%c0_16, %c0_17] : memref<48x32xf32, #tpu.memory_space<vmem>>, vector<48x32xf32>
      tpu.vector_store %arg7[%c0_16, %c0_17], %17 {strides = array<i32>} : memref<48x32xf32, #tpu.memory_space<vmem>>, vector<48x32xf32>,
    } else {
    }
    return
  }
  func.func @transform_0(%arg0: i32, %arg1: i32, %arg2: i32) -> (i32, i32) {
    %c0_i32 = arith.constant 0 : i32
    return %arg0, %arg2 : i32, i32
  }
  func.func @transform_1(%arg0: i32, %arg1: i32, %arg2: i32) -> (i32, i32) {
    %c0_i32 = arith.constant 0 : i32
    return %arg2, %arg1 : i32, i32
  }
  func.func @transform_2(%arg0: i32, %arg1: i32, %arg2: i32) -> (i32, i32) {
    %c0_i32 = arith.constant 0 : i32
    %c0_i32_0 = arith.constant 0 : i32
    return %c0_i32, %arg1 : i32, i32
  }
  func.func @transform_3(%arg0: i32, %arg1: i32, %arg2: i32) -> (i32, i32) {
    %c0_i32 = arith.constant 0 : i32
    return %arg0, %arg1 : i32, i32
  }
  func.func @transform_4(%arg0: i32, %arg1: i32, %arg2: i32) -> (i32, i32) {
    %c0_i32 = arith.constant 0 : i32
    return %arg0, %arg1 : i32, i32
  }
}

module attributes {stable_mosaic.version = 11 : i64} {
  func.func @_ln_matmul_kernel(%arg0: i32, %arg1: i32, %arg2: memref<32x32xf32, #tpu.memory_space<vmem>>, %arg3: memref<1x32xf32, #tpu.memory_space<vmem>>, %arg4: memref<1x32xf32, #tpu.memory_space<vmem>>, %arg5: memref<32x128xf32, #tpu.memory_space<vmem>>, %arg6: memref<1x128xf32, #tpu.memory_space<vmem>>, %arg7: memref<32x128xf32, #tpu.memory_space<vmem>>) attributes {dimension_semantics = [#tpu.dimension_semantics<parallel>, #tpu.dimension_semantics<parallel>], iteration_bounds = array<i64: 1, 1>, scalar_prefetch = 0 : i64, scratch_operands = 0 : i64, tpu.core_type = #tpu.core_type<tc>, window_params = [{transform_indices = @transform_0, window_bounds = array<i64: 32, 32>}, {pipeline_mode = #tpu.pipeline_mode<synchronous>, transform_indices = @transform_1, window_bounds = array<i64: 1, 32>}, {pipeline_mode = #tpu.pipeline_mode<synchronous>, transform_indices = @transform_2, window_bounds = array<i64: 1, 32>}, {transform_indices = @transform_3, window_bounds = array<i64: 32, 128>}, {transform_indices = @transform_4, window_bounds = array<i64: 1, 128>}, {transform_indices = @transform_5, window_bounds = array<i64: 32, 128>}]} {
    %c0 = arith.constant 0 : index
    %c0_0 = arith.constant 0 : index
    %0 = vector.load %arg2[%c0, %c0_0] : memref<32x32xf32, #tpu.memory_space<vmem>>, vector<32x32xf32>
    %cst = arith.constant dense<0.000000e+00> : vector<32xf32>
    %1 = vector.multi_reduction <add>, %0, %cst [1] : vector<32x32xf32> to vector<32xf32>
    %2 = vector.shape_cast %1 : vector<32xf32> to vector<32x1xf32>
    %cst_1 = arith.constant 3.200000e+01 : f32
    %3 = vector.broadcast %cst_1 : f32 to vector<32x1xf32>
    %4 = arith.divf %2, %3 : vector<32x1xf32>
    %5 = vector.broadcast %4 : vector<32x1xf32> to vector<32x32xf32>
    %6 = arith.subf %0, %5 : vector<32x32xf32>
    %7 = arith.mulf %6, %6 : vector<32x32xf32>
    %cst_2 = arith.constant dense<0.000000e+00> : vector<32xf32>
    %8 = vector.multi_reduction <add>, %7, %cst_2 [1] : vector<32x32xf32> to vector<32xf32>
    %9 = vector.shape_cast %8 : vector<32xf32> to vector<32x1xf32>
    %cst_3 = arith.constant 3.200000e+01 : f32
    %10 = vector.broadcast %cst_3 : f32 to vector<32x1xf32>
    %11 = arith.divf %9, %10 : vector<32x1xf32>
    %cst_4 = arith.constant 9.99999974E-6 : f32
    %12 = vector.broadcast %cst_4 : f32 to vector<32x1xf32>
    %13 = arith.addf %11, %12 : vector<32x1xf32>
    %14 = math.rsqrt %13 : vector<32x1xf32>
    %15 = vector.broadcast %14 : vector<32x1xf32> to vector<32x32xf32>
    %16 = arith.mulf %6, %15 : vector<32x32xf32>
    %c0_5 = arith.constant 0 : index
    %c0_6 = arith.constant 0 : index
    %17 = vector.load %arg3[%c0_5, %c0_6] : memref<1x32xf32, #tpu.memory_space<vmem>>, vector<1x32xf32>
    %18 = vector.broadcast %17 : vector<1x32xf32> to vector<32x32xf32>
    %19 = arith.mulf %16, %18 : vector<32x32xf32>
    %c0_7 = arith.constant 0 : index
    %c0_8 = arith.constant 0 : index
    %20 = vector.load %arg4[%c0_7, %c0_8] : memref<1x32xf32, #tpu.memory_space<vmem>>, vector<1x32xf32>
    %21 = vector.broadcast %20 : vector<1x32xf32> to vector<32x32xf32>
    %22 = arith.addf %19, %21 : vector<32x32xf32>
    %c0_9 = arith.constant 0 : index
    %c0_10 = arith.constant 0 : index
    %23 = vector.load %arg5[%c0_9, %c0_10] : memref<32x128xf32, #tpu.memory_space<vmem>>, vector<32x128xf32>
    %cst_11 = arith.constant dense<0.000000e+00> : vector<32x128xf32>
    %24 = tpu.matmul %22, %23, %cst_11 {dimension_numbers = #tpu.dot_dimension_numbers<[1], [0], [0], [1], [0, 0, 1, 1], [], []>} : vector<32x32xf32>, vector<32x128xf32>, vector<32x128xf32> -> vector<32x128xf32>
    %c0_12 = arith.constant 0 : index
    %c0_13 = arith.constant 0 : index
    %25 = vector.load %arg6[%c0_12, %c0_13] : memref<1x128xf32, #tpu.memory_space<vmem>>, vector<1x128xf32>
    %26 = vector.broadcast %25 : vector<1x128xf32> to vector<32x128xf32>
    %27 = arith.addf %24, %26 : vector<32x128xf32>
    %c0_14 = arith.constant 0 : index
    %c0_15 = arith.constant 0 : index
    %28 = vector.load %arg7[%c0_14, %c0_15] : memref<32x128xf32, #tpu.memory_space<vmem>>, vector<32x128xf32>
    tpu.vector_store %arg7[%c0_14, %c0_15], %27 {strides = array<i32>} : memref<32x128xf32, #tpu.memory_space<vmem>>, vector<32x128xf32>,
    return
  }
  func.func @transform_0(%arg0: i32, %arg1: i32) -> (i32, i32) {
    %c0_i32 = arith.constant 0 : i32
    %c0_i32_0 = arith.constant 0 : i32
    return %arg0, %c0_i32 : i32, i32
  }
  func.func @transform_1(%arg0: i32, %arg1: i32) -> (i32, i32) {
    %c0_i32 = arith.constant 0 : i32
    %c0_i32_0 = arith.constant 0 : i32
    %c0_i32_1 = arith.constant 0 : i32
    return %c0_i32, %c0_i32_0 : i32, i32
  }
  func.func @transform_2(%arg0: i32, %arg1: i32) -> (i32, i32) {
    %c0_i32 = arith.constant 0 : i32
    %c0_i32_0 = arith.constant 0 : i32
    %c0_i32_1 = arith.constant 0 : i32
    return %c0_i32, %c0_i32_0 : i32, i32
  }
  func.func @transform_3(%arg0: i32, %arg1: i32) -> (i32, i32) {
    %c0_i32 = arith.constant 0 : i32
    %c0_i32_0 = arith.constant 0 : i32
    return %c0_i32, %arg1 : i32, i32
  }
  func.func @transform_4(%arg0: i32, %arg1: i32) -> (i32, i32) {
    %c0_i32 = arith.constant 0 : i32
    %c0_i32_0 = arith.constant 0 : i32
    return %c0_i32, %arg1 : i32, i32
  }
  func.func @transform_5(%arg0: i32, %arg1: i32) -> (i32, i32) {
    %c0_i32 = arith.constant 0 : i32
    return %arg0, %arg1 : i32, i32
  }
}

</mosaic_0001>

<llo_original>
// kernel: combined_forward.9
$region0: #{combined_forward.9}
  #allocation0 [shape = 'u32[]', space=smem, size = 0x4, offset = 0x4, fixed_abs, tag = 'smem constant byte address 0x4 - core index']
  #allocation1 [shape = 'u32[144,128]{1,0:T(1,128)}', space=vmem, size = 0x12000, scoped, tag = 'internal scratch']
  %s0 = inlined_call_operand.vmem [shape: f32[2,8], index: 0, kind: input, shape index: {}]
  %s1 = inlined_call_operand.vmem [shape: f32[8,32], index: 1, kind: input, shape index: {}]
  %s2 = inlined_call_operand.vmem [shape: f32[1,32], index: 2, kind: input, shape index: {}]
  %s3 = inlined_call_operand.vmem [shape: f32[32,32], index: 3, kind: input, shape index: {}]
  %s4 = inlined_call_operand.vmem [shape: f32[1,32], index: 4, kind: input, shape index: {}]
  %s5 = inlined_call_operand.vmem [shape: f32[2,32], index: 5, kind: output, shape index: {}]
  %s6 = sld [smem:[#allocation0]]
  $region30: #{combined_forward.9} parent=0
    _
  %s8 = ssub.s32 1, %s6
  %s9 = scalar_select 0, %s8, %s6
  // Predicated region
  $region2: #{combined_forward.9} parent=0 // pred_check
    _
  $region3: #{combined_forward.9} parent=0 // pred_check_branch
    %11 = sbr.rel (0) target = $region5
  $region4: #{combined_forward.9} parent=0 // pred_region
    _
  $region5: #{combined_forward.9} parent=0 // pred_fallthru
    _
  // Predicated region
  $region6: #{combined_forward.9} parent=0 // pred_check
    _
  $region7: #{combined_forward.9} parent=0 // pred_check_branch
    %13 = sbr.rel (0) target = $region9
  $region8: #{combined_forward.9} parent=0 // pred_region
    _
  $region9: #{combined_forward.9} parent=0 // pred_fallthru
    _
  // Predicated region
  $region10: #{combined_forward.9} parent=0 // pred_check
    _
  $region11: #{combined_forward.9} parent=0 // pred_check_branch
    %15 = sbr.rel (0) target = $region13
  $region12: #{combined_forward.9} parent=0 // pred_region
    _
  $region13: #{combined_forward.9} parent=0 // pred_fallthru
    _
  // Predicated region
  $region14: #{combined_forward.9} parent=0 // pred_check
    _
  $region15: #{combined_forward.9} parent=0 // pred_check_branch
    %17 = sbr.rel (0) target = $region17
  $region16: #{combined_forward.9} parent=0 // pred_region
    _
  $region17: #{combined_forward.9} parent=0 // pred_fallthru
    _
  // Predicated region
  $region18: #{combined_forward.9} parent=0 // pred_check
    _
  $region19: #{combined_forward.9} parent=0 // pred_check_branch
    %19 = sbr.rel (0) target = $region21
  $region20: #{combined_forward.9} parent=0 // pred_region
    _
  $region21: #{combined_forward.9} parent=0 // pred_fallthru
    _
  %v20 = vld [vmem:[%s0] sm:$0x3]
  %v21 = vld [vmem:[%s1] sm:$0xff]
  %v22 = vld [vmem:[%s2] sm:$0x1]
  %v24 = vlaneseq
  %v25 = vshrl.u32 %v24, 7
  %v26 = vsub.s32 0, %v25
  %v27 = vrot.slane %v22, %v26
  %vm29 = vcmask 64512
  %v31 = vsel %vm29, %v20, 0
  %33 = vmatprep.subr.mxu0 0.0
  %34 = vmatpush1.msra.mxu0 %v21
  %35 = vmatprep.subr.mxu0 0.0
  %36 = vmatpush1.msra.mxu0 0.0
  %37 = vmatprep.subr.mxu0 0.0
  %38 = vmatpush1.msra.mxu0 0.0
  %39 = vmatprep.subr.mxu0 0.0
  %40 = vmatpush1.msra.mxu0 0.0
  %41 = vmatprep.subr.mxu0 0.0
  %42 = vmatpush1.msra.mxu0 0.0
  %43 = vmatprep.subr.mxu0 0.0
  %44 = vmatpush1.msra.mxu0 0.0
  %45 = vmatprep.subr.mxu0 0.0
  %46 = vmatpush1.msra.mxu0 0.0
  %47 = vmatprep.subr.mxu0 0.0
  %48 = vmatpush1.msra.mxu0 0.0
  %49 = vmatprep.subr.mxu0 0.0
  %50 = vmatpush1.msra.mxu0 0.0
  %51 = vmatprep.subr.mxu0 0.0
  %52 = vmatpush1.msra.mxu0 0.0
  %53 = vmatprep.subr.mxu0 0.0
  %54 = vmatpush1.msra.mxu0 0.0
  %55 = vmatprep.subr.mxu0 0.0
  %56 = vmatpush1.msra.mxu0 0.0
  %57 = vmatprep.subr.mxu0 0.0
  %58 = vmatpush1.msra.mxu0 0.0
  %59 = vmatprep.subr.mxu0 0.0
  %60 = vmatpush1.msra.mxu0 0.0
  %61 = vmatprep.subr.mxu0 0.0
  %62 = vmatpush1.msra.mxu0 0.0
  %63 = vmatprep.subr.mxu0 0.0
  %64 = vmatpush1.msra.mxu0 0.0
  %65 = vmatprep.subr.mxu0 0.0
  %66 = vmatpush1.msra.mxu0 0.0
  %67 = vmatprep.subr.mxu0 0.0
  %68 = vmatpush1.msra.mxu0 0.0
  %69 = vmatprep.subr.mxu0 0.0
  %70 = vmatpush1.msra.mxu0 0.0
  %71 = vmatprep.subr.mxu0 0.0
  %72 = vmatpush1.msra.mxu0 0.0
  %73 = vmatprep.subr.mxu0 0.0
  %74 = vmatpush1.msra.mxu0 0.0
  %75 = vmatprep.subr.mxu0 0.0
  %76 = vmatpush1.msra.mxu0 0.0
  %77 = vmatprep.subr.mxu0 0.0
  %78 = vmatpush1.msra.mxu0 0.0
  %79 = vmatprep.subr.mxu0 0.0
  %80 = vmatpush1.msra.mxu0 0.0
  %81 = vmatprep.subr.mxu0 0.0
  %82 = vmatpush1.msra.mxu0 0.0
  %83 = vmatprep.subr.mxu0 0.0
  %84 = vmatpush1.msra.mxu0 0.0
  %85 = vmatprep.subr.mxu0 0.0
  %86 = vmatpush1.msra.mxu0 0.0
  %87 = vmatprep.subr.mxu0 0.0
  %88 = vmatpush1.msra.mxu0 0.0
  %89 = vmatprep.subr.mxu0 0.0
  %90 = vmatpush1.msra.mxu0 0.0
  %91 = vmatprep.subr.mxu0 0.0
  %92 = vmatpush1.msra.mxu0 0.0
  %93 = vmatprep.subr.mxu0 0.0
  %94 = vmatpush1.msra.mxu0 0.0
  %95 = vmatprep.subr.mxu0 0.0
  %96 = vmatpush1.msra.mxu0 0.0
  %97 = vmatprep.mubr.f32.mxu0 0.0
  %98 = vmatmul.mubr.f32.gmra.mrb[0].mxu0 %v31
  %v99 = vpop.f32.mrb[0].mxu0
  %v100 = vadd.f32 %v27, %v99
  %v101 = vpop.f32.mrb[0].mxu0
  %102 = vdwg.mxu0
  %v103 = vxor.u32 %v100, 2147483648
  %v104 = vmul.f32 %v103, 1.442695
  %v105 = vpow.pop %v104
  %v106 = vadd.f32 %v105, 1.0
  %v107 = vrcp.pop %v106
  %v108 = vmul.f32 1.0, %v107
  %v109 = vmul.f32 %v100, %v108
  %v110 = vld [vmem:[%s3] sm:$0xff]
  %v111 = vld [vmem:[%s3 + $0x8] sm:$0xff]
  %v112 = vld [vmem:[%s3 + $0x10] sm:$0xff]
  %v113 = vld [vmem:[%s3 + $0x18] sm:$0xff]
  %v114 = vld [vmem:[%s4] sm:$0x1]
  %v116 = vlaneseq
  %v117 = vshrl.u32 %v116, 7
  %v118 = vsub.s32 0, %v117
  %v119 = vrot.slane %v114, %v118
  %vm121 = vcmask 261120
  %v123 = vsel %vm121, %v109, 0
  %125 = vmatprep.subr.mxu0 0.0
  %126 = vmatpush1.msra.mxu0 %v110
  %127 = vmatprep.subr.mxu0 0.0
  %128 = vmatpush1.msra.mxu0 %v111
  %129 = vmatprep.subr.mxu0 0.0
  %130 = vmatpush1.msra.mxu0 %v112
  %131 = vmatprep.subr.mxu0 0.0
  %132 = vmatpush1.msra.mxu0 %v113
  %133 = vmatprep.subr.mxu0 0.0
  %134 = vmatpush1.msra.mxu0 0.0
  %135 = vmatprep.subr.mxu0 0.0
  %136 = vmatpush1.msra.mxu0 0.0
  %137 = vmatprep.subr.mxu0 0.0
  %138 = vmatpush1.msra.mxu0 0.0
  %139 = vmatprep.subr.mxu0 0.0
  %140 = vmatpush1.msra.mxu0 0.0
  %141 = vmatprep.subr.mxu0 0.0
  %142 = vmatpush1.msra.mxu0 0.0
  %143 = vmatprep.subr.mxu0 0.0
  %144 = vmatpush1.msra.mxu0 0.0
  %145 = vmatprep.subr.mxu0 0.0
  %146 = vmatpush1.msra.mxu0 0.0
  %147 = vmatprep.subr.mxu0 0.0
  %148 = vmatpush1.msra.mxu0 0.0
  %149 = vmatprep.subr.mxu0 0.0
  %150 = vmatpush1.msra.mxu0 0.0
  %151 = vmatprep.subr.mxu0 0.0
  %152 = vmatpush1.msra.mxu0 0.0
  %153 = vmatprep.subr.mxu0 0.0
  %154 = vmatpush1.msra.mxu0 0.0
  %155 = vmatprep.subr.mxu0 0.0
  %156 = vmatpush1.msra.mxu0 0.0
  %157 = vmatprep.subr.mxu0 0.0
  %158 = vmatpush1.msra.mxu0 0.0
  %159 = vmatprep.subr.mxu0 0.0
  %160 = vmatpush1.msra.mxu0 0.0
  %161 = vmatprep.subr.mxu0 0.0
  %162 = vmatpush1.msra.mxu0 0.0
  %163 = vmatprep.subr.mxu0 0.0
  %164 = vmatpush1.msra.mxu0 0.0
  %165 = vmatprep.subr.mxu0 0.0
  %166 = vmatpush1.msra.mxu0 0.0
  %167 = vmatprep.subr.mxu0 0.0
  %168 = vmatpush1.msra.mxu0 0.0
  %169 = vmatprep.subr.mxu0 0.0
  %170 = vmatpush1.msra.mxu0 0.0
  %171 = vmatprep.subr.mxu0 0.0
  %172 = vmatpush1.msra.mxu0 0.0
  %173 = vmatprep.subr.mxu0 0.0
  %174 = vmatpush1.msra.mxu0 0.0
  %175 = vmatprep.subr.mxu0 0.0
  %176 = vmatpush1.msra.mxu0 0.0
  %177 = vmatprep.subr.mxu0 0.0
  %178 = vmatpush1.msra.mxu0 0.0
  %179 = vmatprep.subr.mxu0 0.0
  %180 = vmatpush1.msra.mxu0 0.0
  %181 = vmatprep.subr.mxu0 0.0
  %182 = vmatpush1.msra.mxu0 0.0
  %183 = vmatprep.subr.mxu0 0.0
  %184 = vmatpush1.msra.mxu0 0.0
  %185 = vmatprep.subr.mxu0 0.0
  %186 = vmatpush1.msra.mxu0 0.0
  %187 = vmatprep.subr.mxu0 0.0
  %188 = vmatpush1.msra.mxu0 0.0
  %189 = vmatprep.mubr.f32.mxu0 0.0
  %190 = vmatmul.mubr.f32.gmra.mrb[0].mxu0 %v123
  %v191 = vpop.f32.mrb[0].mxu0
  %v192 = vadd.f32 %v119, %v191
  %v193 = vpop.f32.mrb[0].mxu0
  %194 = vdwg.mxu0
  %vm195 = vcmask 254976
  %196 = vst.msk [vmem:[%s5] sm:$0x3] %vm195, %v192
  // Predicated region
  $region22: #{combined_forward.9} parent=0 // pred_check
    _
  $region23: #{combined_forward.9} parent=0 // pred_check_branch
    %198 = sbr.rel (0) target = $region25
  $region24: #{combined_forward.9} parent=0 // pred_region
    _
  $region25: #{combined_forward.9} parent=0 // pred_fallthru
    _
  // Predicated region
  $region26: #{combined_forward.9} parent=0 // pred_check
    _
  $region27: #{combined_forward.9} parent=0 // pred_check_branch
    %200 = sbr.rel (0) target = $region29
  $region28: #{combined_forward.9} parent=0 // pred_region
    _
  $region29: #{combined_forward.9} parent=0 // pred_fallthru
    _

// kernel: combined_forward.10
$region0: #{combined_forward.10}
  #allocation0 [shape = 'u32[]', space=smem, size = 0x4, offset = 0x4, fixed_abs, tag = 'smem constant byte address 0x4 - core index']
  #allocation1 [shape = 'u32[144,128]{1,0:T(1,128)}', space=vmem, size = 0x12000, scoped, tag = 'internal scratch']
  #allocation2 [shape = 'f32[32,32]{1,0:T(8,128)}', space=vmem, size = 0x4000, scoped, tag = 'scratch operand']
  %s0 = inlined_call_operand.vmem [shape: f32[32,16], index: 0, kind: input, shape index: {}]
  %s1 = inlined_call_operand.vmem [shape: f32[16,32], index: 1, kind: input, shape index: {}]
  %s2 = inlined_call_operand.vmem [shape: f32[1,32], index: 2, kind: input, shape index: {}]
  %s3 = inlined_call_operand.vmem [shape: f32[32,32], index: 3, kind: output, shape index: {}]
  %s4 = sld [smem:[#allocation0]]
  $region30: #{combined_forward.10} parent=0
    _
  %s6 = ssub.s32 1, %s4
  %s7 = scalar_select 0, %s6, %s4
  // Predicated region
  $region2: #{combined_forward.10} parent=0 // pred_check
    _
  $region3: #{combined_forward.10} parent=0 // pred_check_branch
    %9 = sbr.rel (0) target = $region5
  $region4: #{combined_forward.10} parent=0 // pred_region
    _
  $region5: #{combined_forward.10} parent=0 // pred_fallthru
    _
  // Predicated region
  $region6: #{combined_forward.10} parent=0 // pred_check
    _
  $region7: #{combined_forward.10} parent=0 // pred_check_branch
    %11 = sbr.rel (0) target = $region9
  $region8: #{combined_forward.10} parent=0 // pred_region
    _
  $region9: #{combined_forward.10} parent=0 // pred_fallthru
    _
  // Predicated region
  $region10: #{combined_forward.10} parent=0 // pred_check
    _
  $region11: #{combined_forward.10} parent=0 // pred_check_branch
    %13 = sbr.rel (0) target = $region13
  $region12: #{combined_forward.10} parent=0 // pred_region
    _
  $region13: #{combined_forward.10} parent=0 // pred_fallthru
    _
  %p14 = scmp.eq.s32.totalorder 0, 0
  // Predicated region
  $region14: #{combined_forward.10} parent=0 // pred_check
    %p15 = pneg %p14
  $region15: #{combined_forward.10} parent=0 // pred_check_branch
    %17 = sbr.rel (%p15) target = $region17
  $region16: #{combined_forward.10} parent=0 // pred_region
    %vm18 = vcmask 261120
    %19 = vst.msk [vmem:[#allocation2] sm:$0xff] %vm18, 0.0
    %20 = vst.msk [vmem:[#allocation2 + $0x8] sm:$0xff] %vm18, 0.0
    %21 = vst.msk [vmem:[#allocation2 + $0x10] sm:$0xff] %vm18, 0.0
    %22 = vst.msk [vmem:[#allocation2 + $0x18] sm:$0xff] %vm18, 0.0
  $region17: #{combined_forward.10} parent=0 // pred_fallthru
    _
  %v23 = vld [vmem:[#allocation2] sm:$0xff]
  %v24 = vld [vmem:[#allocation2 + $0x8] sm:$0xff]
  %v25 = vld [vmem:[#allocation2 + $0x10] sm:$0xff]
  %v26 = vld [vmem:[#allocation2 + $0x18] sm:$0xff]
  %v27 = vld [vmem:[%s0] sm:$0xff]
  %v28 = vld [vmem:[%s0 + $0x8] sm:$0xff]
  %v29 = vld [vmem:[%s0 + $0x10] sm:$0xff]
  %v30 = vld [vmem:[%s0 + $0x18] sm:$0xff]
  %v31 = vld [vmem:[%s1] sm:$0xff]
  %v32 = vld [vmem:[%s1 + $0x8] sm:$0xff]
  %vm33 = vcmask 130048
  %v35 = vsel %vm33, %v27, 0
  %v38 = vsel %vm33, %v28, 0
  %v41 = vsel %vm33, %v29, 0
  %v44 = vsel %vm33, %v30, 0
  %46 = vmatprep.subr.mxu0 0.0
  %47 = vmatpush1.msra.mxu0 %v31
  %48 = vmatprep.subr.mxu0 0.0
  %49 = vmatpush1.msra.mxu0 %v32
  %50 = vmatprep.subr.mxu0 0.0
  %51 = vmatpush1.msra.mxu0 0.0
  %52 = vmatprep.subr.mxu0 0.0
  %53 = vmatpush1.msra.mxu0 0.0
  %54 = vmatprep.subr.mxu0 0.0
  %55 = vmatpush1.msra.mxu0 0.0
  %56 = vmatprep.subr.mxu0 0.0
  %57 = vmatpush1.msra.mxu0 0.0
  %58 = vmatprep.subr.mxu0 0.0
  %59 = vmatpush1.msra.mxu0 0.0
  %60 = vmatprep.subr.mxu0 0.0
  %61 = vmatpush1.msra.mxu0 0.0
  %62 = vmatprep.subr.mxu0 0.0
  %63 = vmatpush1.msra.mxu0 0.0
  %64 = vmatprep.subr.mxu0 0.0
  %65 = vmatpush1.msra.mxu0 0.0
  %66 = vmatprep.subr.mxu0 0.0
  %67 = vmatpush1.msra.mxu0 0.0
  %68 = vmatprep.subr.mxu0 0.0
  %69 = vmatpush1.msra.mxu0 0.0
  %70 = vmatprep.subr.mxu0 0.0
  %71 = vmatpush1.msra.mxu0 0.0
  %72 = vmatprep.subr.mxu0 0.0
  %73 = vmatpush1.msra.mxu0 0.0
  %74 = vmatprep.subr.mxu0 0.0
  %75 = vmatpush1.msra.mxu0 0.0
  %76 = vmatprep.subr.mxu0 0.0
  %77 = vmatpush1.msra.mxu0 0.0
  %78 = vmatprep.subr.mxu0 0.0
  %79 = vmatpush1.msra.mxu0 0.0
  %80 = vmatprep.subr.mxu0 0.0
  %81 = vmatpush1.msra.mxu0 0.0
  %82 = vmatprep.subr.mxu0 0.0
  %83 = vmatpush1.msra.mxu0 0.0
  %84 = vmatprep.subr.mxu0 0.0
  %85 = vmatpush1.msra.mxu0 0.0
  %86 = vmatprep.subr.mxu0 0.0
  %87 = vmatpush1.msra.mxu0 0.0
  %88 = vmatprep.subr.mxu0 0.0
  %89 = vmatpush1.msra.mxu0 0.0
  %90 = vmatprep.subr.mxu0 0.0
  %91 = vmatpush1.msra.mxu0 0.0
  %92 = vmatprep.subr.mxu0 0.0
  %93 = vmatpush1.msra.mxu0 0.0
  %94 = vmatprep.subr.mxu0 0.0
  %95 = vmatpush1.msra.mxu0 0.0
  %96 = vmatprep.subr.mxu0 0.0
  %97 = vmatpush1.msra.mxu0 0.0
  %98 = vmatprep.subr.mxu0 0.0
  %99 = vmatpush1.msra.mxu0 0.0
  %100 = vmatprep.subr.mxu0 0.0
  %101 = vmatpush1.msra.mxu0 0.0
  %102 = vmatprep.subr.mxu0 0.0
  %103 = vmatpush1.msra.mxu0 0.0
  %104 = vmatprep.subr.mxu0 0.0
  %105 = vmatpush1.msra.mxu0 0.0
  %106 = vmatprep.subr.mxu0 0.0
  %107 = vmatpush1.msra.mxu0 0.0
  %108 = vmatprep.subr.mxu0 0.0
  %109 = vmatpush1.msra.mxu0 0.0
  %110 = vmatprep.mubr.f32.mxu0 0.0
  %111 = vmatmul.mubr.f32.gmra.mrb[0].mxu0 %v35
  %v112 = vpop.f32.mrb[0].mxu0
  %v113 = vadd.f32 0.0, %v112
  %v114 = vpop.f32.mrb[0].mxu0
  %115 = vmatprep.mubr.f32.mxu0 0.0
  %116 = vmatmul.mubr.f32.gmra.mrb[0].mxu0 %v38
  %v117 = vpop.f32.mrb[0].mxu0
  %v118 = vadd.f32 0.0, %v117
  %v119 = vpop.f32.mrb[0].mxu0
  %120 = vmatprep.mubr.f32.mxu0 0.0
  %121 = vmatmul.mubr.f32.gmra.mrb[0].mxu0 %v41
  %v122 = vpop.f32.mrb[0].mxu0
  %v123 = vadd.f32 0.0, %v122
  %v124 = vpop.f32.mrb[0].mxu0
  %125 = vmatprep.mubr.f32.mxu0 0.0
  %126 = vmatmul.mubr.f32.gmra.mrb[0].mxu0 %v44
  %v127 = vpop.f32.mrb[0].mxu0
  %v128 = vadd.f32 0.0, %v127
  %v129 = vpop.f32.mrb[0].mxu0
  %130 = vdwg.mxu0
  %v131 = vadd.f32 %v23, %v113
  %v132 = vadd.f32 %v24, %v118
  %v133 = vadd.f32 %v25, %v123
  %v134 = vadd.f32 %v26, %v128
  %vm135 = vcmask 261120
  %136 = vst.msk [vmem:[#allocation2] sm:$0xff] %vm135, %v131
  %137 = vst.msk [vmem:[#allocation2 + $0x8] sm:$0xff] %vm135, %v132
  %138 = vst.msk [vmem:[#allocation2 + $0x10] sm:$0xff] %vm135, %v133
  %139 = vst.msk [vmem:[#allocation2 + $0x18] sm:$0xff] %vm135, %v134
  // Predicated region
  $region18: #{combined_forward.10} parent=0 // pred_check
    %p140 = pneg %p14
  $region19: #{combined_forward.10} parent=0 // pred_check_branch
    %142 = sbr.rel (%p140) target = $region21
  $region20: #{combined_forward.10} parent=0 // pred_region
    %v143 = vld [vmem:[#allocation2] sm:$0xff]
    %v144 = vld [vmem:[#allocation2 + $0x8] sm:$0xff]
    %v145 = vld [vmem:[#allocation2 + $0x10] sm:$0xff]
    %v146 = vld [vmem:[#allocation2 + $0x18] sm:$0xff]
    %v147 = vld [vmem:[%s2] sm:$0x1]
    %v149 = vlaneseq
    %v150 = vshrl.u32 %v149, 7
    %v151 = vsub.s32 0, %v150
    %v152 = vrot.slane %v147, %v151
    %v154 = vadd.f32 %v143, %v152
    %v155 = vadd.f32 %v144, %v152
    %v156 = vadd.f32 %v145, %v152
    %v157 = vadd.f32 %v146, %v152
    %158 = vst.msk [vmem:[%s3] sm:$0xff] %vm135, %v154
    %159 = vst.msk [vmem:[%s3 + $0x8] sm:$0xff] %vm135, %v155
    %160 = vst.msk [vmem:[%s3 + $0x10] sm:$0xff] %vm135, %v156
    %161 = vst.msk [vmem:[%s3 + $0x18] sm:$0xff] %vm135, %v157
  $region21: #{combined_forward.10} parent=0 // pred_fallthru
    _
  // Predicated region
  $region22: #{combined_forward.10} parent=0 // pred_check
    _
  $region23: #{combined_forward.10} parent=0 // pred_check_branch
    %163 = sbr.rel (0) target = $region25
  $region24: #{combined_forward.10} parent=0 // pred_region
    _
  $region25: #{combined_forward.10} parent=0 // pred_fallthru
    _
  // Predicated region
  $region26: #{combined_forward.10} parent=0 // pred_check
    _
  $region27: #{combined_forward.10} parent=0 // pred_check_branch
    %165 = sbr.rel (0) target = $region29
  $region28: #{combined_forward.10} parent=0 // pred_region
    _
  $region29: #{combined_forward.10} parent=0 // pred_fallthru
    _

// kernel: combined_forward.11
$region0: #{combined_forward.11}
  #allocation0 [shape = 'u32[]', space=smem, size = 0x4, offset = 0x4, fixed_abs, tag = 'smem constant byte address 0x4 - core index']
  #allocation1 [shape = 'u32[144,128]{1,0:T(1,128)}', space=vmem, size = 0x12000, scoped, tag = 'internal scratch']
  %s0 = inlined_call_operand.vmem [shape: f32[2,32], index: 0, kind: input, shape index: {}]
  %s1 = inlined_call_operand.vmem [shape: f32[32,32], index: 1, kind: input, shape index: {}]
  %s2 = inlined_call_operand.vmem [shape: f32[1,32], index: 2, kind: input, shape index: {}]
  %s3 = inlined_call_operand.vmem [shape: f32[32,32], index: 3, kind: input, shape index: {}]
  %s4 = inlined_call_operand.vmem [shape: f32[1,32], index: 4, kind: input, shape index: {}]
  %s5 = inlined_call_operand.vmem [shape: f32[2,32], index: 5, kind: output, shape index: {}]
  %s6 = sld [smem:[#allocation0]]
  $region30: #{combined_forward.11} parent=0
    _
  %s8 = ssub.s32 1, %s6
  %s9 = scalar_select 0, %s8, %s6
  // Predicated region
  $region2: #{combined_forward.11} parent=0 // pred_check
    _
  $region3: #{combined_forward.11} parent=0 // pred_check_branch
    %11 = sbr.rel (0) target = $region5
  $region4: #{combined_forward.11} parent=0 // pred_region
    _
  $region5: #{combined_forward.11} parent=0 // pred_fallthru
    _
  // Predicated region
  $region6: #{combined_forward.11} parent=0 // pred_check
    _
  $region7: #{combined_forward.11} parent=0 // pred_check_branch
    %13 = sbr.rel (0) target = $region9
  $region8: #{combined_forward.11} parent=0 // pred_region
    _
  $region9: #{combined_forward.11} parent=0 // pred_fallthru
    _
  // Predicated region
  $region10: #{combined_forward.11} parent=0 // pred_check
    _
  $region11: #{combined_forward.11} parent=0 // pred_check_branch
    %15 = sbr.rel (0) target = $region13
  $region12: #{combined_forward.11} parent=0 // pred_region
    _
  $region13: #{combined_forward.11} parent=0 // pred_fallthru
    _
  // Predicated region
  $region14: #{combined_forward.11} parent=0 // pred_check
    _
  $region15: #{combined_forward.11} parent=0 // pred_check_branch
    %17 = sbr.rel (0) target = $region17
  $region16: #{combined_forward.11} parent=0 // pred_region
    _
  $region17: #{combined_forward.11} parent=0 // pred_fallthru
    _
  // Predicated region
  $region18: #{combined_forward.11} parent=0 // pred_check
    _
  $region19: #{combined_forward.11} parent=0 // pred_check_branch
    %19 = sbr.rel (0) target = $region21
  $region20: #{combined_forward.11} parent=0 // pred_region
    _
  $region21: #{combined_forward.11} parent=0 // pred_fallthru
    _
  %v20 = vld [vmem:[%s0] sm:$0x3]
  %v21 = vld [vmem:[%s1] sm:$0xff]
  %v22 = vld [vmem:[%s1 + $0x8] sm:$0xff]
  %v23 = vld [vmem:[%s1 + $0x10] sm:$0xff]
  %v24 = vld [vmem:[%s1 + $0x18] sm:$0xff]
  %v25 = vld [vmem:[%s2] sm:$0x1]
  %v27 = vlaneseq
  %v28 = vshrl.u32 %v27, 7
  %v29 = vsub.s32 0, %v28
  %v30 = vrot.slane %v25, %v29
  %vm32 = vcmask 261120
  %v34 = vsel %vm32, %v20, 0
  %36 = vmatprep.subr.mxu0 0.0
  %37 = vmatpush1.msra.mxu0 %v21
  %38 = vmatprep.subr.mxu0 0.0
  %39 = vmatpush1.msra.mxu0 %v22
  %40 = vmatprep.subr.mxu0 0.0
  %41 = vmatpush1.msra.mxu0 %v23
  %42 = vmatprep.subr.mxu0 0.0
  %43 = vmatpush1.msra.mxu0 %v24
  %44 = vmatprep.subr.mxu0 0.0
  %45 = vmatpush1.msra.mxu0 0.0
  %46 = vmatprep.subr.mxu0 0.0
  %47 = vmatpush1.msra.mxu0 0.0
  %48 = vmatprep.subr.mxu0 0.0
  %49 = vmatpush1.msra.mxu0 0.0
  %50 = vmatprep.subr.mxu0 0.0
  %51 = vmatpush1.msra.mxu0 0.0
  %52 = vmatprep.subr.mxu0 0.0
  %53 = vmatpush1.msra.mxu0 0.0
  %54 = vmatprep.subr.mxu0 0.0
  %55 = vmatpush1.msra.mxu0 0.0
  %56 = vmatprep.subr.mxu0 0.0
  %57 = vmatpush1.msra.mxu0 0.0
  %58 = vmatprep.subr.mxu0 0.0
  %59 = vmatpush1.msra.mxu0 0.0
  %60 = vmatprep.subr.mxu0 0.0
  %61 = vmatpush1.msra.mxu0 0.0
  %62 = vmatprep.subr.mxu0 0.0
  %63 = vmatpush1.msra.mxu0 0.0
  %64 = vmatprep.subr.mxu0 0.0
  %65 = vmatpush1.msra.mxu0 0.0
  %66 = vmatprep.subr.mxu0 0.0
  %67 = vmatpush1.msra.mxu0 0.0
  %68 = vmatprep.subr.mxu0 0.0
  %69 = vmatpush1.msra.mxu0 0.0
  %70 = vmatprep.subr.mxu0 0.0
  %71 = vmatpush1.msra.mxu0 0.0
  %72 = vmatprep.subr.mxu0 0.0
  %73 = vmatpush1.msra.mxu0 0.0
  %74 = vmatprep.subr.mxu0 0.0
  %75 = vmatpush1.msra.mxu0 0.0
  %76 = vmatprep.subr.mxu0 0.0
  %77 = vmatpush1.msra.mxu0 0.0
  %78 = vmatprep.subr.mxu0 0.0
  %79 = vmatpush1.msra.mxu0 0.0
  %80 = vmatprep.subr.mxu0 0.0
  %81 = vmatpush1.msra.mxu0 0.0
  %82 = vmatprep.subr.mxu0 0.0
  %83 = vmatpush1.msra.mxu0 0.0
  %84 = vmatprep.subr.mxu0 0.0
  %85 = vmatpush1.msra.mxu0 0.0
  %86 = vmatprep.subr.mxu0 0.0
  %87 = vmatpush1.msra.mxu0 0.0
  %88 = vmatprep.subr.mxu0 0.0
  %89 = vmatpush1.msra.mxu0 0.0
  %90 = vmatprep.subr.mxu0 0.0
  %91 = vmatpush1.msra.mxu0 0.0
  %92 = vmatprep.subr.mxu0 0.0
  %93 = vmatpush1.msra.mxu0 0.0
  %94 = vmatprep.subr.mxu0 0.0
  %95 = vmatpush1.msra.mxu0 0.0
  %96 = vmatprep.subr.mxu0 0.0
  %97 = vmatpush1.msra.mxu0 0.0
  %98 = vmatprep.subr.mxu0 0.0
  %99 = vmatpush1.msra.mxu0 0.0
  %100 = vmatprep.mubr.f32.mxu0 0.0
  %101 = vmatmul.mubr.f32.gmra.mrb[0].mxu0 %v34
  %v102 = vpop.f32.mrb[0].mxu0
  %v103 = vadd.f32 %v30, %v102
  %v104 = vpop.f32.mrb[0].mxu0
  %105 = vdwg.mxu0
  %v106 = vxor.u32 %v103, 2147483648
  %v107 = vmul.f32 %v106, 1.442695
  %v108 = vpow.pop %v107
  %v109 = vadd.f32 %v108, 1.0
  %v110 = vrcp.pop %v109
  %v111 = vmul.f32 1.0, %v110
  %v112 = vmul.f32 %v103, %v111
  %v113 = vld [vmem:[%s3] sm:$0xff]
  %v114 = vld [vmem:[%s3 + $0x8] sm:$0xff]
  %v115 = vld [vmem:[%s3 + $0x10] sm:$0xff]
  %v116 = vld [vmem:[%s3 + $0x18] sm:$0xff]
  %v117 = vld [vmem:[%s4] sm:$0x1]
  %v119 = vlaneseq
  %v120 = vshrl.u32 %v119, 7
  %v121 = vsub.s32 0, %v120
  %v122 = vrot.slane %v117, %v121
  %v125 = vsel %vm32, %v112, 0
  %127 = vmatprep.subr.mxu0 0.0
  %128 = vmatpush1.msra.mxu0 %v113
  %129 = vmatprep.subr.mxu0 0.0
  %130 = vmatpush1.msra.mxu0 %v114
  %131 = vmatprep.subr.mxu0 0.0
  %132 = vmatpush1.msra.mxu0 %v115
  %133 = vmatprep.subr.mxu0 0.0
  %134 = vmatpush1.msra.mxu0 %v116
  %135 = vmatprep.subr.mxu0 0.0
  %136 = vmatpush1.msra.mxu0 0.0
  %137 = vmatprep.subr.mxu0 0.0
  %138 = vmatpush1.msra.mxu0 0.0
  %139 = vmatprep.subr.mxu0 0.0
  %140 = vmatpush1.msra.mxu0 0.0
  %141 = vmatprep.subr.mxu0 0.0
  %142 = vmatpush1.msra.mxu0 0.0
  %143 = vmatprep.subr.mxu0 0.0
  %144 = vmatpush1.msra.mxu0 0.0
  %145 = vmatprep.subr.mxu0 0.0
  %146 = vmatpush1.msra.mxu0 0.0
  %147 = vmatprep.subr.mxu0 0.0
  %148 = vmatpush1.msra.mxu0 0.0
  %149 = vmatprep.subr.mxu0 0.0
  %150 = vmatpush1.msra.mxu0 0.0
  %151 = vmatprep.subr.mxu0 0.0
  %152 = vmatpush1.msra.mxu0 0.0
  %153 = vmatprep.subr.mxu0 0.0
  %154 = vmatpush1.msra.mxu0 0.0
  %155 = vmatprep.subr.mxu0 0.0
  %156 = vmatpush1.msra.mxu0 0.0
  %157 = vmatprep.subr.mxu0 0.0
  %158 = vmatpush1.msra.mxu0 0.0
  %159 = vmatprep.subr.mxu0 0.0
  %160 = vmatpush1.msra.mxu0 0.0
  %161 = vmatprep.subr.mxu0 0.0
  %162 = vmatpush1.msra.mxu0 0.0
  %163 = vmatprep.subr.mxu0 0.0
  %164 = vmatpush1.msra.mxu0 0.0
  %165 = vmatprep.subr.mxu0 0.0
  %166 = vmatpush1.msra.mxu0 0.0
  %167 = vmatprep.subr.mxu0 0.0
  %168 = vmatpush1.msra.mxu0 0.0
  %169 = vmatprep.subr.mxu0 0.0
  %170 = vmatpush1.msra.mxu0 0.0
  %171 = vmatprep.subr.mxu0 0.0
  %172 = vmatpush1.msra.mxu0 0.0
  %173 = vmatprep.subr.mxu0 0.0
  %174 = vmatpush1.msra.mxu0 0.0
  %175 = vmatprep.subr.mxu0 0.0
  %176 = vmatpush1.msra.mxu0 0.0
  %177 = vmatprep.subr.mxu0 0.0
  %178 = vmatpush1.msra.mxu0 0.0
  %179 = vmatprep.subr.mxu0 0.0
  %180 = vmatpush1.msra.mxu0 0.0
  %181 = vmatprep.subr.mxu0 0.0
  %182 = vmatpush1.msra.mxu0 0.0
  %183 = vmatprep.subr.mxu0 0.0
  %184 = vmatpush1.msra.mxu0 0.0
  %185 = vmatprep.subr.mxu0 0.0
  %186 = vmatpush1.msra.mxu0 0.0
  %187 = vmatprep.subr.mxu0 0.0
  %188 = vmatpush1.msra.mxu0 0.0
  %189 = vmatprep.subr.mxu0 0.0
  %190 = vmatpush1.msra.mxu0 0.0
  %191 = vmatprep.mubr.f32.mxu0 0.0
  %192 = vmatmul.mubr.f32.gmra.mrb[0].mxu0 %v125
  %v193 = vpop.f32.mrb[0].mxu0
  %v194 = vadd.f32 %v122, %v193
  %v195 = vpop.f32.mrb[0].mxu0
  %196 = vdwg.mxu0
  %vm197 = vcmask 254976
  %198 = vst.msk [vmem:[%s5] sm:$0x3] %vm197, %v194
  // Predicated region
  $region22: #{combined_forward.11} parent=0 // pred_check
    _
  $region23: #{combined_forward.11} parent=0 // pred_check_branch
    %200 = sbr.rel (0) target = $region25
  $region24: #{combined_forward.11} parent=0 // pred_region
    _
  $region25: #{combined_forward.11} parent=0 // pred_fallthru
    _
  // Predicated region
  $region26: #{combined_forward.11} parent=0 // pred_check
    _
  $region27: #{combined_forward.11} parent=0 // pred_check_branch
    %202 = sbr.rel (0) target = $region29
  $region28: #{combined_forward.11} parent=0 // pred_region
    _
  $region29: #{combined_forward.11} parent=0 // pred_fallthru
    _

// kernel: combined_forward.12
$region0: #{combined_forward.12}
  #allocation0 [shape = 'u32[]', space=smem, size = 0x4, offset = 0x4, fixed_abs, tag = 'smem constant byte address 0x4 - core index']
  #allocation1 [shape = 'u32[144,128]{1,0:T(1,128)}', space=vmem, size = 0x12000, scoped, tag = 'internal scratch']
  %s0 = inlined_call_operand.vmem [shape: f32[48,32], index: 0, kind: input, shape index: {}]
  %s1 = inlined_call_operand.vmem [shape: f32[1,32], index: 1, kind: input, shape index: {}]
  %s2 = inlined_call_operand.vmem [shape: f32[1,32], index: 2, kind: input, shape index: {}]
  %s3 = inlined_call_operand.vmem [shape: f32[32,96], index: 3, kind: input, shape index: {}]
  %s4 = inlined_call_operand.vmem [shape: f32[1,96], index: 4, kind: input, shape index: {}]
  %s5 = inlined_call_operand.vmem [shape: f32[48,96], index: 5, kind: output, shape index: {}]
  %s6 = sld [smem:[#allocation0]]
  $region30: #{combined_forward.12} parent=0
    _
  %s8 = ssub.s32 1, %s6
  %s9 = scalar_select 0, %s8, %s6
  // Predicated region
  $region2: #{combined_forward.12} parent=0 // pred_check
    _
  $region3: #{combined_forward.12} parent=0 // pred_check_branch
    %11 = sbr.rel (0) target = $region5
  $region4: #{combined_forward.12} parent=0 // pred_region
    _
  $region5: #{combined_forward.12} parent=0 // pred_fallthru
    _
  // Predicated region
  $region6: #{combined_forward.12} parent=0 // pred_check
    _
  $region7: #{combined_forward.12} parent=0 // pred_check_branch
    %13 = sbr.rel (0) target = $region9
  $region8: #{combined_forward.12} parent=0 // pred_region
    _
  $region9: #{combined_forward.12} parent=0 // pred_fallthru
    _
  // Predicated region
  $region10: #{combined_forward.12} parent=0 // pred_check
    _
  $region11: #{combined_forward.12} parent=0 // pred_check_branch
    %15 = sbr.rel (0) target = $region13
  $region12: #{combined_forward.12} parent=0 // pred_region
    _
  $region13: #{combined_forward.12} parent=0 // pred_fallthru
    _
  // Predicated region
  $region14: #{combined_forward.12} parent=0 // pred_check
    _
  $region15: #{combined_forward.12} parent=0 // pred_check_branch
    %17 = sbr.rel (0) target = $region17
  $region16: #{combined_forward.12} parent=0 // pred_region
    _
  $region17: #{combined_forward.12} parent=0 // pred_fallthru
    _
  // Predicated region
  $region18: #{combined_forward.12} parent=0 // pred_check
    _
  $region19: #{combined_forward.12} parent=0 // pred_check_branch
    %19 = sbr.rel (0) target = $region21
  $region20: #{combined_forward.12} parent=0 // pred_region
    _
  $region21: #{combined_forward.12} parent=0 // pred_fallthru
    _
  %v20 = vld [vmem:[%s0] sm:$0xff]
  %v21 = vld [vmem:[%s0 + $0x8] sm:$0xff]
  %v22 = vld [vmem:[%s0 + $0x10] sm:$0xff]
  %v23 = vld [vmem:[%s0 + $0x18] sm:$0xff]
  %v24 = vld [vmem:[%s0 + $0x20] sm:$0xff]
  %v25 = vld [vmem:[%s0 + $0x28] sm:$0xff]
  %vm26 = vcmask 261120
  %v27 = vsel %vm26, %v20, 0.0
  %28 = vadd.xlane.f32.xlu0 %v27
  %v29 = vpop.xlane.xlu0 %28
  %v30 = vsel %vm26, %v21, 0.0
  %31 = vadd.xlane.f32.xlu0 %v30
  %v32 = vpop.xlane.xlu0 %31
  %v33 = vsel %vm26, %v22, 0.0
  %34 = vadd.xlane.f32.xlu0 %v33
  %v35 = vpop.xlane.xlu0 %34
  %v36 = vsel %vm26, %v23, 0.0
  %37 = vadd.xlane.f32.xlu0 %v36
  %v38 = vpop.xlane.xlu0 %37
  %v39 = vsel %vm26, %v24, 0.0
  %40 = vadd.xlane.f32.xlu0 %v39
  %v41 = vpop.xlane.xlu0 %40
  %v42 = vsel %vm26, %v25, 0.0
  %43 = vadd.xlane.f32.xlu0 %v42
  %v44 = vpop.xlane.xlu0 %43
  %v45 = vrcp.pop 32.0
  %v46 = vmul.f32 %v29, %v45
  %v47 = vmul.f32 %v32, %v45
  %v48 = vmul.f32 %v35, %v45
  %v49 = vmul.f32 %v38, %v45
  %v50 = vmul.f32 %v41, %v45
  %v51 = vmul.f32 %v44, %v45
  %v52 = vsub.f32 %v20, %v46
  %v53 = vsub.f32 %v21, %v47
  %v54 = vsub.f32 %v22, %v48
  %v55 = vsub.f32 %v23, %v49
  %v56 = vsub.f32 %v24, %v50
  %v57 = vsub.f32 %v25, %v51
  %v58 = vmul.f32 %v52, %v52
  %v59 = vmul.f32 %v53, %v53
  %v60 = vmul.f32 %v54, %v54
  %v61 = vmul.f32 %v55, %v55
  %v62 = vmul.f32 %v56, %v56
  %v63 = vmul.f32 %v57, %v57
  %v64 = vsel %vm26, %v58, 0.0
  %65 = vadd.xlane.f32.xlu0 %v64
  %v66 = vpop.xlane.xlu0 %65
  %v67 = vsel %vm26, %v59, 0.0
  %68 = vadd.xlane.f32.xlu0 %v67
  %v69 = vpop.xlane.xlu0 %68
  %v70 = vsel %vm26, %v60, 0.0
  %71 = vadd.xlane.f32.xlu0 %v70
  %v72 = vpop.xlane.xlu0 %71
  %v73 = vsel %vm26, %v61, 0.0
  %74 = vadd.xlane.f32.xlu0 %v73
  %v75 = vpop.xlane.xlu0 %74
  %v76 = vsel %vm26, %v62, 0.0
  %77 = vadd.xlane.f32.xlu0 %v76
  %v78 = vpop.xlane.xlu0 %77
  %v79 = vsel %vm26, %v63, 0.0
  %80 = vadd.xlane.f32.xlu0 %v79
  %v81 = vpop.xlane.xlu0 %80
  %v82 = vmul.f32 %v66, %v45
  %v83 = vmul.f32 %v69, %v45
  %v84 = vmul.f32 %v72, %v45
  %v85 = vmul.f32 %v75, %v45
  %v86 = vmul.f32 %v78, %v45
  %v87 = vmul.f32 %v81, %v45
  %v88 = vadd.f32 %v82, 1e-05
  %v89 = vadd.f32 %v83, 1e-05
  %v90 = vadd.f32 %v84, 1e-05
  %v91 = vadd.f32 %v85, 1e-05
  %v92 = vadd.f32 %v86, 1e-05
  %v93 = vadd.f32 %v87, 1e-05
  %v94 = vrsqrt.pop %v88
  %v95 = vrsqrt.pop %v89
  %v96 = vrsqrt.pop %v90
  %v97 = vrsqrt.pop %v91
  %v98 = vrsqrt.pop %v92
  %v99 = vrsqrt.pop %v93
  %v100 = vmul.f32 %v52, %v94
  %v101 = vmul.f32 %v53, %v95
  %v102 = vmul.f32 %v54, %v96
  %v103 = vmul.f32 %v55, %v97
  %v104 = vmul.f32 %v56, %v98
  %v105 = vmul.f32 %v57, %v99
  %v106 = vld [vmem:[%s1] sm:$0x1]
  %v108 = vlaneseq
  %v109 = vshrl.u32 %v108, 7
  %v110 = vsub.s32 0, %v109
  %v111 = vrot.slane %v106, %v110
  %v113 = vmul.f32 %v100, %v111
  %v114 = vmul.f32 %v101, %v111
  %v115 = vmul.f32 %v102, %v111
  %v116 = vmul.f32 %v103, %v111
  %v117 = vmul.f32 %v104, %v111
  %v118 = vmul.f32 %v105, %v111
  %v119 = vld [vmem:[%s2] sm:$0x1]
  %v121 = vlaneseq
  %v122 = vshrl.u32 %v121, 7
  %v123 = vsub.s32 0, %v122
  %v124 = vrot.slane %v119, %v123
  %v126 = vadd.f32 %v113, %v124
  %v127 = vadd.f32 %v114, %v124
  %v128 = vadd.f32 %v115, %v124
  %v129 = vadd.f32 %v116, %v124
  %v130 = vadd.f32 %v117, %v124
  %v131 = vadd.f32 %v118, %v124
  %v132 = vld [vmem:[%s3] sm:$0xff]
  %v133 = vld [vmem:[%s3 + $0x8] sm:$0xff]
  %v134 = vld [vmem:[%s3 + $0x10] sm:$0xff]
  %v135 = vld [vmem:[%s3 + $0x18] sm:$0xff]
  %v136 = vld [vmem:[%s4] sm:$0x1]
  %v138 = vlaneseq
  %v139 = vshrl.u32 %v138, 7
  %v140 = vsub.s32 0, %v139
  %v141 = vrot.slane %v136, %v140
  %v144 = vsel %vm26, %v126, 0
  %v147 = vsel %vm26, %v127, 0
  %v150 = vsel %vm26, %v128, 0
  %v153 = vsel %vm26, %v129, 0
  %v156 = vsel %vm26, %v130, 0
  %v159 = vsel %vm26, %v131, 0
  %161 = vmatprep.subr.mxu0 0.0
  %162 = vmatpush1.msra.mxu0 %v132
  %163 = vmatprep.subr.mxu0 0.0
  %164 = vmatpush1.msra.mxu0 %v133
  %165 = vmatprep.subr.mxu0 0.0
  %166 = vmatpush1.msra.mxu0 %v134
  %167 = vmatprep.subr.mxu0 0.0
  %168 = vmatpush1.msra.mxu0 %v135
  %169 = vmatprep.subr.mxu0 0.0
  %170 = vmatpush1.msra.mxu0 0.0
  %171 = vmatprep.subr.mxu0 0.0
  %172 = vmatpush1.msra.mxu0 0.0
  %173 = vmatprep.subr.mxu0 0.0
  %174 = vmatpush1.msra.mxu0 0.0
  %175 = vmatprep.subr.mxu0 0.0
  %176 = vmatpush1.msra.mxu0 0.0
  %177 = vmatprep.subr.mxu0 0.0
  %178 = vmatpush1.msra.mxu0 0.0
  %179 = vmatprep.subr.mxu0 0.0
  %180 = vmatpush1.msra.mxu0 0.0
  %181 = vmatprep.subr.mxu0 0.0
  %182 = vmatpush1.msra.mxu0 0.0
  %183 = vmatprep.subr.mxu0 0.0
  %184 = vmatpush1.msra.mxu0 0.0
  %185 = vmatprep.subr.mxu0 0.0
  %186 = vmatpush1.msra.mxu0 0.0
  %187 = vmatprep.subr.mxu0 0.0
  %188 = vmatpush1.msra.mxu0 0.0
  %189 = vmatprep.subr.mxu0 0.0
  %190 = vmatpush1.msra.mxu0 0.0
  %191 = vmatprep.subr.mxu0 0.0
  %192 = vmatpush1.msra.mxu0 0.0
  %193 = vmatprep.subr.mxu0 0.0
  %194 = vmatpush1.msra.mxu0 0.0
  %195 = vmatprep.subr.mxu0 0.0
  %196 = vmatpush1.msra.mxu0 0.0
  %197 = vmatprep.subr.mxu0 0.0
  %198 = vmatpush1.msra.mxu0 0.0
  %199 = vmatprep.subr.mxu0 0.0
  %200 = vmatpush1.msra.mxu0 0.0
  %201 = vmatprep.subr.mxu0 0.0
  %202 = vmatpush1.msra.mxu0 0.0
  %203 = vmatprep.subr.mxu0 0.0
  %204 = vmatpush1.msra.mxu0 0.0
  %205 = vmatprep.subr.mxu0 0.0
  %206 = vmatpush1.msra.mxu0 0.0
  %207 = vmatprep.subr.mxu0 0.0
  %208 = vmatpush1.msra.mxu0 0.0
  %209 = vmatprep.subr.mxu0 0.0
  %210 = vmatpush1.msra.mxu0 0.0
  %211 = vmatprep.subr.mxu0 0.0
  %212 = vmatpush1.msra.mxu0 0.0
  %213 = vmatprep.subr.mxu0 0.0
  %214 = vmatpush1.msra.mxu0 0.0
  %215 = vmatprep.subr.mxu0 0.0
  %216 = vmatpush1.msra.mxu0 0.0
  %217 = vmatprep.subr.mxu0 0.0
  %218 = vmatpush1.msra.mxu0 0.0
  %219 = vmatprep.subr.mxu0 0.0
  %220 = vmatpush1.msra.mxu0 0.0
  %221 = vmatprep.subr.mxu0 0.0
  %222 = vmatpush1.msra.mxu0 0.0
  %223 = vmatprep.subr.mxu0 0.0
  %224 = vmatpush1.msra.mxu0 0.0
  %225 = vmatprep.mubr.f32.mxu0 0.0
  %226 = vmatmul.mubr.f32.gmra.mrb[0].mxu0 %v144
  %v227 = vpop.f32.mrb[0].mxu0
  %v228 = vadd.f32 %v141, %v227
  %v229 = vpop.f32.mrb[0].mxu0
  %230 = vmatprep.mubr.f32.mxu0 0.0
  %231 = vmatmul.mubr.f32.gmra.mrb[0].mxu0 %v147
  %v232 = vpop.f32.mrb[0].mxu0
  %v233 = vadd.f32 %v141, %v232
  %v234 = vpop.f32.mrb[0].mxu0
  %235 = vmatprep.mubr.f32.mxu0 0.0
  %236 = vmatmul.mubr.f32.gmra.mrb[0].mxu0 %v150
  %v237 = vpop.f32.mrb[0].mxu0
  %v238 = vadd.f32 %v141, %v237
  %v239 = vpop.f32.mrb[0].mxu0
  %240 = vmatprep.mubr.f32.mxu0 0.0
  %241 = vmatmul.mubr.f32.gmra.mrb[0].mxu0 %v153
  %v242 = vpop.f32.mrb[0].mxu0
  %v243 = vadd.f32 %v141, %v242
  %v244 = vpop.f32.mrb[0].mxu0
  %245 = vmatprep.mubr.f32.mxu0 0.0
  %246 = vmatmul.mubr.f32.gmra.mrb[0].mxu0 %v156
  %v247 = vpop.f32.mrb[0].mxu0
  %v248 = vadd.f32 %v141, %v247
  %v249 = vpop.f32.mrb[0].mxu0
  %250 = vmatprep.mubr.f32.mxu0 0.0
  %251 = vmatmul.mubr.f32.gmra.mrb[0].mxu0 %v159
  %v252 = vpop.f32.mrb[0].mxu0
  %v253 = vadd.f32 %v141, %v252
  %v254 = vpop.f32.mrb[0].mxu0
  %255 = vdwg.mxu0
  %vm256 = vcmask 785408
  %257 = vst.msk [vmem:[%s5] sm:$0xff] %vm256, %v228
  %258 = vst.msk [vmem:[%s5 + $0x8] sm:$0xff] %vm256, %v233
  %259 = vst.msk [vmem:[%s5 + $0x10] sm:$0xff] %vm256, %v238
  %260 = vst.msk [vmem:[%s5 + $0x18] sm:$0xff] %vm256, %v243
  %261 = vst.msk [vmem:[%s5 + $0x20] sm:$0xff] %vm256, %v248
  %262 = vst.msk [vmem:[%s5 + $0x28] sm:$0xff] %vm256, %v253
  // Predicated region
  $region22: #{combined_forward.12} parent=0 // pred_check
    _
  $region23: #{combined_forward.12} parent=0 // pred_check_branch
    %264 = sbr.rel (0) target = $region25
  $region24: #{combined_forward.12} parent=0 // pred_region
    _
  $region25: #{combined_forward.12} parent=0 // pred_fallthru
    _
  // Predicated region
  $region26: #{combined_forward.12} parent=0 // pred_check
    _
  $region27: #{combined_forward.12} parent=0 // pred_check_branch
    %266 = sbr.rel (0) target = $region29
  $region28: #{combined_forward.12} parent=0 // pred_region
    _
  $region29: #{combined_forward.12} parent=0 // pred_fallthru
    _

// kernel: combined_forward.14
$region0: #{combined_forward.14}
  #allocation0 [shape = 'u32[]', space=smem, size = 0x4, offset = 0x4, fixed_abs, tag = 'smem constant byte address 0x4 - core index']
  #allocation1 [shape = 'u32[144,128]{1,0:T(1,128)}', space=vmem, size = 0x12000, scoped, tag = 'internal scratch']
  #allocation2 [shape = 'f32[48,32]{1,0:T(8,128)}', space=vmem, size = 0x6000, scoped, tag = 'scratch operand']
  %s0 = inlined_call_operand.vmem [shape: f32[48,32], index: 0, kind: input, shape index: {}]
  %s1 = inlined_call_operand.vmem [shape: f32[32,32], index: 1, kind: input, shape index: {}]
  %s2 = inlined_call_operand.vmem [shape: f32[1,32], index: 2, kind: input, shape index: {}]
  %s3 = inlined_call_operand.vmem [shape: f32[48,32], index: 3, kind: input, shape index: {}]
  %s4 = inlined_call_operand.vmem [shape: f32[48,32], index: 4, kind: output, shape index: {}]
  %s5 = sld [smem:[#allocation0]]
  $region34: #{combined_forward.14} parent=0
    _
  %s7 = ssub.s32 1, %s5
  %s8 = scalar_select 0, %s7, %s5
  // Predicated region
  $region2: #{combined_forward.14} parent=0 // pred_check
    _
  $region3: #{combined_forward.14} parent=0 // pred_check_branch
    %10 = sbr.rel (0) target = $region5
  $region4: #{combined_forward.14} parent=0 // pred_region
    _
  $region5: #{combined_forward.14} parent=0 // pred_fallthru
    _
  // Predicated region
  $region6: #{combined_forward.14} parent=0 // pred_check
    _
  $region7: #{combined_forward.14} parent=0 // pred_check_branch
    %12 = sbr.rel (0) target = $region9
  $region8: #{combined_forward.14} parent=0 // pred_region
    _
  $region9: #{combined_forward.14} parent=0 // pred_fallthru
    _
  // Predicated region
  $region10: #{combined_forward.14} parent=0 // pred_check
    _
  $region11: #{combined_forward.14} parent=0 // pred_check_branch
    %14 = sbr.rel (0) target = $region13
  $region12: #{combined_forward.14} parent=0 // pred_region
    _
  $region13: #{combined_forward.14} parent=0 // pred_fallthru
    _
  // Predicated region
  $region14: #{combined_forward.14} parent=0 // pred_check
    _
  $region15: #{combined_forward.14} parent=0 // pred_check_branch
    %16 = sbr.rel (0) target = $region17
  $region16: #{combined_forward.14} parent=0 // pred_region
    _
  $region17: #{combined_forward.14} parent=0 // pred_fallthru
    _
  %p17 = scmp.eq.s32.totalorder 0, 0
  // Predicated region
  $region18: #{combined_forward.14} parent=0 // pred_check
    %p18 = pneg %p17
  $region19: #{combined_forward.14} parent=0 // pred_check_branch
    %20 = sbr.rel (%p18) target = $region21
  $region20: #{combined_forward.14} parent=0 // pred_region
    %vm21 = vcmask 261120
    %22 = vst.msk [vmem:[#allocation2] sm:$0xff] %vm21, 0.0
    %23 = vst.msk [vmem:[#allocation2 + $0x8] sm:$0xff] %vm21, 0.0
    %24 = vst.msk [vmem:[#allocation2 + $0x10] sm:$0xff] %vm21, 0.0
    %25 = vst.msk [vmem:[#allocation2 + $0x18] sm:$0xff] %vm21, 0.0
    %26 = vst.msk [vmem:[#allocation2 + $0x20] sm:$0xff] %vm21, 0.0
    %27 = vst.msk [vmem:[#allocation2 + $0x28] sm:$0xff] %vm21, 0.0
  $region21: #{combined_forward.14} parent=0 // pred_fallthru
    _
  %v28 = vld [vmem:[#allocation2] sm:$0xff]
  %v29 = vld [vmem:[#allocation2 + $0x8] sm:$0xff]
  %v30 = vld [vmem:[#allocation2 + $0x10] sm:$0xff]
  %v31 = vld [vmem:[#allocation2 + $0x18] sm:$0xff]
  %v32 = vld [vmem:[#allocation2 + $0x20] sm:$0xff]
  %v33 = vld [vmem:[#allocation2 + $0x28] sm:$0xff]
  %v34 = vld [vmem:[%s0] sm:$0xff]
  %v35 = vld [vmem:[%s0 + $0x8] sm:$0xff]
  %v36 = vld [vmem:[%s0 + $0x10] sm:$0xff]
  %v37 = vld [vmem:[%s0 + $0x18] sm:$0xff]
  %v38 = vld [vmem:[%s0 + $0x20] sm:$0xff]
  %v39 = vld [vmem:[%s0 + $0x28] sm:$0xff]
  %v40 = vld [vmem:[%s1] sm:$0xff]
  %v41 = vld [vmem:[%s1 + $0x8] sm:$0xff]
  %v42 = vld [vmem:[%s1 + $0x10] sm:$0xff]
  %v43 = vld [vmem:[%s1 + $0x18] sm:$0xff]
  %vm44 = vcmask 261120
  %v46 = vsel %vm44, %v34, 0
  %v49 = vsel %vm44, %v35, 0
  %v52 = vsel %vm44, %v36, 0
  %v55 = vsel %vm44, %v37, 0
  %v58 = vsel %vm44, %v38, 0
  %v61 = vsel %vm44, %v39, 0
  %63 = vmatprep.subr.mxu0 0.0
  %64 = vmatpush1.msra.mxu0 %v40
  %65 = vmatprep.subr.mxu0 0.0
  %66 = vmatpush1.msra.mxu0 %v41
  %67 = vmatprep.subr.mxu0 0.0
  %68 = vmatpush1.msra.mxu0 %v42
  %69 = vmatprep.subr.mxu0 0.0
  %70 = vmatpush1.msra.mxu0 %v43
  %71 = vmatprep.subr.mxu0 0.0
  %72 = vmatpush1.msra.mxu0 0.0
  %73 = vmatprep.subr.mxu0 0.0
  %74 = vmatpush1.msra.mxu0 0.0
  %75 = vmatprep.subr.mxu0 0.0
  %76 = vmatpush1.msra.mxu0 0.0
  %77 = vmatprep.subr.mxu0 0.0
  %78 = vmatpush1.msra.mxu0 0.0
  %79 = vmatprep.subr.mxu0 0.0
  %80 = vmatpush1.msra.mxu0 0.0
  %81 = vmatprep.subr.mxu0 0.0
  %82 = vmatpush1.msra.mxu0 0.0
  %83 = vmatprep.subr.mxu0 0.0
  %84 = vmatpush1.msra.mxu0 0.0
  %85 = vmatprep.subr.mxu0 0.0
  %86 = vmatpush1.msra.mxu0 0.0
  %87 = vmatprep.subr.mxu0 0.0
  %88 = vmatpush1.msra.mxu0 0.0
  %89 = vmatprep.subr.mxu0 0.0
  %90 = vmatpush1.msra.mxu0 0.0
  %91 = vmatprep.subr.mxu0 0.0
  %92 = vmatpush1.msra.mxu0 0.0
  %93 = vmatprep.subr.mxu0 0.0
  %94 = vmatpush1.msra.mxu0 0.0
  %95 = vmatprep.subr.mxu0 0.0
  %96 = vmatpush1.msra.mxu0 0.0
  %97 = vmatprep.subr.mxu0 0.0
  %98 = vmatpush1.msra.mxu0 0.0
  %99 = vmatprep.subr.mxu0 0.0
  %100 = vmatpush1.msra.mxu0 0.0
  %101 = vmatprep.subr.mxu0 0.0
  %102 = vmatpush1.msra.mxu0 0.0
  %103 = vmatprep.subr.mxu0 0.0
  %104 = vmatpush1.msra.mxu0 0.0
  %105 = vmatprep.subr.mxu0 0.0
  %106 = vmatpush1.msra.mxu0 0.0
  %107 = vmatprep.subr.mxu0 0.0
  %108 = vmatpush1.msra.mxu0 0.0
  %109 = vmatprep.subr.mxu0 0.0
  %110 = vmatpush1.msra.mxu0 0.0
  %111 = vmatprep.subr.mxu0 0.0
  %112 = vmatpush1.msra.mxu0 0.0
  %113 = vmatprep.subr.mxu0 0.0
  %114 = vmatpush1.msra.mxu0 0.0
  %115 = vmatprep.subr.mxu0 0.0
  %116 = vmatpush1.msra.mxu0 0.0
  %117 = vmatprep.subr.mxu0 0.0
  %118 = vmatpush1.msra.mxu0 0.0
  %119 = vmatprep.subr.mxu0 0.0
  %120 = vmatpush1.msra.mxu0 0.0
  %121 = vmatprep.subr.mxu0 0.0
  %122 = vmatpush1.msra.mxu0 0.0
  %123 = vmatprep.subr.mxu0 0.0
  %124 = vmatpush1.msra.mxu0 0.0
  %125 = vmatprep.subr.mxu0 0.0
  %126 = vmatpush1.msra.mxu0 0.0
  %127 = vmatprep.mubr.f32.mxu0 0.0
  %128 = vmatmul.mubr.f32.gmra.mrb[0].mxu0 %v46
  %v129 = vpop.f32.mrb[0].mxu0
  %v130 = vadd.f32 0.0, %v129
  %v131 = vpop.f32.mrb[0].mxu0
  %132 = vmatprep.mubr.f32.mxu0 0.0
  %133 = vmatmul.mubr.f32.gmra.mrb[0].mxu0 %v49
  %v134 = vpop.f32.mrb[0].mxu0
  %v135 = vadd.f32 0.0, %v134
  %v136 = vpop.f32.mrb[0].mxu0
  %137 = vmatprep.mubr.f32.mxu0 0.0
  %138 = vmatmul.mubr.f32.gmra.mrb[0].mxu0 %v52
  %v139 = vpop.f32.mrb[0].mxu0
  %v140 = vadd.f32 0.0, %v139
  %v141 = vpop.f32.mrb[0].mxu0
  %142 = vmatprep.mubr.f32.mxu0 0.0
  %143 = vmatmul.mubr.f32.gmra.mrb[0].mxu0 %v55
  %v144 = vpop.f32.mrb[0].mxu0
  %v145 = vadd.f32 0.0, %v144
  %v146 = vpop.f32.mrb[0].mxu0
  %147 = vmatprep.mubr.f32.mxu0 0.0
  %148 = vmatmul.mubr.f32.gmra.mrb[0].mxu0 %v58
  %v149 = vpop.f32.mrb[0].mxu0
  %v150 = vadd.f32 0.0, %v149
  %v151 = vpop.f32.mrb[0].mxu0
  %152 = vmatprep.mubr.f32.mxu0 0.0
  %153 = vmatmul.mubr.f32.gmra.mrb[0].mxu0 %v61
  %v154 = vpop.f32.mrb[0].mxu0
  %v155 = vadd.f32 0.0, %v154
  %v156 = vpop.f32.mrb[0].mxu0
  %157 = vdwg.mxu0
  %v158 = vadd.f32 %v28, %v130
  %v159 = vadd.f32 %v29, %v135
  %v160 = vadd.f32 %v30, %v140
  %v161 = vadd.f32 %v31, %v145
  %v162 = vadd.f32 %v32, %v150
  %v163 = vadd.f32 %v33, %v155
  %164 = vst.msk [vmem:[#allocation2] sm:$0xff] %vm44, %v158
  %165 = vst.msk [vmem:[#allocation2 + $0x8] sm:$0xff] %vm44, %v159
  %166 = vst.msk [vmem:[#allocation2 + $0x10] sm:$0xff] %vm44, %v160
  %167 = vst.msk [vmem:[#allocation2 + $0x18] sm:$0xff] %vm44, %v161
  %168 = vst.msk [vmem:[#allocation2 + $0x20] sm:$0xff] %vm44, %v162
  %169 = vst.msk [vmem:[#allocation2 + $0x28] sm:$0xff] %vm44, %v163
  // Predicated region
  $region22: #{combined_forward.14} parent=0 // pred_check
    %p170 = pneg %p17
  $region23: #{combined_forward.14} parent=0 // pred_check_branch
    %172 = sbr.rel (%p170) target = $region25
  $region24: #{combined_forward.14} parent=0 // pred_region
    %v173 = vld [vmem:[#allocation2] sm:$0xff]
    %v174 = vld [vmem:[#allocation2 + $0x8] sm:$0xff]
    %v175 = vld [vmem:[#allocation2 + $0x10] sm:$0xff]
    %v176 = vld [vmem:[#allocation2 + $0x18] sm:$0xff]
    %v177 = vld [vmem:[#allocation2 + $0x20] sm:$0xff]
    %v178 = vld [vmem:[#allocation2 + $0x28] sm:$0xff]
    %v179 = vld [vmem:[%s2] sm:$0x1]
    %v181 = vlaneseq
    %v182 = vshrl.u32 %v181, 7
    %v183 = vsub.s32 0, %v182
    %v184 = vrot.slane %v179, %v183
    %v186 = vadd.f32 %v173, %v184
    %v187 = vadd.f32 %v174, %v184
    %v188 = vadd.f32 %v175, %v184
    %v189 = vadd.f32 %v176, %v184
    %v190 = vadd.f32 %v177, %v184
    %v191 = vadd.f32 %v178, %v184
    %v192 = vld [vmem:[%s3] sm:$0xff]
    %v193 = vld [vmem:[%s3 + $0x8] sm:$0xff]
    %v194 = vld [vmem:[%s3 + $0x10] sm:$0xff]
    %v195 = vld [vmem:[%s3 + $0x18] sm:$0xff]
    %v196 = vld [vmem:[%s3 + $0x20] sm:$0xff]
    %v197 = vld [vmem:[%s3 + $0x28] sm:$0xff]
    %v198 = vadd.f32 %v186, %v192
    %v199 = vadd.f32 %v187, %v193
    %v200 = vadd.f32 %v188, %v194
    %v201 = vadd.f32 %v189, %v195
    %v202 = vadd.f32 %v190, %v196
    %v203 = vadd.f32 %v191, %v197
    %204 = vst.msk [vmem:[%s4] sm:$0xff] %vm44, %v198
    %205 = vst.msk [vmem:[%s4 + $0x8] sm:$0xff] %vm44, %v199
    %206 = vst.msk [vmem:[%s4 + $0x10] sm:$0xff] %vm44, %v200
    %207 = vst.msk [vmem:[%s4 + $0x18] sm:$0xff] %vm44, %v201
    %208 = vst.msk [vmem:[%s4 + $0x20] sm:$0xff] %vm44, %v202
    %209 = vst.msk [vmem:[%s4 + $0x28] sm:$0xff] %vm44, %v203
  $region25: #{combined_forward.14} parent=0 // pred_fallthru
    _
  // Predicated region
  $region26: #{combined_forward.14} parent=0 // pred_check
    _
  $region27: #{combined_forward.14} parent=0 // pred_check_branch
    %211 = sbr.rel (0) target = $region29
  $region28: #{combined_forward.14} parent=0 // pred_region
    _
  $region29: #{combined_forward.14} parent=0 // pred_fallthru
    _
  // Predicated region
  $region30: #{combined_forward.14} parent=0 // pred_check
    _
  $region31: #{combined_forward.14} parent=0 // pred_check_branch
    %213 = sbr.rel (0) target = $region33
  $region32: #{combined_forward.14} parent=0 // pred_region
    _
  $region33: #{combined_forward.14} parent=0 // pred_fallthru
    _

// kernel: combined_forward.13
$region0: #{combined_forward.13}
  #allocation0 [shape = 'u32[]', space=smem, size = 0x4, offset = 0x4, fixed_abs, tag = 'smem constant byte address 0x4 - core index']
  #allocation1 [shape = 'u32[144,128]{1,0:T(1,128)}', space=vmem, size = 0x12000, scoped, tag = 'internal scratch']
  %s0 = inlined_call_operand.vmem [shape: f32[48,96], index: 0, kind: input, shape index: {}]
  %s1 = inlined_call_operand.vmem [shape: f32[48,32], index: 1, kind: output, shape index: {}]
  %s2 = sld [smem:[#allocation0]]
  $region37: #{combined_forward.13} parent=0
    _
  %s4 = ssub.s32 1, %s2
  %s5 = scalar_select 0, %s4, %s2
  loop: start=0, step=1, limit=4
  $region2: #{combined_forward.13} parent=0 // loop_pre_header
    _
  $region3: #{combined_forward.13} parent=0 // loop_header
    %s7 = sphi 0, %s11
    %p8 = scmp.ge.s32.totalorder %s7, 4
    %s17 = sphi 0, %s19
    %s20 = sphi 0, %s17
    %s21 = sphi 0, %s20
    %s37 = sphi 0, %s21
    %s43 = sphi 0, %s45
    %s46 = sphi 0, %s43
    %s47 = sphi 0, %s46
    %s63 = sphi 0, %s47
  $region4: #{combined_forward.13} parent=0 // loop_header_branch
    %10 = sbr.rel (%p8) target = $region8
  $region5: #{combined_forward.13} parent=0 // loop_body
    %s12 = ssub.s32 %s7, 1
    %s13 = ssub.s32 %s7, 2
    %s14 = sadd.s32 %s7, 1
    %s15 = ssub.s32 %s7, %s14
    %p16 = scmp.eq.s32.totalorder %s15, 0
    %s18 = sadd.s32 %s17, 1
    %s19 = scalar_select %p16, %s17, %s18
    %p22 = pneg %p16
    %p23 = scmp.eq.s32.totalorder %s7, 1
    %p24 = por %p22, %p23
    %p25 = scmp.ne.s32.totalorder %s17, %s20
    %p26 = scmp.eq.s32.totalorder %s7, 0
    %p27 = por %p25, %p26
    %p28 = scmp.ne.s32.totalorder %s17, %s20
    %p29 = scmp.eq.s32.totalorder %s12, 1
    %p30 = por %p28, %p29
    %p31 = scmp.ne.s32.totalorder %s20, %s21
    %p32 = scmp.eq.s32.totalorder %s12, 0
    %p33 = por %p31, %p32
    %p34 = scmp.ne.s32.totalorder %s20, %s21
    %p35 = scmp.eq.s32.totalorder %s13, 1
    %p36 = por %p34, %p35
    %p38 = scmp.ne.s32.totalorder %s21, %s37
    %p39 = scmp.eq.s32.totalorder %s13, 0
    %p40 = por %p38, %p39
    %s41 = ssub.s32 %s7, %s14
    %p42 = scmp.eq.s32.totalorder %s41, 0
    %s44 = sadd.s32 %s43, 1
    %s45 = scalar_select %p42, %s43, %s44
    %p48 = pneg %p42
    %p49 = scmp.eq.s32.totalorder %s7, 1
    %p50 = por %p48, %p49
    %p51 = scmp.ne.s32.totalorder %s43, %s46
    %p52 = scmp.eq.s32.totalorder %s7, 0
    %p53 = por %p51, %p52
    %p54 = scmp.ne.s32.totalorder %s43, %s46
    %p55 = scmp.eq.s32.totalorder %s12, 1
    %p56 = por %p54, %p55
    %p57 = scmp.ne.s32.totalorder %s46, %s47
    %p58 = scmp.eq.s32.totalorder %s12, 0
    %p59 = por %p57, %p58
    %p60 = scmp.ne.s32.totalorder %s46, %s47
    %p61 = scmp.eq.s32.totalorder %s13, 1
    %p62 = por %p60, %p61
    %p64 = scmp.ne.s32.totalorder %s47, %s63
    %p65 = scmp.eq.s32.totalorder %s13, 0
    %p66 = por %p64, %p65
    %p67 = scmp.le.s32.totalorder 1, %s7
    %p68 = scmp.lt.s32.totalorder %s7, 3
    %p69 = pnand %p67, %p68
    %p70 = pneg %p69
    // Predicated region
    $region9: #{combined_forward.13} parent=5 // pred_check
      _
    $region10: #{combined_forward.13} parent=5 // pred_check_branch
      %72 = sbr.rel (%p69) target = $region12
    $region11: #{combined_forward.13} parent=5 // pred_region
      %s73 = ssub.s32 %s7, 1
    $region12: #{combined_forward.13} parent=5 // pred_fallthru
      _
    %p74 = scmp.lt.s32.totalorder %s7, 2
    // Predicated region
    $region13: #{combined_forward.13} parent=5 // pred_check
      %p75 = pneg %p74
    $region14: #{combined_forward.13} parent=5 // pred_check_branch
      %77 = sbr.rel (%p75) target = $region16
    $region15: #{combined_forward.13} parent=5 // pred_region
      // Predicated region
      $region17: #{combined_forward.13} parent=15 // pred_check
        %p78 = pneg %p27
      $region18: #{combined_forward.13} parent=15 // pred_check_branch
        %80 = sbr.rel (%p78) target = $region20
      $region19: #{combined_forward.13} parent=15 // pred_region
        %s81 = smul.u32 3, %s7
        %p82 = scmp.lt.s32.totalorder %s81, 5
        %s83 = scalar_select %p82, %s81, 5
        %s84 = smul.addr %s83, 8
        %s85 = scalar_lea.vmem %s0, %s84
        %s86 = smul.u32 3, %s7
      $region20: #{combined_forward.13} parent=15 // pred_fallthru
        _
    $region16: #{combined_forward.13} parent=5 // pred_fallthru
      _
    %p87 = scmp.le.s32.totalorder 1, %s7
    %p88 = scmp.lt.s32.totalorder %s7, 3
    %p89 = pnand %p87, %p88
    %p90 = pneg %p89
    // Predicated region
    $region21: #{combined_forward.13} parent=5 // pred_check
      _
    $region22: #{combined_forward.13} parent=5 // pred_check_branch
      %92 = sbr.rel (%p89) target = $region24
    $region23: #{combined_forward.13} parent=5 // pred_region
      %s93 = ssub.s32 %s7, 1
      %s94 = smul.u32 3, %s12
      %p95 = scmp.lt.s32.totalorder %s94, 5
      %s96 = scalar_select %p95, %s94, 5
      %s97 = smul.addr %s96, 8
      %s98 = scalar_lea.vmem %s0, %s97
      %p99 = pneg %p33
      %p100 = pneg %p30
      %p101 = pneg %p59
      %p102 = pneg %p56
      %s103 = smul.u32 3, %s12
      %p104 = scmp.lt.s32.totalorder %s103, 5
      %s105 = scalar_select %p104, %s103, 5
      %s106 = smul.addr %s105, 8
      %s107 = scalar_lea.vmem %s1, %s106
      %s108 = smul.u32 3, %s12
      %p109 = scmp.lt.s32.totalorder %s108, 5
      %s110 = scalar_select %p109, %s108, 5
      %s111 = smul.addr %s110, 8
      %s112 = scalar_lea.vmem %s0, %s111
      %s113 = smul.u32 3, %s12
      %s114 = smul.u32 3, %s12
      %p115 = scmp.lt.s32.totalorder %s114, 5
      %s116 = scalar_select %p115, %s114, 5
      %s117 = smul.addr %s116, 8
      %s118 = scalar_lea.vmem %s1, %s117
      %s119 = smul.u32 3, %s12
      %v120 = vld [vmem:[%s112] sm:$0xff]
      %v121 = vld [vmem:[%s112 + $0x8] sm:$0xff]
      %v122 = vld [vmem:[%s112 + $0x10] sm:$0xff]
      %v123 = vmul.f32 %v120, 0.25
      %v124 = vmul.f32 %v121, 0.25
      %v125 = vmul.f32 %v122, 0.25
      %129 = vrot.lane.b32.xlu0 %v120, 96
      %v130 = vpop.permute.xlu0 %129
      %131 = vrot.lane.b32.xlu0 %v121, 96
      %v132 = vpop.permute.xlu0 %131
      %133 = vrot.lane.b32.xlu0 %v122, 96
      %v134 = vpop.permute.xlu0 %133
      %vm135 = vcmask 130048
      %v137 = vsel %vm135, %v123, 0
      %v140 = vsel %vm135, %v124, 0
      %v143 = vsel %vm135, %v125, 0
      %v145 = vsel %vm135, %v130, 0
      %v147 = vsel %vm135, %v132, 0
      %v149 = vsel %vm135, %v134, 0
      %151 = vmatprep.subr.mxu0 0.0
      %152 = vmatpush1.xpose.msra.mxu0 %v145
      %153 = vmatprep.subr.mxu0 0.0
      %154 = vmatpush1.xpose.msra.mxu0 %v147
      %155 = vmatprep.subr.mxu0 0.0
      %156 = vmatpush1.xpose.msra.mxu0 %v149
      %157 = vmatprep.subr.mxu0 0.0
      %158 = vmatpush1.xpose.msra.mxu0 0.0
      %159 = vmatprep.subr.mxu0 0.0
      %160 = vmatpush1.xpose.msra.mxu0 0.0
      %161 = vmatprep.subr.mxu0 0.0
      %162 = vmatpush1.xpose.msra.mxu0 0.0
      %163 = vmatprep.subr.mxu0 0.0
      %164 = vmatpush1.xpose.msra.mxu0 0.0
      %165 = vmatprep.subr.mxu0 0.0
      %166 = vmatpush1.xpose.msra.mxu0 0.0
      %167 = vmatprep.subr.mxu0 0.0
      %168 = vmatpush1.xpose.msra.mxu0 0.0
      %169 = vmatprep.subr.mxu0 0.0
      %170 = vmatpush1.xpose.msra.mxu0 0.0
      %171 = vmatprep.subr.mxu0 0.0
      %172 = vmatpush1.xpose.msra.mxu0 0.0
      %173 = vmatprep.subr.mxu0 0.0
      %174 = vmatpush1.xpose.msra.mxu0 0.0
      %175 = vmatprep.subr.mxu0 0.0
      %176 = vmatpush1.xpose.msra.mxu0 0.0
      %177 = vmatprep.subr.mxu0 0.0
      %178 = vmatpush1.xpose.msra.mxu0 0.0
      %179 = vmatprep.subr.mxu0 0.0
      %180 = vmatpush1.xpose.msra.mxu0 0.0
      %181 = vmatprep.subr.mxu0 0.0
      %182 = vmatpush1.xpose.msra.mxu0 0.0
      %183 = vmatprep.subr.mxu0 0.0
      %184 = vmatpush1.xpose.msra.mxu0 0.0
      %185 = vmatprep.subr.mxu0 0.0
      %186 = vmatpush1.xpose.msra.mxu0 0.0
      %187 = vmatprep.subr.mxu0 0.0
      %188 = vmatpush1.xpose.msra.mxu0 0.0
      %189 = vmatprep.subr.mxu0 0.0
      %190 = vmatpush1.xpose.msra.mxu0 0.0
      %191 = vmatprep.subr.mxu0 0.0
      %192 = vmatpush1.xpose.msra.mxu0 0.0
      %193 = vmatprep.subr.mxu0 0.0
      %194 = vmatpush1.xpose.msra.mxu0 0.0
      %195 = vmatprep.subr.mxu0 0.0
      %196 = vmatpush1.xpose.msra.mxu0 0.0
      %197 = vmatprep.subr.mxu0 0.0
      %198 = vmatpush1.xpose.msra.mxu0 0.0
      %199 = vmatprep.subr.mxu0 0.0
      %200 = vmatpush1.xpose.msra.mxu0 0.0
      %201 = vmatprep.subr.mxu0 0.0
      %202 = vmatpush1.xpose.msra.mxu0 0.0
      %203 = vmatprep.subr.mxu0 0.0
      %204 = vmatpush1.xpose.msra.mxu0 0.0
      %205 = vmatprep.subr.mxu0 0.0
      %206 = vmatpush1.xpose.msra.mxu0 0.0
      %207 = vmatprep.subr.mxu0 0.0
      %208 = vmatpush1.xpose.msra.mxu0 0.0
      %209 = vmatprep.subr.mxu0 0.0
      %210 = vmatpush1.xpose.msra.mxu0 0.0
      %211 = vmatprep.subr.mxu0 0.0
      %212 = vmatpush1.xpose.msra.mxu0 0.0
      %213 = vmatprep.subr.mxu0 0.0
      %214 = vmatpush1.xpose.msra.mxu0 0.0
      %215 = vmatprep.mubr.f32.mxu0 0.0
      %216 = vmatmul.mubr.f32.gmra.mrb[0].mxu0 %v137
      %v217 = vpop.f32.mrb[0].mxu0
      %v218 = vadd.f32 0.0, %v217
      %v219 = vpop.f32.mrb[0].mxu0
      %220 = vmatprep.mubr.f32.mxu0 0.0
      %221 = vmatmul.mubr.f32.gmra.mrb[0].mxu0 %v140
      %v222 = vpop.f32.mrb[0].mxu0
      %v223 = vadd.f32 0.0, %v222
      %v224 = vpop.f32.mrb[0].mxu0
      %225 = vmatprep.mubr.f32.mxu0 0.0
      %226 = vmatmul.mubr.f32.gmra.mrb[0].mxu0 %v143
      %v227 = vpop.f32.mrb[0].mxu0
      %v228 = vadd.f32 0.0, %v227
      %v229 = vpop.f32.mrb[0].mxu0
      %230 = vdwg.mxu0
      %vm231 = vcmask 195584
      %v232 = vsel %vm231, %v218, -inf
      %233 = vmax.xlane.f32.xlu0 %v232
      %v234 = vpop.xlane.xlu0 %233
      %v235 = vsel %vm231, %v223, -inf
      %236 = vmax.xlane.f32.xlu0 %v235
      %v237 = vpop.xlane.xlu0 %236
      %v238 = vsel %vm231, %v228, -inf
      %239 = vmax.xlane.f32.xlu0 %v238
      %v240 = vpop.xlane.xlu0 %239
      %v241 = vsub.f32 %v218, %v234
      %v242 = vsub.f32 %v223, %v237
      %v243 = vsub.f32 %v228, %v240
      %v244 = vmul.f32 %v241, 1.442695
      %v245 = vpow.pop %v244
      %v246 = vmul.f32 %v242, 1.442695
      %v247 = vpow.pop %v246
      %v248 = vmul.f32 %v243, 1.442695
      %v249 = vpow.pop %v248
      %v250 = vsel %vm231, %v245, 0.0
      %251 = vadd.xlane.f32.xlu0 %v250
      %v252 = vpop.xlane.xlu0 %251
      %v253 = vsel %vm231, %v247, 0.0
      %254 = vadd.xlane.f32.xlu0 %v253
      %v255 = vpop.xlane.xlu0 %254
      %v256 = vsel %vm231, %v249, 0.0
      %257 = vadd.xlane.f32.xlu0 %v256
      %v258 = vpop.xlane.xlu0 %257
      %v259 = vrcp.pop %v252
      %v260 = vrcp.pop %v255
      %v261 = vrcp.pop %v258
      %v262 = vmul.f32 %v245, %v259
      %v263 = vmul.f32 %v247, %v260
      %v264 = vmul.f32 %v249, %v261
      %265 = vrot.lane.b32.xlu0 %v120, 64
      %v266 = vpop.permute.xlu0 %265
      %267 = vrot.lane.b32.xlu0 %v121, 64
      %v268 = vpop.permute.xlu0 %267
      %269 = vrot.lane.b32.xlu0 %v122, 64
      %v270 = vpop.permute.xlu0 %269
      %v275 = vsel %vm231, %v262, 0
      %v278 = vsel %vm231, %v263, 0
      %v281 = vsel %vm231, %v264, 0
      %283 = vmatprep.subr.mxu0 0.0
      %284 = vmatpush1.msra.mxu0 %v266
      %285 = vmatprep.subr.mxu0 0.0
      %286 = vmatpush1.msra.mxu0 %v268
      %287 = vmatprep.subr.mxu0 0.0
      %288 = vmatpush1.msra.mxu0 %v270
      %289 = vmatprep.subr.mxu0 0.0
      %290 = vmatpush1.msra.mxu0 0.0
      %291 = vmatprep.subr.mxu0 0.0
      %292 = vmatpush1.msra.mxu0 0.0
      %293 = vmatprep.subr.mxu0 0.0
      %294 = vmatpush1.msra.mxu0 0.0
      %295 = vmatprep.subr.mxu0 0.0
      %296 = vmatpush1.msra.mxu0 0.0
      %297 = vmatprep.subr.mxu0 0.0
      %298 = vmatpush1.msra.mxu0 0.0
      %299 = vmatprep.subr.mxu0 0.0
      %300 = vmatpush1.msra.mxu0 0.0
      %301 = vmatprep.subr.mxu0 0.0
      %302 = vmatpush1.msra.mxu0 0.0
      %303 = vmatprep.subr.mxu0 0.0
      %304 = vmatpush1.msra.mxu0 0.0
      %305 = vmatprep.subr.mxu0 0.0
      %306 = vmatpush1.msra.mxu0 0.0
      %307 = vmatprep.subr.mxu0 0.0
      %308 = vmatpush1.msra.mxu0 0.0
      %309 = vmatprep.subr.mxu0 0.0
      %310 = vmatpush1.msra.mxu0 0.0
      %311 = vmatprep.subr.mxu0 0.0
      %312 = vmatpush1.msra.mxu0 0.0
      %313 = vmatprep.subr.mxu0 0.0
      %314 = vmatpush1.msra.mxu0 0.0
      %315 = vmatprep.subr.mxu0 0.0
      %316 = vmatpush1.msra.mxu0 0.0
      %317 = vmatprep.subr.mxu0 0.0
      %318 = vmatpush1.msra.mxu0 0.0
      %319 = vmatprep.subr.mxu0 0.0
      %320 = vmatpush1.msra.mxu0 0.0
      %321 = vmatprep.subr.mxu0 0.0
      %322 = vmatpush1.msra.mxu0 0.0
      %323 = vmatprep.subr.mxu0 0.0
      %324 = vmatpush1.msra.mxu0 0.0
      %325 = vmatprep.subr.mxu0 0.0
      %326 = vmatpush1.msra.mxu0 0.0
      %327 = vmatprep.subr.mxu0 0.0
      %328 = vmatpush1.msra.mxu0 0.0
      %329 = vmatprep.subr.mxu0 0.0
      %330 = vmatpush1.msra.mxu0 0.0
      %331 = vmatprep.subr.mxu0 0.0
      %332 = vmatpush1.msra.mxu0 0.0
      %333 = vmatprep.subr.mxu0 0.0
      %334 = vmatpush1.msra.mxu0 0.0
      %335 = vmatprep.subr.mxu0 0.0
      %336 = vmatpush1.msra.mxu0 0.0
      %337 = vmatprep.subr.mxu0 0.0
      %338 = vmatpush1.msra.mxu0 0.0
      %339 = vmatprep.subr.mxu0 0.0
      %340 = vmatpush1.msra.mxu0 0.0
      %341 = vmatprep.subr.mxu0 0.0
      %342 = vmatpush1.msra.mxu0 0.0
      %343 = vmatprep.subr.mxu0 0.0
      %344 = vmatpush1.msra.mxu0 0.0
      %345 = vmatprep.subr.mxu0 0.0
      %346 = vmatpush1.msra.mxu0 0.0
      %347 = vmatprep.mubr.f32.mxu0 0.0
      %348 = vmatmul.mubr.f32.gmra.mrb[0].mxu0 %v275
      %v349 = vpop.f32.mrb[0].mxu0
      %v350 = vadd.f32 0.0, %v349
      %v351 = vpop.f32.mrb[0].mxu0
      %352 = vmatprep.mubr.f32.mxu0 0.0
      %353 = vmatmul.mubr.f32.gmra.mrb[0].mxu0 %v278
      %v354 = vpop.f32.mrb[0].mxu0
      %v355 = vadd.f32 0.0, %v354
      %v356 = vpop.f32.mrb[0].mxu0
      %357 = vmatprep.mubr.f32.mxu0 0.0
      %358 = vmatmul.mubr.f32.gmra.mrb[0].mxu0 %v281
      %v359 = vpop.f32.mrb[0].mxu0
      %v360 = vadd.f32 0.0, %v359
      %v361 = vpop.f32.mrb[0].mxu0
      %362 = vdwg.mxu0
      %363 = vrot.lane.b32.xlu0 %v123, 112
      %v364 = vpop.permute.xlu0 %363
      %365 = vrot.lane.b32.xlu0 %v124, 112
      %v366 = vpop.permute.xlu0 %365
      %367 = vrot.lane.b32.xlu0 %v125, 112
      %v368 = vpop.permute.xlu0 %367
      %369 = vrot.lane.b32.xlu0 %v120, 80
      %v370 = vpop.permute.xlu0 %369
      %371 = vrot.lane.b32.xlu0 %v121, 80
      %v372 = vpop.permute.xlu0 %371
      %373 = vrot.lane.b32.xlu0 %v122, 80
      %v374 = vpop.permute.xlu0 %373
      %v375 = vsel %vm135, %v364, 0
      %v377 = vsel %vm135, %v366, 0
      %v379 = vsel %vm135, %v368, 0
      %v381 = vsel %vm135, %v370, 0
      %v383 = vsel %vm135, %v372, 0
      %v385 = vsel %vm135, %v374, 0
      %387 = vmatprep.subr.mxu0 0.0
      %388 = vmatpush1.xpose.msra.mxu0 %v381
      %389 = vmatprep.subr.mxu0 0.0
      %390 = vmatpush1.xpose.msra.mxu0 %v383
      %391 = vmatprep.subr.mxu0 0.0
      %392 = vmatpush1.xpose.msra.mxu0 %v385
      %393 = vmatprep.subr.mxu0 0.0
      %394 = vmatpush1.xpose.msra.mxu0 0.0
      %395 = vmatprep.subr.mxu0 0.0
      %396 = vmatpush1.xpose.msra.mxu0 0.0
      %397 = vmatprep.subr.mxu0 0.0
      %398 = vmatpush1.xpose.msra.mxu0 0.0
      %399 = vmatprep.subr.mxu0 0.0
      %400 = vmatpush1.xpose.msra.mxu0 0.0
      %401 = vmatprep.subr.mxu0 0.0
      %402 = vmatpush1.xpose.msra.mxu0 0.0
      %403 = vmatprep.subr.mxu0 0.0
      %404 = vmatpush1.xpose.msra.mxu0 0.0
      %405 = vmatprep.subr.mxu0 0.0
      %406 = vmatpush1.xpose.msra.mxu0 0.0
      %407 = vmatprep.subr.mxu0 0.0
      %408 = vmatpush1.xpose.msra.mxu0 0.0
      %409 = vmatprep.subr.mxu0 0.0
      %410 = vmatpush1.xpose.msra.mxu0 0.0
      %411 = vmatprep.subr.mxu0 0.0
      %412 = vmatpush1.xpose.msra.mxu0 0.0
      %413 = vmatprep.subr.mxu0 0.0
      %414 = vmatpush1.xpose.msra.mxu0 0.0
      %415 = vmatprep.subr.mxu0 0.0
      %416 = vmatpush1.xpose.msra.mxu0 0.0
      %417 = vmatprep.subr.mxu0 0.0
      %418 = vmatpush1.xpose.msra.mxu0 0.0
      %419 = vmatprep.subr.mxu0 0.0
      %420 = vmatpush1.xpose.msra.mxu0 0.0
      %421 = vmatprep.subr.mxu0 0.0
      %422 = vmatpush1.xpose.msra.mxu0 0.0
      %423 = vmatprep.subr.mxu0 0.0
      %424 = vmatpush1.xpose.msra.mxu0 0.0
      %425 = vmatprep.subr.mxu0 0.0
      %426 = vmatpush1.xpose.msra.mxu0 0.0
      %427 = vmatprep.subr.mxu0 0.0
      %428 = vmatpush1.xpose.msra.mxu0 0.0
      %429 = vmatprep.subr.mxu0 0.0
      %430 = vmatpush1.xpose.msra.mxu0 0.0
      %431 = vmatprep.subr.mxu0 0.0
      %432 = vmatpush1.xpose.msra.mxu0 0.0
      %433 = vmatprep.subr.mxu0 0.0
      %434 = vmatpush1.xpose.msra.mxu0 0.0
      %435 = vmatprep.subr.mxu0 0.0
      %436 = vmatpush1.xpose.msra.mxu0 0.0
      %437 = vmatprep.subr.mxu0 0.0
      %438 = vmatpush1.xpose.msra.mxu0 0.0
      %439 = vmatprep.subr.mxu0 0.0
      %440 = vmatpush1.xpose.msra.mxu0 0.0
      %441 = vmatprep.subr.mxu0 0.0
      %442 = vmatpush1.xpose.msra.mxu0 0.0
      %443 = vmatprep.subr.mxu0 0.0
      %444 = vmatpush1.xpose.msra.mxu0 0.0
      %445 = vmatprep.subr.mxu0 0.0
      %446 = vmatpush1.xpose.msra.mxu0 0.0
      %447 = vmatprep.subr.mxu0 0.0
      %448 = vmatpush1.xpose.msra.mxu0 0.0
      %449 = vmatprep.subr.mxu0 0.0
      %450 = vmatpush1.xpose.msra.mxu0 0.0
      %451 = vmatprep.mubr.f32.mxu0 0.0
      %452 = vmatmul.mubr.f32.gmra.mrb[0].mxu0 %v375
      %v453 = vpop.f32.mrb[0].mxu0
      %v454 = vadd.f32 0.0, %v453
      %v455 = vpop.f32.mrb[0].mxu0
      %456 = vmatprep.mubr.f32.mxu0 0.0
      %457 = vmatmul.mubr.f32.gmra.mrb[0].mxu0 %v377
      %v458 = vpop.f32.mrb[0].mxu0
      %v459 = vadd.f32 0.0, %v458
      %v460 = vpop.f32.mrb[0].mxu0
      %461 = vmatprep.mubr.f32.mxu0 0.0
      %462 = vmatmul.mubr.f32.gmra.mrb[0].mxu0 %v379
      %v463 = vpop.f32.mrb[0].mxu0
      %v464 = vadd.f32 0.0, %v463
      %v465 = vpop.f32.mrb[0].mxu0
      %466 = vdwg.mxu0
      %v467 = vsel %vm231, %v454, -inf
      %468 = vmax.xlane.f32.xlu0 %v467
      %v469 = vpop.xlane.xlu0 %468
      %v470 = vsel %vm231, %v459, -inf
      %471 = vmax.xlane.f32.xlu0 %v470
      %v472 = vpop.xlane.xlu0 %471
      %v473 = vsel %vm231, %v464, -inf
      %474 = vmax.xlane.f32.xlu0 %v473
      %v475 = vpop.xlane.xlu0 %474
      %v476 = vsub.f32 %v454, %v469
      %v477 = vsub.f32 %v459, %v472
      %v478 = vsub.f32 %v464, %v475
      %v479 = vmul.f32 %v476, 1.442695
      %v480 = vpow.pop %v479
      %v481 = vmul.f32 %v477, 1.442695
      %v482 = vpow.pop %v481
      %v483 = vmul.f32 %v478, 1.442695
      %v484 = vpow.pop %v483
      %v485 = vsel %vm231, %v480, 0.0
      %486 = vadd.xlane.f32.xlu0 %v485
      %v487 = vpop.xlane.xlu0 %486
      %v488 = vsel %vm231, %v482, 0.0
      %489 = vadd.xlane.f32.xlu0 %v488
      %v490 = vpop.xlane.xlu0 %489
      %v491 = vsel %vm231, %v484, 0.0
      %492 = vadd.xlane.f32.xlu0 %v491
      %v493 = vpop.xlane.xlu0 %492
      %v494 = vrcp.pop %v487
      %v495 = vrcp.pop %v490
      %v496 = vrcp.pop %v493
      %v497 = vmul.f32 %v480, %v494
      %v498 = vmul.f32 %v482, %v495
      %v499 = vmul.f32 %v484, %v496
      %500 = vrot.lane.b32.xlu0 %v120, 48
      %v501 = vpop.permute.xlu0 %500
      %502 = vrot.lane.b32.xlu0 %v121, 48
      %v503 = vpop.permute.xlu0 %502
      %504 = vrot.lane.b32.xlu0 %v122, 48
      %v505 = vpop.permute.xlu0 %504
      %v510 = vsel %vm231, %v497, 0
      %v513 = vsel %vm231, %v498, 0
      %v516 = vsel %vm231, %v499, 0
      %518 = vmatprep.subr.mxu0 0.0
      %519 = vmatpush1.msra.mxu0 %v501
      %520 = vmatprep.subr.mxu0 0.0
      %521 = vmatpush1.msra.mxu0 %v503
      %522 = vmatprep.subr.mxu0 0.0
      %523 = vmatpush1.msra.mxu0 %v505
      %524 = vmatprep.subr.mxu0 0.0
      %525 = vmatpush1.msra.mxu0 0.0
      %526 = vmatprep.subr.mxu0 0.0
      %527 = vmatpush1.msra.mxu0 0.0
      %528 = vmatprep.subr.mxu0 0.0
      %529 = vmatpush1.msra.mxu0 0.0
      %530 = vmatprep.subr.mxu0 0.0
      %531 = vmatpush1.msra.mxu0 0.0
      %532 = vmatprep.subr.mxu0 0.0
      %533 = vmatpush1.msra.mxu0 0.0
      %534 = vmatprep.subr.mxu0 0.0
      %535 = vmatpush1.msra.mxu0 0.0
      %536 = vmatprep.subr.mxu0 0.0
      %537 = vmatpush1.msra.mxu0 0.0
      %538 = vmatprep.subr.mxu0 0.0
      %539 = vmatpush1.msra.mxu0 0.0
      %540 = vmatprep.subr.mxu0 0.0
      %541 = vmatpush1.msra.mxu0 0.0
      %542 = vmatprep.subr.mxu0 0.0
      %543 = vmatpush1.msra.mxu0 0.0
      %544 = vmatprep.subr.mxu0 0.0
      %545 = vmatpush1.msra.mxu0 0.0
      %546 = vmatprep.subr.mxu0 0.0
      %547 = vmatpush1.msra.mxu0 0.0
      %548 = vmatprep.subr.mxu0 0.0
      %549 = vmatpush1.msra.mxu0 0.0
      %550 = vmatprep.subr.mxu0 0.0
      %551 = vmatpush1.msra.mxu0 0.0
      %552 = vmatprep.subr.mxu0 0.0
      %553 = vmatpush1.msra.mxu0 0.0
      %554 = vmatprep.subr.mxu0 0.0
      %555 = vmatpush1.msra.mxu0 0.0
      %556 = vmatprep.subr.mxu0 0.0
      %557 = vmatpush1.msra.mxu0 0.0
      %558 = vmatprep.subr.mxu0 0.0
      %559 = vmatpush1.msra.mxu0 0.0
      %560 = vmatprep.subr.mxu0 0.0
      %561 = vmatpush1.msra.mxu0 0.0
      %562 = vmatprep.subr.mxu0 0.0
      %563 = vmatpush1.msra.mxu0 0.0
      %564 = vmatprep.subr.mxu0 0.0
      %565 = vmatpush1.msra.mxu0 0.0
      %566 = vmatprep.subr.mxu0 0.0
      %567 = vmatpush1.msra.mxu0 0.0
      %568 = vmatprep.subr.mxu0 0.0
      %569 = vmatpush1.msra.mxu0 0.0
      %570 = vmatprep.subr.mxu0 0.0
      %571 = vmatpush1.msra.mxu0 0.0
      %572 = vmatprep.subr.mxu0 0.0
      %573 = vmatpush1.msra.mxu0 0.0
      %574 = vmatprep.subr.mxu0 0.0
      %575 = vmatpush1.msra.mxu0 0.0
      %576 = vmatprep.subr.mxu0 0.0
      %577 = vmatpush1.msra.mxu0 0.0
      %578 = vmatprep.subr.mxu0 0.0
      %579 = vmatpush1.msra.mxu0 0.0
      %580 = vmatprep.subr.mxu0 0.0
      %581 = vmatpush1.msra.mxu0 0.0
      %582 = vmatprep.mubr.f32.mxu0 0.0
      %583 = vmatmul.mubr.f32.gmra.mrb[0].mxu0 %v510
      %v584 = vpop.f32.mrb[0].mxu0
      %v585 = vadd.f32 0.0, %v584
      %v586 = vpop.f32.mrb[0].mxu0
      %587 = vmatprep.mubr.f32.mxu0 0.0
      %588 = vmatmul.mubr.f32.gmra.mrb[0].mxu0 %v513
      %v589 = vpop.f32.mrb[0].mxu0
      %v590 = vadd.f32 0.0, %v589
      %v591 = vpop.f32.mrb[0].mxu0
      %592 = vmatprep.mubr.f32.mxu0 0.0
      %593 = vmatmul.mubr.f32.gmra.mrb[0].mxu0 %v516
      %v594 = vpop.f32.mrb[0].mxu0
      %v595 = vadd.f32 0.0, %v594
      %v596 = vpop.f32.mrb[0].mxu0
      %597 = vdwg.mxu0
      %601 = vrot.lane.b32.xlu0 %v585, 16
      %v602 = vpop.permute.xlu0 %601
      %603 = vrot.lane.b32.xlu0 %v590, 16
      %v604 = vpop.permute.xlu0 %603
      %605 = vrot.lane.b32.xlu0 %v595, 16
      %v606 = vpop.permute.xlu0 %605
      %v610 = vsel %vm135, %v350, %v602
      %v611 = vsel %vm135, %v355, %v604
      %v612 = vsel %vm135, %v360, %v606
      %vm613 = vcmask 261120
      %614 = vst.msk [vmem:[%s118] sm:$0xff] %vm613, %v610
      %615 = vst.msk [vmem:[%s118 + $0x8] sm:$0xff] %vm613, %v611
      %616 = vst.msk [vmem:[%s118 + $0x10] sm:$0xff] %vm613, %v612
      %s617 = smul.u32 3, %s12
      %p618 = scmp.lt.s32.totalorder %s617, 5
      %s619 = scalar_select %p618, %s617, 5
      %s620 = smul.addr %s619, 8
      %s621 = scalar_lea.vmem %s1, %s620
      // Predicated region
      $region25: #{combined_forward.13} parent=23 // pred_check
        %p622 = pneg %p56
      $region26: #{combined_forward.13} parent=23 // pred_check_branch
        %624 = sbr.rel (%p622) target = $region28
      $region27: #{combined_forward.13} parent=23 // pred_region
        %s625 = smul.u32 3, %s12
      $region28: #{combined_forward.13} parent=23 // pred_fallthru
        _
    $region24: #{combined_forward.13} parent=5 // pred_fallthru
      _
    %p626 = scmp.le.s32.totalorder 2, %s7
    // Predicated region
    $region29: #{combined_forward.13} parent=5 // pred_check
      %p627 = pneg %p626
    $region30: #{combined_forward.13} parent=5 // pred_check_branch
      %629 = sbr.rel (%p627) target = $region32
    $region31: #{combined_forward.13} parent=5 // pred_region
      %s630 = ssub.s32 %s7, 2
      // Predicated region
      $region33: #{combined_forward.13} parent=31 // pred_check
        %p631 = pneg %p62
      $region34: #{combined_forward.13} parent=31 // pred_check_branch
        %633 = sbr.rel (%p631) target = $region36
      $region35: #{combined_forward.13} parent=31 // pred_region
        %s634 = smul.u32 3, %s13
        %p635 = scmp.lt.s32.totalorder %s634, 5
        %s636 = scalar_select %p635, %s634, 5
        %s637 = smul.addr %s636, 8
        %s638 = scalar_lea.vmem %s1, %s637
      $region36: #{combined_forward.13} parent=31 // pred_fallthru
        _
    $region32: #{combined_forward.13} parent=5 // pred_fallthru
      _
  $region6: #{combined_forward.13} parent=0 // loop_footer
    %s11 = sadd.s32 1, %s7
  $region7: #{combined_forward.13} parent=0 // loop_footer_branch
    %6 = sbr.rel target = $region3
  $region8: #{combined_forward.13} parent=0 // loop_exit
    _

// kernel: combined_forward.15
$region0: #{combined_forward.15}
  #allocation0 [shape = 'u32[]', space=smem, size = 0x4, offset = 0x4, fixed_abs, tag = 'smem constant byte address 0x4 - core index']
  #allocation1 [shape = 'u32[144,128]{1,0:T(1,128)}', space=vmem, size = 0x12000, scoped, tag = 'internal scratch']
  %s0 = inlined_call_operand.vmem [shape: f32[48,32], index: 0, kind: input, shape index: {}]
  %s1 = inlined_call_operand.vmem [shape: f32[1,32], index: 1, kind: input, shape index: {}]
  %s2 = inlined_call_operand.vmem [shape: f32[1,32], index: 2, kind: input, shape index: {}]
  %s3 = inlined_call_operand.vmem [shape: f32[32,128], index: 3, kind: input, shape index: {}]
  %s4 = inlined_call_operand.vmem [shape: f32[1,128], index: 4, kind: input, shape index: {}]
  %s5 = inlined_call_operand.vmem [shape: f32[48,128], index: 5, kind: output, shape index: {}]
  %s6 = sld [smem:[#allocation0]]
  $region30: #{combined_forward.15} parent=0
    _
  %s8 = ssub.s32 1, %s6
  %s9 = scalar_select 0, %s8, %s6
  // Predicated region
  $region2: #{combined_forward.15} parent=0 // pred_check
    _
  $region3: #{combined_forward.15} parent=0 // pred_check_branch
    %11 = sbr.rel (0) target = $region5
  $region4: #{combined_forward.15} parent=0 // pred_region
    _
  $region5: #{combined_forward.15} parent=0 // pred_fallthru
    _
  // Predicated region
  $region6: #{combined_forward.15} parent=0 // pred_check
    _
  $region7: #{combined_forward.15} parent=0 // pred_check_branch
    %13 = sbr.rel (0) target = $region9
  $region8: #{combined_forward.15} parent=0 // pred_region
    _
  $region9: #{combined_forward.15} parent=0 // pred_fallthru
    _
  // Predicated region
  $region10: #{combined_forward.15} parent=0 // pred_check
    _
  $region11: #{combined_forward.15} parent=0 // pred_check_branch
    %15 = sbr.rel (0) target = $region13
  $region12: #{combined_forward.15} parent=0 // pred_region
    _
  $region13: #{combined_forward.15} parent=0 // pred_fallthru
    _
  // Predicated region
  $region14: #{combined_forward.15} parent=0 // pred_check
    _
  $region15: #{combined_forward.15} parent=0 // pred_check_branch
    %17 = sbr.rel (0) target = $region17
  $region16: #{combined_forward.15} parent=0 // pred_region
    _
  $region17: #{combined_forward.15} parent=0 // pred_fallthru
    _
  // Predicated region
  $region18: #{combined_forward.15} parent=0 // pred_check
    _
  $region19: #{combined_forward.15} parent=0 // pred_check_branch
    %19 = sbr.rel (0) target = $region21
  $region20: #{combined_forward.15} parent=0 // pred_region
    _
  $region21: #{combined_forward.15} parent=0 // pred_fallthru
    _
  %v20 = vld [vmem:[%s0] sm:$0xff]
  %v21 = vld [vmem:[%s0 + $0x8] sm:$0xff]
  %v22 = vld [vmem:[%s0 + $0x10] sm:$0xff]
  %v23 = vld [vmem:[%s0 + $0x18] sm:$0xff]
  %v24 = vld [vmem:[%s0 + $0x20] sm:$0xff]
  %v25 = vld [vmem:[%s0 + $0x28] sm:$0xff]
  %vm26 = vcmask 261120
  %v27 = vsel %vm26, %v20, 0.0
  %28 = vadd.xlane.f32.xlu0 %v27
  %v29 = vpop.xlane.xlu0 %28
  %v30 = vsel %vm26, %v21, 0.0
  %31 = vadd.xlane.f32.xlu0 %v30
  %v32 = vpop.xlane.xlu0 %31
  %v33 = vsel %vm26, %v22, 0.0
  %34 = vadd.xlane.f32.xlu0 %v33
  %v35 = vpop.xlane.xlu0 %34
  %v36 = vsel %vm26, %v23, 0.0
  %37 = vadd.xlane.f32.xlu0 %v36
  %v38 = vpop.xlane.xlu0 %37
  %v39 = vsel %vm26, %v24, 0.0
  %40 = vadd.xlane.f32.xlu0 %v39
  %v41 = vpop.xlane.xlu0 %40
  %v42 = vsel %vm26, %v25, 0.0
  %43 = vadd.xlane.f32.xlu0 %v42
  %v44 = vpop.xlane.xlu0 %43
  %v45 = vrcp.pop 32.0
  %v46 = vmul.f32 %v29, %v45
  %v47 = vmul.f32 %v32, %v45
  %v48 = vmul.f32 %v35, %v45
  %v49 = vmul.f32 %v38, %v45
  %v50 = vmul.f32 %v41, %v45
  %v51 = vmul.f32 %v44, %v45
  %v52 = vsub.f32 %v20, %v46
  %v53 = vsub.f32 %v21, %v47
  %v54 = vsub.f32 %v22, %v48
  %v55 = vsub.f32 %v23, %v49
  %v56 = vsub.f32 %v24, %v50
  %v57 = vsub.f32 %v25, %v51
  %v58 = vmul.f32 %v52, %v52
  %v59 = vmul.f32 %v53, %v53
  %v60 = vmul.f32 %v54, %v54
  %v61 = vmul.f32 %v55, %v55
  %v62 = vmul.f32 %v56, %v56
  %v63 = vmul.f32 %v57, %v57
  %v64 = vsel %vm26, %v58, 0.0
  %65 = vadd.xlane.f32.xlu0 %v64
  %v66 = vpop.xlane.xlu0 %65
  %v67 = vsel %vm26, %v59, 0.0
  %68 = vadd.xlane.f32.xlu0 %v67
  %v69 = vpop.xlane.xlu0 %68
  %v70 = vsel %vm26, %v60, 0.0
  %71 = vadd.xlane.f32.xlu0 %v70
  %v72 = vpop.xlane.xlu0 %71
  %v73 = vsel %vm26, %v61, 0.0
  %74 = vadd.xlane.f32.xlu0 %v73
  %v75 = vpop.xlane.xlu0 %74
  %v76 = vsel %vm26, %v62, 0.0
  %77 = vadd.xlane.f32.xlu0 %v76
  %v78 = vpop.xlane.xlu0 %77
  %v79 = vsel %vm26, %v63, 0.0
  %80 = vadd.xlane.f32.xlu0 %v79
  %v81 = vpop.xlane.xlu0 %80
  %v82 = vmul.f32 %v66, %v45
  %v83 = vmul.f32 %v69, %v45
  %v84 = vmul.f32 %v72, %v45
  %v85 = vmul.f32 %v75, %v45
  %v86 = vmul.f32 %v78, %v45
  %v87 = vmul.f32 %v81, %v45
  %v88 = vadd.f32 %v82, 1e-05
  %v89 = vadd.f32 %v83, 1e-05
  %v90 = vadd.f32 %v84, 1e-05
  %v91 = vadd.f32 %v85, 1e-05
  %v92 = vadd.f32 %v86, 1e-05
  %v93 = vadd.f32 %v87, 1e-05
  %v94 = vrsqrt.pop %v88
  %v95 = vrsqrt.pop %v89
  %v96 = vrsqrt.pop %v90
  %v97 = vrsqrt.pop %v91
  %v98 = vrsqrt.pop %v92
  %v99 = vrsqrt.pop %v93
  %v100 = vmul.f32 %v52, %v94
  %v101 = vmul.f32 %v53, %v95
  %v102 = vmul.f32 %v54, %v96
  %v103 = vmul.f32 %v55, %v97
  %v104 = vmul.f32 %v56, %v98
  %v105 = vmul.f32 %v57, %v99
  %v106 = vld [vmem:[%s1] sm:$0x1]
  %v108 = vlaneseq
  %v109 = vshrl.u32 %v108, 7
  %v110 = vsub.s32 0, %v109
  %v111 = vrot.slane %v106, %v110
  %v113 = vmul.f32 %v100, %v111
  %v114 = vmul.f32 %v101, %v111
  %v115 = vmul.f32 %v102, %v111
  %v116 = vmul.f32 %v103, %v111
  %v117 = vmul.f32 %v104, %v111
  %v118 = vmul.f32 %v105, %v111
  %v119 = vld [vmem:[%s2] sm:$0x1]
  %v121 = vlaneseq
  %v122 = vshrl.u32 %v121, 7
  %v123 = vsub.s32 0, %v122
  %v124 = vrot.slane %v119, %v123
  %v126 = vadd.f32 %v113, %v124
  %v127 = vadd.f32 %v114, %v124
  %v128 = vadd.f32 %v115, %v124
  %v129 = vadd.f32 %v116, %v124
  %v130 = vadd.f32 %v117, %v124
  %v131 = vadd.f32 %v118, %v124
  %v132 = vld [vmem:[%s3] sm:$0xff]
  %v133 = vld [vmem:[%s3 + $0x8] sm:$0xff]
  %v134 = vld [vmem:[%s3 + $0x10] sm:$0xff]
  %v135 = vld [vmem:[%s3 + $0x18] sm:$0xff]
  %v136 = vld [vmem:[%s4] sm:$0x1]
  %v138 = vlaneseq
  %v139 = vshrl.u32 %v138, 7
  %v140 = vsub.s32 0, %v139
  %v141 = vrot.slane %v136, %v140
  %v144 = vsel %vm26, %v126, 0
  %v147 = vsel %vm26, %v127, 0
  %v150 = vsel %vm26, %v128, 0
  %v153 = vsel %vm26, %v129, 0
  %v156 = vsel %vm26, %v130, 0
  %v159 = vsel %vm26, %v131, 0
  %161 = vmatprep.subr.mxu0 0.0
  %162 = vmatpush1.msra.mxu0 %v132
  %163 = vmatprep.subr.mxu0 0.0
  %164 = vmatpush1.msra.mxu0 %v133
  %165 = vmatprep.subr.mxu0 0.0
  %166 = vmatpush1.msra.mxu0 %v134
  %167 = vmatprep.subr.mxu0 0.0
  %168 = vmatpush1.msra.mxu0 %v135
  %169 = vmatprep.subr.mxu0 0.0
  %170 = vmatpush1.msra.mxu0 0.0
  %171 = vmatprep.subr.mxu0 0.0
  %172 = vmatpush1.msra.mxu0 0.0
  %173 = vmatprep.subr.mxu0 0.0
  %174 = vmatpush1.msra.mxu0 0.0
  %175 = vmatprep.subr.mxu0 0.0
  %176 = vmatpush1.msra.mxu0 0.0
  %177 = vmatprep.subr.mxu0 0.0
  %178 = vmatpush1.msra.mxu0 0.0
  %179 = vmatprep.subr.mxu0 0.0
  %180 = vmatpush1.msra.mxu0 0.0
  %181 = vmatprep.subr.mxu0 0.0
  %182 = vmatpush1.msra.mxu0 0.0
  %183 = vmatprep.subr.mxu0 0.0
  %184 = vmatpush1.msra.mxu0 0.0
  %185 = vmatprep.subr.mxu0 0.0
  %186 = vmatpush1.msra.mxu0 0.0
  %187 = vmatprep.subr.mxu0 0.0
  %188 = vmatpush1.msra.mxu0 0.0
  %189 = vmatprep.subr.mxu0 0.0
  %190 = vmatpush1.msra.mxu0 0.0
  %191 = vmatprep.subr.mxu0 0.0
  %192 = vmatpush1.msra.mxu0 0.0
  %193 = vmatprep.subr.mxu0 0.0
  %194 = vmatpush1.msra.mxu0 0.0
  %195 = vmatprep.subr.mxu0 0.0
  %196 = vmatpush1.msra.mxu0 0.0
  %197 = vmatprep.subr.mxu0 0.0
  %198 = vmatpush1.msra.mxu0 0.0
  %199 = vmatprep.subr.mxu0 0.0
  %200 = vmatpush1.msra.mxu0 0.0
  %201 = vmatprep.subr.mxu0 0.0
  %202 = vmatpush1.msra.mxu0 0.0
  %203 = vmatprep.subr.mxu0 0.0
  %204 = vmatpush1.msra.mxu0 0.0
  %205 = vmatprep.subr.mxu0 0.0
  %206 = vmatpush1.msra.mxu0 0.0
  %207 = vmatprep.subr.mxu0 0.0
  %208 = vmatpush1.msra.mxu0 0.0
  %209 = vmatprep.subr.mxu0 0.0
  %210 = vmatpush1.msra.mxu0 0.0
  %211 = vmatprep.subr.mxu0 0.0
  %212 = vmatpush1.msra.mxu0 0.0
  %213 = vmatprep.subr.mxu0 0.0
  %214 = vmatpush1.msra.mxu0 0.0
  %215 = vmatprep.subr.mxu0 0.0
  %216 = vmatpush1.msra.mxu0 0.0
  %217 = vmatprep.subr.mxu0 0.0
  %218 = vmatpush1.msra.mxu0 0.0
  %219 = vmatprep.subr.mxu0 0.0
  %220 = vmatpush1.msra.mxu0 0.0
  %221 = vmatprep.subr.mxu0 0.0
  %222 = vmatpush1.msra.mxu0 0.0
  %223 = vmatprep.subr.mxu0 0.0
  %224 = vmatpush1.msra.mxu0 0.0
  %225 = vmatprep.mubr.f32.mxu0 0.0
  %226 = vmatmul.mubr.f32.gmra.mrb[0].mxu0 %v144
  %v227 = vpop.f32.mrb[0].mxu0
  %v228 = vadd.f32 %v141, %v227
  %v229 = vpop.f32.mrb[0].mxu0
  %230 = vmatprep.mubr.f32.mxu0 0.0
  %231 = vmatmul.mubr.f32.gmra.mrb[0].mxu0 %v147
  %v232 = vpop.f32.mrb[0].mxu0
  %v233 = vadd.f32 %v141, %v232
  %v234 = vpop.f32.mrb[0].mxu0
  %235 = vmatprep.mubr.f32.mxu0 0.0
  %236 = vmatmul.mubr.f32.gmra.mrb[0].mxu0 %v150
  %v237 = vpop.f32.mrb[0].mxu0
  %v238 = vadd.f32 %v141, %v237
  %v239 = vpop.f32.mrb[0].mxu0
  %240 = vmatprep.mubr.f32.mxu0 0.0
  %241 = vmatmul.mubr.f32.gmra.mrb[0].mxu0 %v153
  %v242 = vpop.f32.mrb[0].mxu0
  %v243 = vadd.f32 %v141, %v242
  %v244 = vpop.f32.mrb[0].mxu0
  %245 = vmatprep.mubr.f32.mxu0 0.0
  %246 = vmatmul.mubr.f32.gmra.mrb[0].mxu0 %v156
  %v247 = vpop.f32.mrb[0].mxu0
  %v248 = vadd.f32 %v141, %v247
  %v249 = vpop.f32.mrb[0].mxu0
  %250 = vmatprep.mubr.f32.mxu0 0.0
  %251 = vmatmul.mubr.f32.gmra.mrb[0].mxu0 %v159
  %v252 = vpop.f32.mrb[0].mxu0
  %v253 = vadd.f32 %v141, %v252
  %v254 = vpop.f32.mrb[0].mxu0
  %255 = vdwg.mxu0
  %v256 = vmul.f32 %v228, %v228
  %v257 = vmul.f32 %v233, %v233
  %v258 = vmul.f32 %v238, %v238
  %v259 = vmul.f32 %v243, %v243
  %v260 = vmul.f32 %v248, %v248
  %v261 = vmul.f32 %v253, %v253
  %v262 = vmul.f32 %v228, %v256
  %v263 = vmul.f32 %v233, %v257
  %v264 = vmul.f32 %v238, %v258
  %v265 = vmul.f32 %v243, %v259
  %v266 = vmul.f32 %v248, %v260
  %v267 = vmul.f32 %v253, %v261
  %v268 = vmul.f32 %v262, 0.044715
  %v269 = vmul.f32 %v263, 0.044715
  %v270 = vmul.f32 %v264, 0.044715
  %v271 = vmul.f32 %v265, 0.044715
  %v272 = vmul.f32 %v266, 0.044715
  %v273 = vmul.f32 %v267, 0.044715
  %v274 = vadd.f32 %v228, %v268
  %v275 = vadd.f32 %v233, %v269
  %v276 = vadd.f32 %v238, %v270
  %v277 = vadd.f32 %v243, %v271
  %v278 = vadd.f32 %v248, %v272
  %v279 = vadd.f32 %v253, %v273
  %v280 = vmul.f32 %v274, 0.7978846
  %v281 = vmul.f32 %v275, 0.7978846
  %v282 = vmul.f32 %v276, 0.7978846
  %v283 = vmul.f32 %v277, 0.7978846
  %v284 = vmul.f32 %v278, 0.7978846
  %v285 = vmul.f32 %v279, 0.7978846
  %v286 = vtanh.pop %v280
  %v287 = vtanh.pop %v281
  %v288 = vtanh.pop %v282
  %v289 = vtanh.pop %v283
  %v290 = vtanh.pop %v284
  %v291 = vtanh.pop %v285
  %v292 = vadd.f32 %v286, 1.0
  %v293 = vadd.f32 %v287, 1.0
  %v294 = vadd.f32 %v288, 1.0
  %v295 = vadd.f32 %v289, 1.0
  %v296 = vadd.f32 %v290, 1.0
  %v297 = vadd.f32 %v291, 1.0
  %v298 = vmul.f32 %v292, 0.5
  %v299 = vmul.f32 %v293, 0.5
  %v300 = vmul.f32 %v294, 0.5
  %v301 = vmul.f32 %v295, 0.5
  %v302 = vmul.f32 %v296, 0.5
  %v303 = vmul.f32 %v297, 0.5
  %v304 = vmul.f32 %v228, %v298
  %v305 = vmul.f32 %v233, %v299
  %v306 = vmul.f32 %v238, %v300
  %v307 = vmul.f32 %v243, %v301
  %v308 = vmul.f32 %v248, %v302
  %v309 = vmul.f32 %v253, %v303
  %310 = vst [vmem:[%s5] sm:$0xff] %v304
  %311 = vst [vmem:[%s5 + $0x8] sm:$0xff] %v305
  %312 = vst [vmem:[%s5 + $0x10] sm:$0xff] %v306
  %313 = vst [vmem:[%s5 + $0x18] sm:$0xff] %v307
  %314 = vst [vmem:[%s5 + $0x20] sm:$0xff] %v308
  %315 = vst [vmem:[%s5 + $0x28] sm:$0xff] %v309
  // Predicated region
  $region22: #{combined_forward.15} parent=0 // pred_check
    _
  $region23: #{combined_forward.15} parent=0 // pred_check_branch
    %317 = sbr.rel (0) target = $region25
  $region24: #{combined_forward.15} parent=0 // pred_region
    _
  $region25: #{combined_forward.15} parent=0 // pred_fallthru
    _
  // Predicated region
  $region26: #{combined_forward.15} parent=0 // pred_check
    _
  $region27: #{combined_forward.15} parent=0 // pred_check_branch
    %319 = sbr.rel (0) target = $region29
  $region28: #{combined_forward.15} parent=0 // pred_region
    _
  $region29: #{combined_forward.15} parent=0 // pred_fallthru
    _

// kernel: combined_forward.16
$region0: #{combined_forward.16}
  #allocation0 [shape = 'u32[]', space=smem, size = 0x4, offset = 0x4, fixed_abs, tag = 'smem constant byte address 0x4 - core index']
  #allocation1 [shape = 'u32[144,128]{1,0:T(1,128)}', space=vmem, size = 0x12000, scoped, tag = 'internal scratch']
  #allocation2 [shape = 'f32[48,32]{1,0:T(8,128)}', space=vmem, size = 0x6000, scoped, tag = 'scratch operand']
  %s0 = inlined_call_operand.vmem [shape: f32[48,128], index: 0, kind: input, shape index: {}]
  %s1 = inlined_call_operand.vmem [shape: f32[128,32], index: 1, kind: input, shape index: {}]
  %s2 = inlined_call_operand.vmem [shape: f32[1,32], index: 2, kind: input, shape index: {}]
  %s3 = inlined_call_operand.vmem [shape: f32[48,32], index: 3, kind: input, shape index: {}]
  %s4 = inlined_call_operand.vmem [shape: f32[48,32], index: 4, kind: output, shape index: {}]
  %s5 = sld [smem:[#allocation0]]
  $region34: #{combined_forward.16} parent=0
    _
  %s7 = ssub.s32 1, %s5
  %s8 = scalar_select 0, %s7, %s5
  // Predicated region
  $region2: #{combined_forward.16} parent=0 // pred_check
    _
  $region3: #{combined_forward.16} parent=0 // pred_check_branch
    %10 = sbr.rel (0) target = $region5
  $region4: #{combined_forward.16} parent=0 // pred_region
    _
  $region5: #{combined_forward.16} parent=0 // pred_fallthru
    _
  // Predicated region
  $region6: #{combined_forward.16} parent=0 // pred_check
    _
  $region7: #{combined_forward.16} parent=0 // pred_check_branch
    %12 = sbr.rel (0) target = $region9
  $region8: #{combined_forward.16} parent=0 // pred_region
    _
  $region9: #{combined_forward.16} parent=0 // pred_fallthru
    _
  // Predicated region
  $region10: #{combined_forward.16} parent=0 // pred_check
    _
  $region11: #{combined_forward.16} parent=0 // pred_check_branch
    %14 = sbr.rel (0) target = $region13
  $region12: #{combined_forward.16} parent=0 // pred_region
    _
  $region13: #{combined_forward.16} parent=0 // pred_fallthru
    _
  // Predicated region
  $region14: #{combined_forward.16} parent=0 // pred_check
    _
  $region15: #{combined_forward.16} parent=0 // pred_check_branch
    %16 = sbr.rel (0) target = $region17
  $region16: #{combined_forward.16} parent=0 // pred_region
    _
  $region17: #{combined_forward.16} parent=0 // pred_fallthru
    _
  %p17 = scmp.eq.s32.totalorder 0, 0
  // Predicated region
  $region18: #{combined_forward.16} parent=0 // pred_check
    %p18 = pneg %p17
  $region19: #{combined_forward.16} parent=0 // pred_check_branch
    %20 = sbr.rel (%p18) target = $region21
  $region20: #{combined_forward.16} parent=0 // pred_region
    %vm21 = vcmask 261120
    %22 = vst.msk [vmem:[#allocation2] sm:$0xff] %vm21, 0.0
    %23 = vst.msk [vmem:[#allocation2 + $0x8] sm:$0xff] %vm21, 0.0
    %24 = vst.msk [vmem:[#allocation2 + $0x10] sm:$0xff] %vm21, 0.0
    %25 = vst.msk [vmem:[#allocation2 + $0x18] sm:$0xff] %vm21, 0.0
    %26 = vst.msk [vmem:[#allocation2 + $0x20] sm:$0xff] %vm21, 0.0
    %27 = vst.msk [vmem:[#allocation2 + $0x28] sm:$0xff] %vm21, 0.0
  $region21: #{combined_forward.16} parent=0 // pred_fallthru
    _
  %v28 = vld [vmem:[#allocation2] sm:$0xff]
  %v29 = vld [vmem:[#allocation2 + $0x8] sm:$0xff]
  %v30 = vld [vmem:[#allocation2 + $0x10] sm:$0xff]
  %v31 = vld [vmem:[#allocation2 + $0x18] sm:$0xff]
  %v32 = vld [vmem:[#allocation2 + $0x20] sm:$0xff]
  %v33 = vld [vmem:[#allocation2 + $0x28] sm:$0xff]
  %v34 = vld [vmem:[%s0] sm:$0xff]
  %v35 = vld [vmem:[%s0 + $0x8] sm:$0xff]
  %v36 = vld [vmem:[%s0 + $0x10] sm:$0xff]
  %v37 = vld [vmem:[%s0 + $0x18] sm:$0xff]
  %v38 = vld [vmem:[%s0 + $0x20] sm:$0xff]
  %v39 = vld [vmem:[%s0 + $0x28] sm:$0xff]
  %v40 = vld [vmem:[%s1] sm:$0xff]
  %v41 = vld [vmem:[%s1 + $0x8] sm:$0xff]
  %v42 = vld [vmem:[%s1 + $0x10] sm:$0xff]
  %v43 = vld [vmem:[%s1 + $0x18] sm:$0xff]
  %v44 = vld [vmem:[%s1 + $0x20] sm:$0xff]
  %v45 = vld [vmem:[%s1 + $0x28] sm:$0xff]
  %v46 = vld [vmem:[%s1 + $0x30] sm:$0xff]
  %v47 = vld [vmem:[%s1 + $0x38] sm:$0xff]
  %v48 = vld [vmem:[%s1 + $0x40] sm:$0xff]
  %v49 = vld [vmem:[%s1 + $0x48] sm:$0xff]
  %v50 = vld [vmem:[%s1 + $0x50] sm:$0xff]
  %v51 = vld [vmem:[%s1 + $0x58] sm:$0xff]
  %v52 = vld [vmem:[%s1 + $0x60] sm:$0xff]
  %v53 = vld [vmem:[%s1 + $0x68] sm:$0xff]
  %v54 = vld [vmem:[%s1 + $0x70] sm:$0xff]
  %v55 = vld [vmem:[%s1 + $0x78] sm:$0xff]
  %56 = vmatprep.subr.mxu0 0.0
  %57 = vmatpush1.msra.mxu0 %v40
  %58 = vmatprep.subr.mxu0 0.0
  %59 = vmatpush1.msra.mxu0 %v41
  %60 = vmatprep.subr.mxu0 0.0
  %61 = vmatpush1.msra.mxu0 %v42
  %62 = vmatprep.subr.mxu0 0.0
  %63 = vmatpush1.msra.mxu0 %v43
  %64 = vmatprep.subr.mxu0 0.0
  %65 = vmatpush1.msra.mxu0 %v44
  %66 = vmatprep.subr.mxu0 0.0
  %67 = vmatpush1.msra.mxu0 %v45
  %68 = vmatprep.subr.mxu0 0.0
  %69 = vmatpush1.msra.mxu0 %v46
  %70 = vmatprep.subr.mxu0 0.0
  %71 = vmatpush1.msra.mxu0 %v47
  %72 = vmatprep.subr.mxu0 0.0
  %73 = vmatpush1.msra.mxu0 %v48
  %74 = vmatprep.subr.mxu0 0.0
  %75 = vmatpush1.msra.mxu0 %v49
  %76 = vmatprep.subr.mxu0 0.0
  %77 = vmatpush1.msra.mxu0 %v50
  %78 = vmatprep.subr.mxu0 0.0
  %79 = vmatpush1.msra.mxu0 %v51
  %80 = vmatprep.subr.mxu0 0.0
  %81 = vmatpush1.msra.mxu0 %v52
  %82 = vmatprep.subr.mxu0 0.0
  %83 = vmatpush1.msra.mxu0 %v53
  %84 = vmatprep.subr.mxu0 0.0
  %85 = vmatpush1.msra.mxu0 %v54
  %86 = vmatprep.subr.mxu0 0.0
  %87 = vmatpush1.msra.mxu0 %v55
  %88 = vmatprep.subr.mxu0 0.0
  %89 = vmatpush1.msra.mxu0 0.0
  %90 = vmatprep.subr.mxu0 0.0
  %91 = vmatpush1.msra.mxu0 0.0
  %92 = vmatprep.subr.mxu0 0.0
  %93 = vmatpush1.msra.mxu0 0.0
  %94 = vmatprep.subr.mxu0 0.0
  %95 = vmatpush1.msra.mxu0 0.0
  %96 = vmatprep.subr.mxu0 0.0
  %97 = vmatpush1.msra.mxu0 0.0
  %98 = vmatprep.subr.mxu0 0.0
  %99 = vmatpush1.msra.mxu0 0.0
  %100 = vmatprep.subr.mxu0 0.0
  %101 = vmatpush1.msra.mxu0 0.0
  %102 = vmatprep.subr.mxu0 0.0
  %103 = vmatpush1.msra.mxu0 0.0
  %104 = vmatprep.subr.mxu0 0.0
  %105 = vmatpush1.msra.mxu0 0.0
  %106 = vmatprep.subr.mxu0 0.0
  %107 = vmatpush1.msra.mxu0 0.0
  %108 = vmatprep.subr.mxu0 0.0
  %109 = vmatpush1.msra.mxu0 0.0
  %110 = vmatprep.subr.mxu0 0.0
  %111 = vmatpush1.msra.mxu0 0.0
  %112 = vmatprep.subr.mxu0 0.0
  %113 = vmatpush1.msra.mxu0 0.0
  %114 = vmatprep.subr.mxu0 0.0
  %115 = vmatpush1.msra.mxu0 0.0
  %116 = vmatprep.subr.mxu0 0.0
  %117 = vmatpush1.msra.mxu0 0.0
  %118 = vmatprep.subr.mxu0 0.0
  %119 = vmatpush1.msra.mxu0 0.0
  %120 = vmatprep.mubr.f32.mxu0 0.0
  %121 = vmatmul.mubr.f32.gmra.mrb[0].mxu0 %v34
  %v122 = vpop.f32.mrb[0].mxu0
  %v123 = vadd.f32 0.0, %v122
  %v124 = vpop.f32.mrb[0].mxu0
  %125 = vmatprep.mubr.f32.mxu0 0.0
  %126 = vmatmul.mubr.f32.gmra.mrb[0].mxu0 %v35
  %v127 = vpop.f32.mrb[0].mxu0
  %v128 = vadd.f32 0.0, %v127
  %v129 = vpop.f32.mrb[0].mxu0
  %130 = vmatprep.mubr.f32.mxu0 0.0
  %131 = vmatmul.mubr.f32.gmra.mrb[0].mxu0 %v36
  %v132 = vpop.f32.mrb[0].mxu0
  %v133 = vadd.f32 0.0, %v132
  %v134 = vpop.f32.mrb[0].mxu0
  %135 = vmatprep.mubr.f32.mxu0 0.0
  %136 = vmatmul.mubr.f32.gmra.mrb[0].mxu0 %v37
  %v137 = vpop.f32.mrb[0].mxu0
  %v138 = vadd.f32 0.0, %v137
  %v139 = vpop.f32.mrb[0].mxu0
  %140 = vmatprep.mubr.f32.mxu0 0.0
  %141 = vmatmul.mubr.f32.gmra.mrb[0].mxu0 %v38
  %v142 = vpop.f32.mrb[0].mxu0
  %v143 = vadd.f32 0.0, %v142
  %v144 = vpop.f32.mrb[0].mxu0
  %145 = vmatprep.mubr.f32.mxu0 0.0
  %146 = vmatmul.mubr.f32.gmra.mrb[0].mxu0 %v39
  %v147 = vpop.f32.mrb[0].mxu0
  %v148 = vadd.f32 0.0, %v147
  %v149 = vpop.f32.mrb[0].mxu0
  %150 = vdwg.mxu0
  %v151 = vadd.f32 %v28, %v123
  %v152 = vadd.f32 %v29, %v128
  %v153 = vadd.f32 %v30, %v133
  %v154 = vadd.f32 %v31, %v138
  %v155 = vadd.f32 %v32, %v143
  %v156 = vadd.f32 %v33, %v148
  %vm157 = vcmask 261120
  %158 = vst.msk [vmem:[#allocation2] sm:$0xff] %vm157, %v151
  %159 = vst.msk [vmem:[#allocation2 + $0x8] sm:$0xff] %vm157, %v152
  %160 = vst.msk [vmem:[#allocation2 + $0x10] sm:$0xff] %vm157, %v153
  %161 = vst.msk [vmem:[#allocation2 + $0x18] sm:$0xff] %vm157, %v154
  %162 = vst.msk [vmem:[#allocation2 + $0x20] sm:$0xff] %vm157, %v155
  %163 = vst.msk [vmem:[#allocation2 + $0x28] sm:$0xff] %vm157, %v156
  // Predicated region
  $region22: #{combined_forward.16} parent=0 // pred_check
    %p164 = pneg %p17
  $region23: #{combined_forward.16} parent=0 // pred_check_branch
    %166 = sbr.rel (%p164) target = $region25
  $region24: #{combined_forward.16} parent=0 // pred_region
    %v167 = vld [vmem:[#allocation2] sm:$0xff]
    %v168 = vld [vmem:[#allocation2 + $0x8] sm:$0xff]
    %v169 = vld [vmem:[#allocation2 + $0x10] sm:$0xff]
    %v170 = vld [vmem:[#allocation2 + $0x18] sm:$0xff]
    %v171 = vld [vmem:[#allocation2 + $0x20] sm:$0xff]
    %v172 = vld [vmem:[#allocation2 + $0x28] sm:$0xff]
    %v173 = vld [vmem:[%s2] sm:$0x1]
    %v175 = vlaneseq
    %v176 = vshrl.u32 %v175, 7
    %v177 = vsub.s32 0, %v176
    %v178 = vrot.slane %v173, %v177
    %v180 = vadd.f32 %v167, %v178
    %v181 = vadd.f32 %v168, %v178
    %v182 = vadd.f32 %v169, %v178
    %v183 = vadd.f32 %v170, %v178
    %v184 = vadd.f32 %v171, %v178
    %v185 = vadd.f32 %v172, %v178
    %v186 = vld [vmem:[%s3] sm:$0xff]
    %v187 = vld [vmem:[%s3 + $0x8] sm:$0xff]
    %v188 = vld [vmem:[%s3 + $0x10] sm:$0xff]
    %v189 = vld [vmem:[%s3 + $0x18] sm:$0xff]
    %v190 = vld [vmem:[%s3 + $0x20] sm:$0xff]
    %v191 = vld [vmem:[%s3 + $0x28] sm:$0xff]
    %v192 = vadd.f32 %v180, %v186
    %v193 = vadd.f32 %v181, %v187
    %v194 = vadd.f32 %v182, %v188
    %v195 = vadd.f32 %v183, %v189
    %v196 = vadd.f32 %v184, %v190
    %v197 = vadd.f32 %v185, %v191
    %198 = vst.msk [vmem:[%s4] sm:$0xff] %vm157, %v192
    %199 = vst.msk [vmem:[%s4 + $0x8] sm:$0xff] %vm157, %v193
    %200 = vst.msk [vmem:[%s4 + $0x10] sm:$0xff] %vm157, %v194
    %201 = vst.msk [vmem:[%s4 + $0x18] sm:$0xff] %vm157, %v195
    %202 = vst.msk [vmem:[%s4 + $0x20] sm:$0xff] %vm157, %v196
    %203 = vst.msk [vmem:[%s4 + $0x28] sm:$0xff] %vm157, %v197
  $region25: #{combined_forward.16} parent=0 // pred_fallthru
    _
  // Predicated region
  $region26: #{combined_forward.16} parent=0 // pred_check
    _
  $region27: #{combined_forward.16} parent=0 // pred_check_branch
    %205 = sbr.rel (0) target = $region29
  $region28: #{combined_forward.16} parent=0 // pred_region
    _
  $region29: #{combined_forward.16} parent=0 // pred_fallthru
    _
  // Predicated region
  $region30: #{combined_forward.16} parent=0 // pred_check
    _
  $region31: #{combined_forward.16} parent=0 // pred_check_branch
    %207 = sbr.rel (0) target = $region33
  $region32: #{combined_forward.16} parent=0 // pred_region
    _
  $region33: #{combined_forward.16} parent=0 // pred_fallthru
    _

// kernel: combined_forward.17
$region0: #{combined_forward.17}
  #allocation0 [shape = 'u32[]', space=smem, size = 0x4, offset = 0x4, fixed_abs, tag = 'smem constant byte address 0x4 - core index']
  #allocation1 [shape = 'u32[144,128]{1,0:T(1,128)}', space=vmem, size = 0x12000, scoped, tag = 'internal scratch']
  %s0 = inlined_call_operand.vmem [shape: f32[32,32], index: 0, kind: input, shape index: {}]
  %s1 = inlined_call_operand.vmem [shape: f32[1,32], index: 1, kind: input, shape index: {}]
  %s2 = inlined_call_operand.vmem [shape: f32[1,32], index: 2, kind: input, shape index: {}]
  %s3 = inlined_call_operand.vmem [shape: f32[32,128], index: 3, kind: input, shape index: {}]
  %s4 = inlined_call_operand.vmem [shape: f32[1,128], index: 4, kind: input, shape index: {}]
  %s5 = inlined_call_operand.hbm [shape: f32[32,128], index: 5, kind: output, shape index: {}]
  %s6 = sld [smem:[#allocation0]]
  $region30: #{combined_forward.17} parent=0
    _
  %s8 = ssub.s32 1, %s6
  %s9 = scalar_select 0, %s8, %s6
  $region1: #{combined_forward.17} parent=0
    #allocation2 [shape = 'u8[16384]{0}', space=vmem, size = 0x4000, scoped, tag = 'output window, operand 0, single buffered']
    #allocation3 [shape = 's32[1]{0}', space=sflag, size = 0x4, scoped, tag = 'scoped memory for combined_forward.17']
    %10 = vsyncpa [#allocation3], 0
    // Predicated region
    $region2: #{combined_forward.17} parent=1 // pred_check
      _
    $region3: #{combined_forward.17} parent=1 // pred_check_branch
      %12 = sbr.rel (0) target = $region5
    $region4: #{combined_forward.17} parent=1 // pred_region
      _
    $region5: #{combined_forward.17} parent=1 // pred_fallthru
      _
    // Predicated region
    $region6: #{combined_forward.17} parent=1 // pred_check
      _
    $region7: #{combined_forward.17} parent=1 // pred_check_branch
      %14 = sbr.rel (0) target = $region9
    $region8: #{combined_forward.17} parent=1 // pred_region
      _
    $region9: #{combined_forward.17} parent=1 // pred_fallthru
      _
    // Predicated region
    $region10: #{combined_forward.17} parent=1 // pred_check
      _
    $region11: #{combined_forward.17} parent=1 // pred_check_branch
      %16 = sbr.rel (0) target = $region13
    $region12: #{combined_forward.17} parent=1 // pred_region
      _
    $region13: #{combined_forward.17} parent=1 // pred_fallthru
      _
    // Predicated region
    $region14: #{combined_forward.17} parent=1 // pred_check
      _
    $region15: #{combined_forward.17} parent=1 // pred_check_branch
      %18 = sbr.rel (0) target = $region17
    $region16: #{combined_forward.17} parent=1 // pred_region
      _
    $region17: #{combined_forward.17} parent=1 // pred_fallthru
      _
    // Predicated region
    $region18: #{combined_forward.17} parent=1 // pred_check
      _
    $region19: #{combined_forward.17} parent=1 // pred_check_branch
      %20 = sbr.rel (0) target = $region21
    $region20: #{combined_forward.17} parent=1 // pred_region
      _
    $region21: #{combined_forward.17} parent=1 // pred_fallthru
      _
    %v21 = vld [vmem:[%s0] sm:$0xff]
    %v22 = vld [vmem:[%s0 + $0x8] sm:$0xff]
    %v23 = vld [vmem:[%s0 + $0x10] sm:$0xff]
    %v24 = vld [vmem:[%s0 + $0x18] sm:$0xff]
    %vm25 = vcmask 261120
    %v26 = vsel %vm25, %v21, 0.0
    %27 = vadd.xlane.f32.xlu0 %v26
    %v28 = vpop.xlane.xlu0 %27
    %v29 = vsel %vm25, %v22, 0.0
    %30 = vadd.xlane.f32.xlu0 %v29
    %v31 = vpop.xlane.xlu0 %30
    %v32 = vsel %vm25, %v23, 0.0
    %33 = vadd.xlane.f32.xlu0 %v32
    %v34 = vpop.xlane.xlu0 %33
    %v35 = vsel %vm25, %v24, 0.0
    %36 = vadd.xlane.f32.xlu0 %v35
    %v37 = vpop.xlane.xlu0 %36
    %v38 = vrcp.pop 32.0
    %v39 = vmul.f32 %v28, %v38
    %v40 = vmul.f32 %v31, %v38
    %v41 = vmul.f32 %v34, %v38
    %v42 = vmul.f32 %v37, %v38
    %v43 = vsub.f32 %v21, %v39
    %v44 = vsub.f32 %v22, %v40
    %v45 = vsub.f32 %v23, %v41
    %v46 = vsub.f32 %v24, %v42
    %v47 = vmul.f32 %v43, %v43
    %v48 = vmul.f32 %v44, %v44
    %v49 = vmul.f32 %v45, %v45
    %v50 = vmul.f32 %v46, %v46
    %v51 = vsel %vm25, %v47, 0.0
    %52 = vadd.xlane.f32.xlu0 %v51
    %v53 = vpop.xlane.xlu0 %52
    %v54 = vsel %vm25, %v48, 0.0
    %55 = vadd.xlane.f32.xlu0 %v54
    %v56 = vpop.xlane.xlu0 %55
    %v57 = vsel %vm25, %v49, 0.0
    %58 = vadd.xlane.f32.xlu0 %v57
    %v59 = vpop.xlane.xlu0 %58
    %v60 = vsel %vm25, %v50, 0.0
    %61 = vadd.xlane.f32.xlu0 %v60
    %v62 = vpop.xlane.xlu0 %61
    %v63 = vmul.f32 %v53, %v38
    %v64 = vmul.f32 %v56, %v38
    %v65 = vmul.f32 %v59, %v38
    %v66 = vmul.f32 %v62, %v38
    %v67 = vadd.f32 %v63, 1e-05
    %v68 = vadd.f32 %v64, 1e-05
    %v69 = vadd.f32 %v65, 1e-05
    %v70 = vadd.f32 %v66, 1e-05
    %v71 = vrsqrt.pop %v67
    %v72 = vrsqrt.pop %v68
    %v73 = vrsqrt.pop %v69
    %v74 = vrsqrt.pop %v70
    %v75 = vmul.f32 %v43, %v71
    %v76 = vmul.f32 %v44, %v72
    %v77 = vmul.f32 %v45, %v73
    %v78 = vmul.f32 %v46, %v74
    %v79 = vld [vmem:[%s1] sm:$0x1]
    %v81 = vlaneseq
    %v82 = vshrl.u32 %v81, 7
    %v83 = vsub.s32 0, %v82
    %v84 = vrot.slane %v79, %v83
    %v86 = vmul.f32 %v75, %v84
    %v87 = vmul.f32 %v76, %v84
    %v88 = vmul.f32 %v77, %v84
    %v89 = vmul.f32 %v78, %v84
    %v90 = vld [vmem:[%s2] sm:$0x1]
    %v92 = vlaneseq
    %v93 = vshrl.u32 %v92, 7
    %v94 = vsub.s32 0, %v93
    %v95 = vrot.slane %v90, %v94
    %v97 = vadd.f32 %v86, %v95
    %v98 = vadd.f32 %v87, %v95
    %v99 = vadd.f32 %v88, %v95
    %v100 = vadd.f32 %v89, %v95
    %v101 = vld [vmem:[%s3] sm:$0xff]
    %v102 = vld [vmem:[%s3 + $0x8] sm:$0xff]
    %v103 = vld [vmem:[%s3 + $0x10] sm:$0xff]
    %v104 = vld [vmem:[%s3 + $0x18] sm:$0xff]
    %v105 = vld [vmem:[%s4] sm:$0x1]
    %v107 = vlaneseq
    %v108 = vshrl.u32 %v107, 7
    %v109 = vsub.s32 0, %v108
    %v110 = vrot.slane %v105, %v109
    %v113 = vsel %vm25, %v97, 0
    %v116 = vsel %vm25, %v98, 0
    %v119 = vsel %vm25, %v99, 0
    %v122 = vsel %vm25, %v100, 0
    %124 = vmatprep.subr.mxu0 0.0
    %125 = vmatpush1.msra.mxu0 %v101
    %126 = vmatprep.subr.mxu0 0.0
    %127 = vmatpush1.msra.mxu0 %v102
    %128 = vmatprep.subr.mxu0 0.0
    %129 = vmatpush1.msra.mxu0 %v103
    %130 = vmatprep.subr.mxu0 0.0
    %131 = vmatpush1.msra.mxu0 %v104
    %132 = vmatprep.subr.mxu0 0.0
    %133 = vmatpush1.msra.mxu0 0.0
    %134 = vmatprep.subr.mxu0 0.0
    %135 = vmatpush1.msra.mxu0 0.0
    %136 = vmatprep.subr.mxu0 0.0
    %137 = vmatpush1.msra.mxu0 0.0
    %138 = vmatprep.subr.mxu0 0.0
    %139 = vmatpush1.msra.mxu0 0.0
    %140 = vmatprep.subr.mxu0 0.0
    %141 = vmatpush1.msra.mxu0 0.0
    %142 = vmatprep.subr.mxu0 0.0
    %143 = vmatpush1.msra.mxu0 0.0
    %144 = vmatprep.subr.mxu0 0.0
    %145 = vmatpush1.msra.mxu0 0.0
    %146 = vmatprep.subr.mxu0 0.0
    %147 = vmatpush1.msra.mxu0 0.0
    %148 = vmatprep.subr.mxu0 0.0
    %149 = vmatpush1.msra.mxu0 0.0
    %150 = vmatprep.subr.mxu0 0.0
    %151 = vmatpush1.msra.mxu0 0.0
    %152 = vmatprep.subr.mxu0 0.0
    %153 = vmatpush1.msra.mxu0 0.0
    %154 = vmatprep.subr.mxu0 0.0
    %155 = vmatpush1.msra.mxu0 0.0
    %156 = vmatprep.subr.mxu0 0.0
    %157 = vmatpush1.msra.mxu0 0.0
    %158 = vmatprep.subr.mxu0 0.0
    %159 = vmatpush1.msra.mxu0 0.0
    %160 = vmatprep.subr.mxu0 0.0
    %161 = vmatpush1.msra.mxu0 0.0
    %162 = vmatprep.subr.mxu0 0.0
    %163 = vmatpush1.msra.mxu0 0.0
    %164 = vmatprep.subr.mxu0 0.0
    %165 = vmatpush1.msra.mxu0 0.0
    %166 = vmatprep.subr.mxu0 0.0
    %167 = vmatpush1.msra.mxu0 0.0
    %168 = vmatprep.subr.mxu0 0.0
    %169 = vmatpush1.msra.mxu0 0.0
    %170 = vmatprep.subr.mxu0 0.0
    %171 = vmatpush1.msra.mxu0 0.0
    %172 = vmatprep.subr.mxu0 0.0
    %173 = vmatpush1.msra.mxu0 0.0
    %174 = vmatprep.subr.mxu0 0.0
    %175 = vmatpush1.msra.mxu0 0.0
    %176 = vmatprep.subr.mxu0 0.0
    %177 = vmatpush1.msra.mxu0 0.0
    %178 = vmatprep.subr.mxu0 0.0
    %179 = vmatpush1.msra.mxu0 0.0
    %180 = vmatprep.subr.mxu0 0.0
    %181 = vmatpush1.msra.mxu0 0.0
    %182 = vmatprep.subr.mxu0 0.0
    %183 = vmatpush1.msra.mxu0 0.0
    %184 = vmatprep.subr.mxu0 0.0
    %185 = vmatpush1.msra.mxu0 0.0
    %186 = vmatprep.subr.mxu0 0.0
    %187 = vmatpush1.msra.mxu0 0.0
    %188 = vmatprep.mubr.f32.mxu0 0.0
    %189 = vmatmul.mubr.f32.gmra.mrb[0].mxu0 %v113
    %v190 = vpop.f32.mrb[0].mxu0
    %v191 = vadd.f32 %v110, %v190
    %v192 = vpop.f32.mrb[0].mxu0
    %193 = vmatprep.mubr.f32.mxu0 0.0
    %194 = vmatmul.mubr.f32.gmra.mrb[0].mxu0 %v116
    %v195 = vpop.f32.mrb[0].mxu0
    %v196 = vadd.f32 %v110, %v195
    %v197 = vpop.f32.mrb[0].mxu0
    %198 = vmatprep.mubr.f32.mxu0 0.0
    %199 = vmatmul.mubr.f32.gmra.mrb[0].mxu0 %v119
    %v200 = vpop.f32.mrb[0].mxu0
    %v201 = vadd.f32 %v110, %v200
    %v202 = vpop.f32.mrb[0].mxu0
    %203 = vmatprep.mubr.f32.mxu0 0.0
    %204 = vmatmul.mubr.f32.gmra.mrb[0].mxu0 %v122
    %v205 = vpop.f32.mrb[0].mxu0
    %v206 = vadd.f32 %v110, %v205
    %v207 = vpop.f32.mrb[0].mxu0
    %208 = vdwg.mxu0
    %209 = vst [vmem:[#allocation2] sm:$0xff] %v191
    %210 = vst [vmem:[#allocation2 + $0x8] sm:$0xff] %v196
    %211 = vst [vmem:[#allocation2 + $0x10] sm:$0xff] %v201
    %212 = vst [vmem:[#allocation2 + $0x18] sm:$0xff] %v206
    // Predicated region
    $region22: #{combined_forward.17} parent=1 // pred_check
      _
    $region23: #{combined_forward.17} parent=1 // pred_check_branch
      %214 = sbr.rel (0) target = $region25
    $region24: #{combined_forward.17} parent=1 // pred_region
      %s216 = ssub.s32 512, 512
      %217 = vsyncadd [#allocation3], %s216
      %s218 = sshll.u32 [#allocation2], 4
      %s219 = int_to_ptr.vmem [resolvable:$true] %s218
      %224 = dma.vmem_to_hbm [thread:$0]  %s219, 512, %s5, [#allocation3], 128, 128, 8
    $region25: #{combined_forward.17} parent=1 // pred_fallthru
      _
    // Predicated region
    $region26: #{combined_forward.17} parent=1 // pred_check
      _
    $region27: #{combined_forward.17} parent=1 // pred_check_branch
      %226 = sbr.rel (0) target = $region29
    $region28: #{combined_forward.17} parent=1 // pred_region
      %227 = dma.done [#allocation3], 512
    $region29: #{combined_forward.17} parent=1 // pred_fallthru
      _
    %228 = vsyncpa [#allocation3], 1

</llo_original>
